<compile_context>
chip_gen: v7x
topology: tpu7x:2x2x1
jax: 0.10.0
libtpu: 0.0.40
codegen_flags: <defaults>
</compile_context>

<pallas_src>
import math

import jax
import jax.numpy as jnp
from jax import lax
from jax.experimental import pallas as pl
from jax.experimental.pallas import tpu as pltpu


def vae_kernel(x_ref, eps_ref,
               we1_ref, be1_ref, wml_ref, bml_ref,
               wd1_ref, bd1_ref, wd2_ref, bd2_ref,
               out_ref, part_ref):
    """One batch tile of the fused VAE forward.

    Matmuls: bf16 operands, f32 MXU accumulation.  Bias / ReLU / exp / KL /
    sigmoid / reductions all stay in f32 (v5e VPU/EUP have no bf16 support).
    """
    z_dim = eps_ref.shape[1]

    x_bf = x_ref[...]                                # (TB, D) bf16 MXU operand
    x = x_bf.astype(jnp.float32)                     # f32 copy for the loss math

    # ---- encoder: Linear -> ReLU -> fused {mu | logvar} head (one 2Z-wide matmul) ----
    h = jnp.dot(x_bf, we1_ref[...], preferred_element_type=jnp.float32) + be1_ref[...]
    h = jnp.maximum(h, 0.0)
    hb = h.astype(jnp.bfloat16)
    ml = jnp.dot(hb, wml_ref[...], preferred_element_type=jnp.float32) + bml_ref[...]
    mu = ml[:, :z_dim]                               # static lane slices
    logvar = ml[:, z_dim:]

    # ---- reparameterization: z = mu + exp(0.5*logvar) * eps --------------------------
    sigma = jnp.exp(0.5 * logvar)                    # EUP
    z = mu + sigma * eps_ref[...]

    # ---- decoder: Linear -> ReLU -> Linear --------------------------------------------
    zb = z.astype(jnp.bfloat16)
    hd = jnp.dot(zb, wd1_ref[...], preferred_element_type=jnp.float32) + bd1_ref[...]
    hd = jnp.maximum(hd, 0.0)
    y = jnp.dot(hd.astype(jnp.bfloat16), wd2_ref[...],
                preferred_element_type=jnp.float32) + bd2_ref[...]

    # ---- losses (per-tile partial sums), same ordering as the PyTorch forward --------
    # energy = SSE on the raw decoder output (before out_activation)
    diff_raw = y - x
    sse_raw = jnp.sum(diff_raw * diff_raw)

    # KL( N(mu, sigma) || N(0, 1) ).sum(); sigma^2 reuses the already-computed sigma
    kl = 0.5 * jnp.sum(sigma * sigma + mu * mu - 1.0 - logvar)

    # out_activation = sigmoid.  Exact divide (not approx reciprocal) for the stored
    # output so downstream consumers see a true sigmoid.
    out = 1.0 / (1.0 + jnp.exp(-y))
    out_ref[...] = out.astype(out_ref.dtype)

    diff_act = out - x
    sse_act = jnp.sum(diff_act * diff_act)

    # Pack the three per-tile scalars into a lane-dense (8, 128) block:
    # row 0 -> energy partial, row 1 -> KL partial, row 2 -> recon-SSE partial.
    row = lax.broadcasted_iota(jnp.int32, (8, 128), 0)
    part_ref[...] = jnp.where(row == 0, sse_raw,
                    jnp.where(row == 1, kl,
                    jnp.where(row == 2, sse_act, 0.0)))


def prepare_params(params):
    """One-time prep: fuse the mu|logvar heads and cast weights to bf16 (biases f32)."""
    wb = lambda w: w.astype(jnp.bfloat16)
    f32 = lambda b: b.astype(jnp.float32)
    return {
        "we1": wb(params["we1"]), "be1": f32(params["be1"]),
        "wml": wb(jnp.concatenate([params["wmu"], params["wlv"]], axis=1)),
        "bml": f32(jnp.concatenate([params["bmu"], params["blv"]], axis=1)),
        "wd1": wb(params["wd1"]), "bd1": f32(params["bd1"]),
        "wd2": wb(params["wd2"]), "bd2": f32(params["bd2"]),
    }


def vae_forward(x, eps, fp, *, tile_b=512):
    """Fused Pallas VAE forward; returns the same dict as VAE.forward.

    `fp` must come from prepare_params() (bf16 weights, fused mu|logvar head).
    """
    batch, d = x.shape
    z_dim = eps.shape[1]
    h_dim = fp["we1"].shape[1]
    assert fp["wml"].shape == (h_dim, 2 * z_dim)

    x = x.astype(jnp.bfloat16)        # bf16 I/O (no-op when the caller passes bf16)
    eps = eps.astype(jnp.float32)

    # Big tiles (HBM-bound) but keep >= 2 grid steps so v7x's second TensorCore
    # gets a share of the batch under dimension_semantics=("parallel",).
    tile_b = min(tile_b, batch)
    if batch // tile_b < 2 and batch % 2 == 0 and (batch // 2) % 8 == 0:
        tile_b = batch // 2
    assert batch % tile_b == 0, "batch must be divisible by the batch tile"
    num_tiles = batch // tile_b

    args = (x, eps,
            fp["we1"], fp["be1"], fp["wml"], fp["bml"],
            fp["wd1"], fp["bd1"], fp["wd2"], fp["bd2"])

    def tiled(feat):          # batch-tiled, auto double-buffered
        return pl.BlockSpec((tile_b, feat), lambda i: (i, 0))

    def resident(shape):      # VMEM-resident across all grid iterations
        return pl.BlockSpec(shape, lambda i: (0, 0))

    in_specs = [
        tiled(d),                          # x (bf16)
        tiled(z_dim),                      # eps (f32)
        resident((d, h_dim)),              # we1
        resident((1, h_dim)),              # be1
        resident((h_dim, 2 * z_dim)),      # wml (fused mu|logvar weight)
        resident((1, 2 * z_dim)),          # bml
        resident((z_dim, h_dim)),          # wd1
        resident((1, h_dim)),              # bd1
        resident((h_dim, d)),              # wd2
        resident((1, d)),                  # bd2
    ]
    out_specs = (
        tiled(d),                                   # sigmoid(decoder(z)) (bf16)
        pl.BlockSpec((8, 128), lambda i: (i, 0)),   # per-tile loss partials
    )
    out_shape = (
        jax.ShapeDtypeStruct((batch, d), jnp.bfloat16),
        jax.ShapeDtypeStruct((num_tiles * 8, 128), jnp.float32),
    )

    flops = 2 * batch * (d * h_dim + h_dim * 2 * z_dim + z_dim * h_dim + h_dim * d)
    transcendentals = batch * (z_dim + 2 * d)   # exp(0.5*lv), exp(-y), sigmoid divide
    bytes_accessed = sum(a.size * a.dtype.itemsize for a in args)
    bytes_accessed += sum(math.prod(s.shape) * jnp.dtype(s.dtype).itemsize
                          for s in out_shape)

    out, partials = pl.pallas_call(
        vae_kernel,
        grid=(num_tiles,),
        in_specs=in_specs,
        out_specs=out_specs,
        out_shape=out_shape,
        compiler_params=pltpu.CompilerParams(
            dimension_semantics=("parallel",),       # megacore-shard the batch (v7x)
            vmem_limit_bytes=32 * 1024 * 1024,       # ample headroom on v7x's 64 MiB
        ),
        cost_estimate=pl.CostEstimate(
            flops=flops,
            transcendentals=transcendentals,
            bytes_accessed=bytes_accessed,
        ),
    )(*args)

    p = partials.reshape(num_tiles, 8, 128)
    energy = jnp.sum(p[:, 0, 0])
    kl = jnp.sum(p[:, 1, 0])
    sse_act = jnp.sum(p[:, 2, 0])
    return {
        "output": out,
        "loss": energy + kl,
        "reconstruction_loss": sse_act / (batch * d),
    }


def vae_ref(x, eps, p):
    """Pure-JAX f32 reference matching the PyTorch VAE.forward semantics."""
    h = jnp.maximum(x @ p["we1"] + p["be1"], 0.0)
    mu = h @ p["wmu"] + p["bmu"]
    logvar = h @ p["wlv"] + p["blv"]
    sigma = jnp.exp(0.5 * logvar)
    z = mu + sigma * eps
    hd = jnp.maximum(z @ p["wd1"] + p["bd1"], 0.0)
    y = hd @ p["wd2"] + p["bd2"]
    energy = jnp.sum((y - x) ** 2)
    kl = 0.5 * jnp.sum(jnp.exp(logvar) + mu * mu - 1.0 - logvar)
    out = jax.nn.sigmoid(y)
    recon = jnp.mean((out - x) ** 2)
    return {"output": out, "loss": energy + kl, "reconstruction_loss": recon}


if __name__ == "__main__":
    # Lane-dense shapes consistent with a VAE MLP (feature dims multiples of 128);
    # batch = 1024 -> two 512-row tiles so the grid/pipelining + megacore path runs.
    batch, d_in, hidden, latent = 1024, 256, 256, 128

    key = jax.random.PRNGKey(0)
    keys = jax.random.split(key, 12)
    x_f32 = jax.random.uniform(keys[0], (batch, d_in), dtype=jnp.float32)     # [0,1)
    x_bf = x_f32.astype(jnp.bfloat16)        # kernel I/O is bf16; round once so the
    x_ref_in = x_bf.astype(jnp.float32)      # f32 reference sees identical input data
    eps = jax.random.normal(keys[1], (batch, latent), dtype=jnp.float32)      # rsample noise

    s = 0.05
    params = {
        "we1": jax.random.normal(keys[2], (d_in, hidden), jnp.float32) * s,
        "be1": jax.random.normal(keys[3], (1, hidden), jnp.float32) * 0.01,
        "wmu": jax.random.normal(keys[4], (hidden, latent), jnp.float32) * s,
        "bmu": jax.random.normal(keys[5], (1, latent), jnp.float32) * 0.01,
        "wlv": jax.random.normal(keys[6], (hidden, latent), jnp.float32) * s,
        "blv": jax.random.normal(keys[7], (1, latent), jnp.float32) * 0.01,
        "wd1": jax.random.normal(keys[8], (latent, hidden), jnp.float32) * s,
        "bd1": jax.random.normal(keys[9], (1, hidden), jnp.float32) * 0.01,
        "wd2": jax.random.normal(keys[10], (hidden, d_in), jnp.float32) * s,
        "bd2": jax.random.normal(keys[11], (1, d_in), jnp.float32) * 0.01,
    }

    fused = prepare_params(params)                       # one-time bf16 cast + head fuse
    fwd = jax.jit(vae_forward, static_argnames=("tile_b",))

    res = fwd(x_bf, eps, fused, tile_b=512)
    jax.block_until_ready(res["output"])

    ref = vae_ref(x_ref_in, eps, params)
    assert res["output"].shape == (batch, d_in)
    # Tolerances account for bf16 MXU operands and bf16 output storage.
    assert jnp.allclose(res["output"].astype(jnp.float32), ref["output"], atol=2e-2)
    assert jnp.allclose(res["loss"], ref["loss"], rtol=5e-2)
    assert jnp.allclose(res["reconstruction_loss"], ref["reconstruction_loss"], rtol=5e-2)

    print("KERNEL_OK")
</pallas_src>

<mosaic_0001>
module attributes {stable_mosaic.version = 11 : i64} {
  func.func @vae_kernel(%arg0: i32, %arg1: memref<512x256xbf16, #tpu.memory_space<vmem>>, %arg2: memref<512x128xf32, #tpu.memory_space<vmem>>, %arg3: memref<256x256xbf16, #tpu.memory_space<vmem>>, %arg4: memref<1x256xf32, #tpu.memory_space<vmem>>, %arg5: memref<256x256xbf16, #tpu.memory_space<vmem>>, %arg6: memref<1x256xf32, #tpu.memory_space<vmem>>, %arg7: memref<128x256xbf16, #tpu.memory_space<vmem>>, %arg8: memref<1x256xf32, #tpu.memory_space<vmem>>, %arg9: memref<256x256xbf16, #tpu.memory_space<vmem>>, %arg10: memref<1x256xf32, #tpu.memory_space<vmem>>, %arg11: memref<512x256xbf16, #tpu.memory_space<vmem>>, %arg12: memref<8x128xf32, #tpu.memory_space<vmem>>) attributes {dimension_semantics = [#tpu.dimension_semantics<parallel>], iteration_bounds = array<i64: 2>, scalar_prefetch = 0 : i64, scratch_operands = 0 : i64, tpu.core_type = #tpu.core_type<tc>, window_params = [{transform_indices = @transform_0, window_bounds = array<i64: 512, 256>}, {transform_indices = @transform_1, window_bounds = array<i64: 512, 128>}, {pipeline_mode = #tpu.pipeline_mode<synchronous>, transform_indices = @transform_2, window_bounds = array<i64: 256, 256>}, {pipeline_mode = #tpu.pipeline_mode<synchronous>, transform_indices = @transform_3, window_bounds = array<i64: 1, 256>}, {pipeline_mode = #tpu.pipeline_mode<synchronous>, transform_indices = @transform_4, window_bounds = array<i64: 256, 256>}, {pipeline_mode = #tpu.pipeline_mode<synchronous>, transform_indices = @transform_5, window_bounds = array<i64: 1, 256>}, {pipeline_mode = #tpu.pipeline_mode<synchronous>, transform_indices = @transform_6, window_bounds = array<i64: 128, 256>}, {pipeline_mode = #tpu.pipeline_mode<synchronous>, transform_indices = @transform_7, window_bounds = array<i64: 1, 256>}, {pipeline_mode = #tpu.pipeline_mode<synchronous>, transform_indices = @transform_8, window_bounds = array<i64: 256, 256>}, {pipeline_mode = #tpu.pipeline_mode<synchronous>, transform_indices = @transform_9, window_bounds = array<i64: 1, 256>}, {transform_indices = @transform_10, window_bounds = array<i64: 512, 256>}, {transform_indices = @transform_11, window_bounds = array<i64: 8, 128>}]} {
    %c0 = arith.constant 0 : index
    %c0_0 = arith.constant 0 : index
    %0 = vector.load %arg1[%c0, %c0_0] : memref<512x256xbf16, #tpu.memory_space<vmem>>, vector<512x256xbf16>
    %1 = arith.extf %0 : vector<512x256xbf16> to vector<512x256xf32>
    %c0_1 = arith.constant 0 : index
    %c0_2 = arith.constant 0 : index
    %2 = vector.load %arg3[%c0_1, %c0_2] : memref<256x256xbf16, #tpu.memory_space<vmem>>, vector<256x256xbf16>
    %cst = arith.constant dense<0.000000e+00> : vector<512x256xf32>
    %3 = tpu.matmul %0, %2, %cst {dimension_numbers = #tpu.dot_dimension_numbers<[1], [0], [0], [1], [0, 0, 1, 1], [], []>} : vector<512x256xbf16>, vector<256x256xbf16>, vector<512x256xf32> -> vector<512x256xf32>
    %c0_3 = arith.constant 0 : index
    %c0_4 = arith.constant 0 : index
    %4 = vector.load %arg4[%c0_3, %c0_4] : memref<1x256xf32, #tpu.memory_space<vmem>>, vector<1x256xf32>
    %5 = vector.broadcast %4 : vector<1x256xf32> to vector<512x256xf32>
    %6 = arith.addf %3, %5 : vector<512x256xf32>
    %cst_5 = arith.constant 0.000000e+00 : f32
    %7 = vector.broadcast %cst_5 : f32 to vector<512x256xf32>
    %8 = arith.maximumf %6, %7 : vector<512x256xf32>
    %9 = arith.truncf %8 : vector<512x256xf32> to vector<512x256xbf16>
    %c0_6 = arith.constant 0 : index
    %c0_7 = arith.constant 0 : index
    %10 = vector.load %arg5[%c0_6, %c0_7] : memref<256x256xbf16, #tpu.memory_space<vmem>>, vector<256x256xbf16>
    %cst_8 = arith.constant dense<0.000000e+00> : vector<512x256xf32>
    %11 = tpu.matmul %9, %10, %cst_8 {dimension_numbers = #tpu.dot_dimension_numbers<[1], [0], [0], [1], [0, 0, 1, 1], [], []>} : vector<512x256xbf16>, vector<256x256xbf16>, vector<512x256xf32> -> vector<512x256xf32>
    %c0_9 = arith.constant 0 : index
    %c0_10 = arith.constant 0 : index
    %12 = vector.load %arg6[%c0_9, %c0_10] : memref<1x256xf32, #tpu.memory_space<vmem>>, vector<1x256xf32>
    %13 = vector.broadcast %12 : vector<1x256xf32> to vector<512x256xf32>
    %14 = arith.addf %11, %13 : vector<512x256xf32>
    %15 = vector.extract_strided_slice %14 {offsets = [0, 0], sizes = [512, 128], strides = [1, 1]} : vector<512x256xf32> to vector<512x128xf32>
    %16 = vector.extract_strided_slice %14 {offsets = [0, 128], sizes = [512, 128], strides = [1, 1]} : vector<512x256xf32> to vector<512x128xf32>
    %cst_11 = arith.constant 5.000000e-01 : f32
    %17 = vector.broadcast %cst_11 : f32 to vector<512x128xf32>
    %18 = arith.mulf %17, %16 : vector<512x128xf32>
    %19 = math.exp %18 : vector<512x128xf32>
    %c0_12 = arith.constant 0 : index
    %c0_13 = arith.constant 0 : index
    %20 = vector.load %arg2[%c0_12, %c0_13] : memref<512x128xf32, #tpu.memory_space<vmem>>, vector<512x128xf32>
    %21 = arith.mulf %19, %20 : vector<512x128xf32>
    %22 = arith.addf %15, %21 : vector<512x128xf32>
    %23 = arith.truncf %22 : vector<512x128xf32> to vector<512x128xbf16>
    %c0_14 = arith.constant 0 : index
    %c0_15 = arith.constant 0 : index
    %24 = vector.load %arg7[%c0_14, %c0_15] : memref<128x256xbf16, #tpu.memory_space<vmem>>, vector<128x256xbf16>
    %cst_16 = arith.constant dense<0.000000e+00> : vector<512x256xf32>
    %25 = tpu.matmul %23, %24, %cst_16 {dimension_numbers = #tpu.dot_dimension_numbers<[1], [0], [0], [1], [0, 0, 1, 1], [], []>} : vector<512x128xbf16>, vector<128x256xbf16>, vector<512x256xf32> -> vector<512x256xf32>
    %c0_17 = arith.constant 0 : index
    %c0_18 = arith.constant 0 : index
    %26 = vector.load %arg8[%c0_17, %c0_18] : memref<1x256xf32, #tpu.memory_space<vmem>>, vector<1x256xf32>
    %27 = vector.broadcast %26 : vector<1x256xf32> to vector<512x256xf32>
    %28 = arith.addf %25, %27 : vector<512x256xf32>
    %cst_19 = arith.constant 0.000000e+00 : f32
    %29 = vector.broadcast %cst_19 : f32 to vector<512x256xf32>
    %30 = arith.maximumf %28, %29 : vector<512x256xf32>
    %31 = arith.truncf %30 : vector<512x256xf32> to vector<512x256xbf16>
    %c0_20 = arith.constant 0 : index
    %c0_21 = arith.constant 0 : index
    %32 = vector.load %arg9[%c0_20, %c0_21] : memref<256x256xbf16, #tpu.memory_space<vmem>>, vector<256x256xbf16>
    %cst_22 = arith.constant dense<0.000000e+00> : vector<512x256xf32>
    %33 = tpu.matmul %31, %32, %cst_22 {dimension_numbers = #tpu.dot_dimension_numbers<[1], [0], [0], [1], [0, 0, 1, 1], [], []>} : vector<512x256xbf16>, vector<256x256xbf16>, vector<512x256xf32> -> vector<512x256xf32>
    %c0_23 = arith.constant 0 : index
    %c0_24 = arith.constant 0 : index
    %34 = vector.load %arg10[%c0_23, %c0_24] : memref<1x256xf32, #tpu.memory_space<vmem>>, vector<1x256xf32>
    %35 = vector.broadcast %34 : vector<1x256xf32> to vector<512x256xf32>
    %36 = arith.addf %33, %35 : vector<512x256xf32>
    %37 = arith.subf %36, %1 : vector<512x256xf32>
    %38 = arith.mulf %37, %37 : vector<512x256xf32>
    %39 = vector.shape_cast %38 : vector<512x256xf32> to vector<1x512x256xf32>
    %cst_25 = arith.constant dense<0.000000e+00> : vector<1xf32>
    %40 = vector.multi_reduction <add>, %39, %cst_25 [1, 2] : vector<1x512x256xf32> to vector<1xf32>
    %41 = vector.shape_cast %40 : vector<1xf32> to vector<1x1x1xf32>
    %42 = vector.extract %41[0, 0, 0] : f32 from vector<1x1x1xf32>
    %43 = arith.mulf %19, %19 : vector<512x128xf32>
    %44 = arith.mulf %15, %15 : vector<512x128xf32>
    %45 = arith.addf %43, %44 : vector<512x128xf32>
    %cst_26 = arith.constant 1.000000e+00 : f32
    %46 = vector.broadcast %cst_26 : f32 to vector<512x128xf32>
    %47 = arith.subf %45, %46 : vector<512x128xf32>
    %48 = arith.subf %47, %16 : vector<512x128xf32>
    %49 = vector.shape_cast %48 : vector<512x128xf32> to vector<1x512x128xf32>
    %cst_27 = arith.constant dense<0.000000e+00> : vector<1xf32>
    %50 = vector.multi_reduction <add>, %49, %cst_27 [1, 2] : vector<1x512x128xf32> to vector<1xf32>
    %51 = vector.shape_cast %50 : vector<1xf32> to vector<1x1x1xf32>
    %52 = vector.extract %51[0, 0, 0] : f32 from vector<1x1x1xf32>
    %cst_28 = arith.constant 5.000000e-01 : f32
    %53 = arith.mulf %cst_28, %52 : f32
    %cst_29 = arith.constant 0.000000e+00 : f32
    %54 = vector.broadcast %cst_29 : f32 to vector<512x256xf32>
    %55 = arith.subf %54, %36 : vector<512x256xf32>
    %56 = math.exp %55 : vector<512x256xf32>
    %cst_30 = arith.constant 1.000000e+00 : f32
    %57 = vector.broadcast %cst_30 : f32 to vector<512x256xf32>
    %58 = arith.addf %57, %56 : vector<512x256xf32>
    %cst_31 = arith.constant 1.000000e+00 : f32
    %59 = vector.broadcast %cst_31 : f32 to vector<512x256xf32>
    %60 = arith.divf %59, %58 : vector<512x256xf32>
    %61 = arith.truncf %60 : vector<512x256xf32> to vector<512x256xbf16>
    %c0_32 = arith.constant 0 : index
    %c0_33 = arith.constant 0 : index
    %62 = vector.load %arg11[%c0_32, %c0_33] : memref<512x256xbf16, #tpu.memory_space<vmem>>, vector<512x256xbf16>
    tpu.vector_store %arg11[%c0_32, %c0_33], %61 {strides = array<i32>} : memref<512x256xbf16, #tpu.memory_space<vmem>>, vector<512x256xbf16>,
    %63 = arith.subf %60, %1 : vector<512x256xf32>
    %64 = arith.mulf %63, %63 : vector<512x256xf32>
    %65 = vector.shape_cast %64 : vector<512x256xf32> to vector<1x512x256xf32>
    %cst_34 = arith.constant dense<0.000000e+00> : vector<1xf32>
    %66 = vector.multi_reduction <add>, %65, %cst_34 [1, 2] : vector<1x512x256xf32> to vector<1xf32>
    %67 = vector.shape_cast %66 : vector<1xf32> to vector<1x1x1xf32>
    %68 = vector.extract %67[0, 0, 0] : f32 from vector<1x1x1xf32>
    %69 = tpu.iota {dimensions = array<i32: 0>} : vector<8x128xi32>
    %c0_i32 = arith.constant 0 : i32
    %70 = vector.broadcast %c0_i32 : i32 to vector<8x128xi32>
    %71 = arith.cmpi eq, %69, %70 : vector<8x128xi32>
    %c1_i32 = arith.constant 1 : i32
    %72 = vector.broadcast %c1_i32 : i32 to vector<8x128xi32>
    %73 = arith.cmpi eq, %69, %72 : vector<8x128xi32>
    %c2_i32 = arith.constant 2 : i32
    %74 = vector.broadcast %c2_i32 : i32 to vector<8x128xi32>
    %75 = arith.cmpi eq, %69, %74 : vector<8x128xi32>
    %cst_35 = arith.constant 0.000000e+00 : f32
    %76 = vector.broadcast %68 : f32 to vector<8x128xf32>
    %77 = vector.broadcast %cst_35 : f32 to vector<8x128xf32>
    %78 = arith.select %75, %76, %77 : vector<8x128xi1>, vector<8x128xf32>
    %79 = vector.broadcast %53 : f32 to vector<8x128xf32>
    %80 = arith.select %73, %79, %78 : vector<8x128xi1>, vector<8x128xf32>
    %81 = vector.broadcast %42 : f32 to vector<8x128xf32>
    %82 = arith.select %71, %81, %80 : vector<8x128xi1>, vector<8x128xf32>
    %c0_36 = arith.constant 0 : index
    %c0_37 = arith.constant 0 : index
    %83 = vector.load %arg12[%c0_36, %c0_37] : memref<8x128xf32, #tpu.memory_space<vmem>>, vector<8x128xf32>
    tpu.vector_store %arg12[%c0_36, %c0_37], %82 {strides = array<i32>} : memref<8x128xf32, #tpu.memory_space<vmem>>, vector<8x128xf32>,
    return
  }
  func.func @transform_0(%arg0: i32) -> (i32, i32) {
    %c0_i32 = arith.constant 0 : i32
    %c0_i32_0 = arith.constant 0 : i32
    return %arg0, %c0_i32 : i32, i32
  }
  func.func @transform_1(%arg0: i32) -> (i32, i32) {
    %c0_i32 = arith.constant 0 : i32
    %c0_i32_0 = arith.constant 0 : i32
    return %arg0, %c0_i32 : i32, i32
  }
  func.func @transform_2(%arg0: i32) -> (i32, i32) {
    %c0_i32 = arith.constant 0 : i32
    %c0_i32_0 = arith.constant 0 : i32
    %c0_i32_1 = arith.constant 0 : i32
    return %c0_i32, %c0_i32_0 : i32, i32
  }
  func.func @transform_3(%arg0: i32) -> (i32, i32) {
    %c0_i32 = arith.constant 0 : i32
    %c0_i32_0 = arith.constant 0 : i32
    %c0_i32_1 = arith.constant 0 : i32
    return %c0_i32, %c0_i32_0 : i32, i32
  }
  func.func @transform_4(%arg0: i32) -> (i32, i32) {
    %c0_i32 = arith.constant 0 : i32
    %c0_i32_0 = arith.constant 0 : i32
    %c0_i32_1 = arith.constant 0 : i32
    return %c0_i32, %c0_i32_0 : i32, i32
  }
  func.func @transform_5(%arg0: i32) -> (i32, i32) {
    %c0_i32 = arith.constant 0 : i32
    %c0_i32_0 = arith.constant 0 : i32
    %c0_i32_1 = arith.constant 0 : i32
    return %c0_i32, %c0_i32_0 : i32, i32
  }
  func.func @transform_6(%arg0: i32) -> (i32, i32) {
    %c0_i32 = arith.constant 0 : i32
    %c0_i32_0 = arith.constant 0 : i32
    %c0_i32_1 = arith.constant 0 : i32
    return %c0_i32, %c0_i32_0 : i32, i32
  }
  func.func @transform_7(%arg0: i32) -> (i32, i32) {
    %c0_i32 = arith.constant 0 : i32
    %c0_i32_0 = arith.constant 0 : i32
    %c0_i32_1 = arith.constant 0 : i32
    return %c0_i32, %c0_i32_0 : i32, i32
  }
  func.func @transform_8(%arg0: i32) -> (i32, i32) {
    %c0_i32 = arith.constant 0 : i32
    %c0_i32_0 = arith.constant 0 : i32
    %c0_i32_1 = arith.constant 0 : i32
    return %c0_i32, %c0_i32_0 : i32, i32
  }
  func.func @transform_9(%arg0: i32) -> (i32, i32) {
    %c0_i32 = arith.constant 0 : i32
    %c0_i32_0 = arith.constant 0 : i32
    %c0_i32_1 = arith.constant 0 : i32
    return %c0_i32, %c0_i32_0 : i32, i32
  }
  func.func @transform_10(%arg0: i32) -> (i32, i32) {
    %c0_i32 = arith.constant 0 : i32
    %c0_i32_0 = arith.constant 0 : i32
    return %arg0, %c0_i32 : i32, i32
  }
  func.func @transform_11(%arg0: i32) -> (i32, i32) {
    %c0_i32 = arith.constant 0 : i32
    %c0_i32_0 = arith.constant 0 : i32
    return %arg0, %c0_i32 : i32, i32
  }
}

</mosaic_0001>

<llo_original>
// kernel: vae_forward.1
$region0: #{vae_forward.1}
  #allocation0 [shape = 'u32[]', space=smem, size = 0x4, offset = 0x4, fixed_abs, tag = 'smem constant byte address 0x4 - core index']
  #allocation1 [shape = 'u32[144,128]{1,0:T(1,128)}', space=vmem, size = 0x12000, scoped, tag = 'internal scratch']
  %s0 = inlined_call_operand.hbm [shape: bf16[1024,256], index: 0, kind: input, shape index: {}]
  %s1 = inlined_call_operand.hbm [shape: f32[1024,128], index: 1, kind: input, shape index: {}]
  %s2 = inlined_call_operand.hbm [shape: bf16[256,256], index: 2, kind: input, shape index: {}]
  %s3 = inlined_call_operand.vmem [shape: f32[1,256], index: 3, kind: input, shape index: {}]
  %s4 = inlined_call_operand.hbm [shape: bf16[256,256], index: 4, kind: input, shape index: {}]
  %s5 = inlined_call_operand.vmem [shape: f32[1,256], index: 5, kind: input, shape index: {}]
  %s6 = inlined_call_operand.hbm [shape: bf16[128,256], index: 6, kind: input, shape index: {}]
  %s7 = inlined_call_operand.vmem [shape: f32[1,256], index: 7, kind: input, shape index: {}]
  %s8 = inlined_call_operand.hbm [shape: bf16[256,256], index: 8, kind: input, shape index: {}]
  %s9 = inlined_call_operand.vmem [shape: f32[1,256], index: 9, kind: input, shape index: {}]
  %s10 = inlined_call_operand.hbm [shape: bf16[1024,256], index: 10, kind: output, shape index: {0}]
  %s11 = inlined_call_operand.vmem [shape: f32[16,128], index: 11, kind: output, shape index: {1}]
  %12 = xla_tuple %s10, %s11
  %s13 = sld [smem:[#allocation0]]
  $region105: #{vae_forward.1} parent=0
    _
  %s15 = ssub.s32 1, %s13
  %s16 = scalar_select 0, %s15, %s13
  $region1: #{vae_forward.1} parent=0
    #allocation2 [shape = 'u8[524288]{0}', space=vmem, size = 0x80000, scoped, tag = 'input window, operand 0']
    #allocation3 [shape = 's32[2]{0}', space=sflag, size = 0x8, scoped, tag = 'scoped memory for vae_forward.1']
    #allocation4 [shape = 's32[2]{0}', space=sflag, size = 0x8, scoped, tag = 'scoped memory for vae_forward.1']
    #allocation5 [shape = 'u8[524288]{0}', space=vmem, size = 0x80000, scoped, tag = 'input window, operand 1']
    #allocation6 [shape = 's32[2]{0}', space=sflag, size = 0x8, scoped, tag = 'scoped memory for vae_forward.1']
    #allocation7 [shape = 'u8[131072]{0}', space=vmem, size = 0x20000, scoped, tag = 'input window, operand 2, single buffered']
    #allocation8 [shape = 'u8[131072]{0}', space=vmem, size = 0x20000, scoped, tag = 'input window, operand 4, single buffered']
    #allocation9 [shape = 's32[1]{0}', space=sflag, size = 0x4, scoped, tag = 'scoped memory for vae_forward.1']
    #allocation10 [shape = 'u8[65536]{0}', space=vmem, size = 0x10000, scoped, tag = 'input window, operand 6, single buffered']
    #allocation11 [shape = 'u8[131072]{0}', space=vmem, size = 0x20000, scoped, tag = 'input window, operand 8, single buffered']
    #allocation12 [shape = 's32[1]{0}', space=sflag, size = 0x4, scoped, tag = 'scoped memory for vae_forward.1']
    #allocation13 [shape = 'u8[524288]{0}', space=vmem, size = 0x80000, scoped, tag = 'output window, operand 0']
    %17 = vsyncpa [#allocation3], 0
    %s18 = scalar_lea.sflag [#allocation3], 1
    %19 = vsyncpa %s18, 0
    %20 = vsyncpa [#allocation6], 0
    %s21 = scalar_lea.sflag [#allocation6], 1
    %22 = vsyncpa %s21, 0
    %23 = vsyncpa [#allocation9], 0
    %24 = vsyncpa [#allocation12], 0
    %25 = vsyncpa [#allocation4], 0
    %s26 = scalar_lea.sflag [#allocation4], 1
    %27 = vsyncpa %s26, 0
    loop: start=0, step=1, limit=4
    $region2: #{vae_forward.1} parent=1 // loop_pre_header
      _
    $region3: #{vae_forward.1} parent=1 // loop_header
      %s29 = sphi 0, %s33
      %p30 = scmp.ge.s32.totalorder %s29, 4
      %s39 = sphi 0, %s41
      %s42 = sphi 0, %s39
      %s43 = sphi 0, %s42
      %s59 = sphi 0, %s43
      %s65 = sphi 0, %s67
      %s68 = sphi 0, %s65
      %s69 = sphi 0, %s68
      %s85 = sphi 0, %s69
      %s89 = sphi 0, %s89
      %s91 = sphi 0, %s89
      %s92 = sphi 0, %s91
      %s106 = sphi 0, %s92
      %s110 = sphi 0, %s110
      %s112 = sphi 0, %s110
      %s113 = sphi 0, %s112
      %s127 = sphi 0, %s113
      %s131 = sphi 0, %s131
      %s133 = sphi 0, %s131
      %s134 = sphi 0, %s133
      %s148 = sphi 0, %s134
      %s152 = sphi 0, %s152
      %s154 = sphi 0, %s152
      %s155 = sphi 0, %s154
      %s169 = sphi 0, %s155
      %s173 = sphi 0, %s173
      %s175 = sphi 0, %s173
      %s176 = sphi 0, %s175
      %s190 = sphi 0, %s176
      %s194 = sphi 0, %s194
      %s196 = sphi 0, %s194
      %s197 = sphi 0, %s196
      %s211 = sphi 0, %s197
      %s215 = sphi 0, %s215
      %s217 = sphi 0, %s215
      %s218 = sphi 0, %s217
      %s232 = sphi 0, %s218
      %s236 = sphi 0, %s236
      %s238 = sphi 0, %s236
      %s239 = sphi 0, %s238
      %s253 = sphi 0, %s239
      %s259 = sphi 0, %s261
      %s262 = sphi 0, %s259
      %s263 = sphi 0, %s262
      %s279 = sphi 0, %s263
      %s285 = sphi 0, %s287
      %s288 = sphi 0, %s285
      %s289 = sphi 0, %s288
      %s305 = sphi 0, %s289
    $region4: #{vae_forward.1} parent=1 // loop_header_branch
      %32 = sbr.rel (%p30) target = $region8
    $region5: #{vae_forward.1} parent=1 // loop_body
      %s34 = ssub.s32 %s29, 1
      %s35 = ssub.s32 %s29, 2
      %s36 = sadd.s32 %s29, 1
      %s37 = ssub.s32 %s29, %s36
      %p38 = scmp.eq.s32.totalorder %s37, 0
      %s40 = sadd.s32 %s39, 1
      %s41 = scalar_select %p38, %s39, %s40
      %p44 = pneg %p38
      %p45 = scmp.eq.s32.totalorder %s29, 1
      %p46 = por %p44, %p45
      %p47 = scmp.ne.s32.totalorder %s39, %s42
      %p48 = scmp.eq.s32.totalorder %s29, 0
      %p49 = por %p47, %p48
      %p50 = scmp.ne.s32.totalorder %s39, %s42
      %p51 = scmp.eq.s32.totalorder %s34, 1
      %p52 = por %p50, %p51
      %p53 = scmp.ne.s32.totalorder %s42, %s43
      %p54 = scmp.eq.s32.totalorder %s34, 0
      %p55 = por %p53, %p54
      %p56 = scmp.ne.s32.totalorder %s42, %s43
      %p57 = scmp.eq.s32.totalorder %s35, 1
      %p58 = por %p56, %p57
      %p60 = scmp.ne.s32.totalorder %s43, %s59
      %p61 = scmp.eq.s32.totalorder %s35, 0
      %p62 = por %p60, %p61
      %s63 = ssub.s32 %s29, %s36
      %p64 = scmp.eq.s32.totalorder %s63, 0
      %s66 = sadd.s32 %s65, 1
      %s67 = scalar_select %p64, %s65, %s66
      %p70 = pneg %p64
      %p71 = scmp.eq.s32.totalorder %s29, 1
      %p72 = por %p70, %p71
      %p73 = scmp.ne.s32.totalorder %s65, %s68
      %p74 = scmp.eq.s32.totalorder %s29, 0
      %p75 = por %p73, %p74
      %p76 = scmp.ne.s32.totalorder %s65, %s68
      %p77 = scmp.eq.s32.totalorder %s34, 1
      %p78 = por %p76, %p77
      %p79 = scmp.ne.s32.totalorder %s68, %s69
      %p80 = scmp.eq.s32.totalorder %s34, 0
      %p81 = por %p79, %p80
      %p82 = scmp.ne.s32.totalorder %s68, %s69
      %p83 = scmp.eq.s32.totalorder %s35, 1
      %p84 = por %p82, %p83
      %p86 = scmp.ne.s32.totalorder %s69, %s85
      %p87 = scmp.eq.s32.totalorder %s35, 0
      %p88 = por %p86, %p87
      %s90 = sadd.s32 %s89, 1
      %p93 = scmp.eq.s32.totalorder %s29, 1
      %p94 = scmp.ne.s32.totalorder %s89, %s91
      %p95 = scmp.eq.s32.totalorder %s29, 0
      %p96 = por %p94, %p95
      %p97 = scmp.ne.s32.totalorder %s89, %s91
      %p98 = scmp.eq.s32.totalorder %s34, 1
      %p99 = por %p97, %p98
      %p100 = scmp.ne.s32.totalorder %s91, %s92
      %p101 = scmp.eq.s32.totalorder %s34, 0
      %p102 = por %p100, %p101
      %p103 = scmp.ne.s32.totalorder %s91, %s92
      %p104 = scmp.eq.s32.totalorder %s35, 1
      %p105 = por %p103, %p104
      %p107 = scmp.ne.s32.totalorder %s92, %s106
      %p108 = scmp.eq.s32.totalorder %s35, 0
      %p109 = por %p107, %p108
      %s111 = sadd.s32 %s110, 1
      %p114 = scmp.eq.s32.totalorder %s29, 1
      %p115 = scmp.ne.s32.totalorder %s110, %s112
      %p116 = scmp.eq.s32.totalorder %s29, 0
      %p117 = por %p115, %p116
      %p118 = scmp.ne.s32.totalorder %s110, %s112
      %p119 = scmp.eq.s32.totalorder %s34, 1
      %p120 = por %p118, %p119
      %p121 = scmp.ne.s32.totalorder %s112, %s113
      %p122 = scmp.eq.s32.totalorder %s34, 0
      %p123 = por %p121, %p122
      %p124 = scmp.ne.s32.totalorder %s112, %s113
      %p125 = scmp.eq.s32.totalorder %s35, 1
      %p126 = por %p124, %p125
      %p128 = scmp.ne.s32.totalorder %s113, %s127
      %p129 = scmp.eq.s32.totalorder %s35, 0
      %p130 = por %p128, %p129
      %s132 = sadd.s32 %s131, 1
      %p135 = scmp.eq.s32.totalorder %s29, 1
      %p136 = scmp.ne.s32.totalorder %s131, %s133
      %p137 = scmp.eq.s32.totalorder %s29, 0
      %p138 = por %p136, %p137
      %p139 = scmp.ne.s32.totalorder %s131, %s133
      %p140 = scmp.eq.s32.totalorder %s34, 1
      %p141 = por %p139, %p140
      %p142 = scmp.ne.s32.totalorder %s133, %s134
      %p143 = scmp.eq.s32.totalorder %s34, 0
      %p144 = por %p142, %p143
      %p145 = scmp.ne.s32.totalorder %s133, %s134
      %p146 = scmp.eq.s32.totalorder %s35, 1
      %p147 = por %p145, %p146
      %p149 = scmp.ne.s32.totalorder %s134, %s148
      %p150 = scmp.eq.s32.totalorder %s35, 0
      %p151 = por %p149, %p150
      %s153 = sadd.s32 %s152, 1
      %p156 = scmp.eq.s32.totalorder %s29, 1
      %p157 = scmp.ne.s32.totalorder %s152, %s154
      %p158 = scmp.eq.s32.totalorder %s29, 0
      %p159 = por %p157, %p158
      %p160 = scmp.ne.s32.totalorder %s152, %s154
      %p161 = scmp.eq.s32.totalorder %s34, 1
      %p162 = por %p160, %p161
      %p163 = scmp.ne.s32.totalorder %s154, %s155
      %p164 = scmp.eq.s32.totalorder %s34, 0
      %p165 = por %p163, %p164
      %p166 = scmp.ne.s32.totalorder %s154, %s155
      %p167 = scmp.eq.s32.totalorder %s35, 1
      %p168 = por %p166, %p167
      %p170 = scmp.ne.s32.totalorder %s155, %s169
      %p171 = scmp.eq.s32.totalorder %s35, 0
      %p172 = por %p170, %p171
      %s174 = sadd.s32 %s173, 1
      %p177 = scmp.eq.s32.totalorder %s29, 1
      %p178 = scmp.ne.s32.totalorder %s173, %s175
      %p179 = scmp.eq.s32.totalorder %s29, 0
      %p180 = por %p178, %p179
      %p181 = scmp.ne.s32.totalorder %s173, %s175
      %p182 = scmp.eq.s32.totalorder %s34, 1
      %p183 = por %p181, %p182
      %p184 = scmp.ne.s32.totalorder %s175, %s176
      %p185 = scmp.eq.s32.totalorder %s34, 0
      %p186 = por %p184, %p185
      %p187 = scmp.ne.s32.totalorder %s175, %s176
      %p188 = scmp.eq.s32.totalorder %s35, 1
      %p189 = por %p187, %p188
      %p191 = scmp.ne.s32.totalorder %s176, %s190
      %p192 = scmp.eq.s32.totalorder %s35, 0
      %p193 = por %p191, %p192
      %s195 = sadd.s32 %s194, 1
      %p198 = scmp.eq.s32.totalorder %s29, 1
      %p199 = scmp.ne.s32.totalorder %s194, %s196
      %p200 = scmp.eq.s32.totalorder %s29, 0
      %p201 = por %p199, %p200
      %p202 = scmp.ne.s32.totalorder %s194, %s196
      %p203 = scmp.eq.s32.totalorder %s34, 1
      %p204 = por %p202, %p203
      %p205 = scmp.ne.s32.totalorder %s196, %s197
      %p206 = scmp.eq.s32.totalorder %s34, 0
      %p207 = por %p205, %p206
      %p208 = scmp.ne.s32.totalorder %s196, %s197
      %p209 = scmp.eq.s32.totalorder %s35, 1
      %p210 = por %p208, %p209
      %p212 = scmp.ne.s32.totalorder %s197, %s211
      %p213 = scmp.eq.s32.totalorder %s35, 0
      %p214 = por %p212, %p213
      %s216 = sadd.s32 %s215, 1
      %p219 = scmp.eq.s32.totalorder %s29, 1
      %p220 = scmp.ne.s32.totalorder %s215, %s217
      %p221 = scmp.eq.s32.totalorder %s29, 0
      %p222 = por %p220, %p221
      %p223 = scmp.ne.s32.totalorder %s215, %s217
      %p224 = scmp.eq.s32.totalorder %s34, 1
      %p225 = por %p223, %p224
      %p226 = scmp.ne.s32.totalorder %s217, %s218
      %p227 = scmp.eq.s32.totalorder %s34, 0
      %p228 = por %p226, %p227
      %p229 = scmp.ne.s32.totalorder %s217, %s218
      %p230 = scmp.eq.s32.totalorder %s35, 1
      %p231 = por %p229, %p230
      %p233 = scmp.ne.s32.totalorder %s218, %s232
      %p234 = scmp.eq.s32.totalorder %s35, 0
      %p235 = por %p233, %p234
      %s237 = sadd.s32 %s236, 1
      %p240 = scmp.eq.s32.totalorder %s29, 1
      %p241 = scmp.ne.s32.totalorder %s236, %s238
      %p242 = scmp.eq.s32.totalorder %s29, 0
      %p243 = por %p241, %p242
      %p244 = scmp.ne.s32.totalorder %s236, %s238
      %p245 = scmp.eq.s32.totalorder %s34, 1
      %p246 = por %p244, %p245
      %p247 = scmp.ne.s32.totalorder %s238, %s239
      %p248 = scmp.eq.s32.totalorder %s34, 0
      %p249 = por %p247, %p248
      %p250 = scmp.ne.s32.totalorder %s238, %s239
      %p251 = scmp.eq.s32.totalorder %s35, 1
      %p252 = por %p250, %p251
      %p254 = scmp.ne.s32.totalorder %s239, %s253
      %p255 = scmp.eq.s32.totalorder %s35, 0
      %p256 = por %p254, %p255
      %s257 = ssub.s32 %s29, %s36
      %p258 = scmp.eq.s32.totalorder %s257, 0
      %s260 = sadd.s32 %s259, 1
      %s261 = scalar_select %p258, %s259, %s260
      %p264 = pneg %p258
      %p265 = scmp.eq.s32.totalorder %s29, 1
      %p266 = por %p264, %p265
      %p267 = scmp.ne.s32.totalorder %s259, %s262
      %p268 = scmp.eq.s32.totalorder %s29, 0
      %p269 = por %p267, %p268
      %p270 = scmp.ne.s32.totalorder %s259, %s262
      %p271 = scmp.eq.s32.totalorder %s34, 1
      %p272 = por %p270, %p271
      %p273 = scmp.ne.s32.totalorder %s262, %s263
      %p274 = scmp.eq.s32.totalorder %s34, 0
      %p275 = por %p273, %p274
      %p276 = scmp.ne.s32.totalorder %s262, %s263
      %p277 = scmp.eq.s32.totalorder %s35, 1
      %p278 = por %p276, %p277
      %p280 = scmp.ne.s32.totalorder %s263, %s279
      %p281 = scmp.eq.s32.totalorder %s35, 0
      %p282 = por %p280, %p281
      %s283 = ssub.s32 %s29, %s36
      %p284 = scmp.eq.s32.totalorder %s283, 0
      %s286 = sadd.s32 %s285, 1
      %s287 = scalar_select %p284, %s285, %s286
      %p290 = pneg %p284
      %p291 = scmp.eq.s32.totalorder %s29, 1
      %p292 = por %p290, %p291
      %p293 = scmp.ne.s32.totalorder %s285, %s288
      %p294 = scmp.eq.s32.totalorder %s29, 0
      %p295 = por %p293, %p294
      %p296 = scmp.ne.s32.totalorder %s285, %s288
      %p297 = scmp.eq.s32.totalorder %s34, 1
      %p298 = por %p296, %p297
      %p299 = scmp.ne.s32.totalorder %s288, %s289
      %p300 = scmp.eq.s32.totalorder %s34, 0
      %p301 = por %p299, %p300
      %p302 = scmp.ne.s32.totalorder %s288, %s289
      %p303 = scmp.eq.s32.totalorder %s35, 1
      %p304 = por %p302, %p303
      %p306 = scmp.ne.s32.totalorder %s289, %s305
      %p307 = scmp.eq.s32.totalorder %s35, 0
      %p308 = por %p306, %p307
      %p309 = scmp.le.s32.totalorder 1, %s29
      %p310 = scmp.lt.s32.totalorder %s29, 3
      %p311 = pnand %p309, %p310
      %p312 = pneg %p311
      // Predicated region
      $region9: #{vae_forward.1} parent=5 // pred_check
        _
      $region10: #{vae_forward.1} parent=5 // pred_check_branch
        %314 = sbr.rel (%p311) target = $region12
      $region11: #{vae_forward.1} parent=5 // pred_region
        %s315 = ssub.s32 %s29, 1
        // Predicated region
        $region13: #{vae_forward.1} parent=11 // pred_check
          %p316 = pneg %p102
        $region14: #{vae_forward.1} parent=11 // pred_check_branch
          %318 = sbr.rel (%p316) target = $region16
        $region15: #{vae_forward.1} parent=11 // pred_region
          %s320 = ssub.s32 4096, 4096
          %321 = vsyncadd [#allocation6], %s320
          %s322 = sshll.u32 [#allocation7], 4
          %s323 = int_to_ptr.vmem [resolvable:$true] %s322
          %328 = dma.hbm_to_vmem [thread:$0]  %s2, 4096, %s323, [#allocation6], 128, 128, 8
        $region16: #{vae_forward.1} parent=11 // pred_fallthru
          _
        // Predicated region
        $region17: #{vae_forward.1} parent=11 // pred_check
          %p329 = pneg %p123
        $region18: #{vae_forward.1} parent=11 // pred_check_branch
          %331 = sbr.rel (%p329) target = $region20
        $region19: #{vae_forward.1} parent=11 // pred_region
          _
        $region20: #{vae_forward.1} parent=11 // pred_fallthru
          _
        // Predicated region
        $region21: #{vae_forward.1} parent=11 // pred_check
          %p332 = pneg %p144
        $region22: #{vae_forward.1} parent=11 // pred_check_branch
          %334 = sbr.rel (%p332) target = $region24
        $region23: #{vae_forward.1} parent=11 // pred_region
          %s336 = ssub.s32 4096, 4096
          %337 = vsyncadd [#allocation9], %s336
          %s338 = sshll.u32 [#allocation8], 4
          %s339 = int_to_ptr.vmem [resolvable:$true] %s338
          %344 = dma.hbm_to_vmem [thread:$0]  %s4, 4096, %s339, [#allocation9], 128, 128, 8
        $region24: #{vae_forward.1} parent=11 // pred_fallthru
          _
        // Predicated region
        $region25: #{vae_forward.1} parent=11 // pred_check
          %p345 = pneg %p165
        $region26: #{vae_forward.1} parent=11 // pred_check_branch
          %347 = sbr.rel (%p345) target = $region28
        $region27: #{vae_forward.1} parent=11 // pred_region
          _
        $region28: #{vae_forward.1} parent=11 // pred_fallthru
          _
        // Predicated region
        $region29: #{vae_forward.1} parent=11 // pred_check
          %p348 = pneg %p186
        $region30: #{vae_forward.1} parent=11 // pred_check_branch
          %350 = sbr.rel (%p348) target = $region32
        $region31: #{vae_forward.1} parent=11 // pred_region
          %s352 = ssub.s32 2048, 2048
          %353 = vsyncadd [#allocation9], %s352
          %s354 = sshll.u32 [#allocation10], 4
          %s355 = int_to_ptr.vmem [resolvable:$true] %s354
          %360 = dma.hbm_to_vmem [thread:$0]  %s6, 2048, %s355, [#allocation9], 128, 128, 8
        $region32: #{vae_forward.1} parent=11 // pred_fallthru
          _
        // Predicated region
        $region33: #{vae_forward.1} parent=11 // pred_check
          %p361 = pneg %p207
        $region34: #{vae_forward.1} parent=11 // pred_check_branch
          %363 = sbr.rel (%p361) target = $region36
        $region35: #{vae_forward.1} parent=11 // pred_region
          _
        $region36: #{vae_forward.1} parent=11 // pred_fallthru
          _
        // Predicated region
        $region37: #{vae_forward.1} parent=11 // pred_check
          %p364 = pneg %p228
        $region38: #{vae_forward.1} parent=11 // pred_check_branch
          %366 = sbr.rel (%p364) target = $region40
        $region39: #{vae_forward.1} parent=11 // pred_region
          %s368 = ssub.s32 4096, 4096
          %369 = vsyncadd [#allocation12], %s368
          %s370 = sshll.u32 [#allocation11], 4
          %s371 = int_to_ptr.vmem [resolvable:$true] %s370
          %376 = dma.hbm_to_vmem [thread:$0]  %s8, 4096, %s371, [#allocation12], 128, 128, 8
        $region40: #{vae_forward.1} parent=11 // pred_fallthru
          _
        // Predicated region
        $region41: #{vae_forward.1} parent=11 // pred_check
          %p377 = pneg %p249
        $region42: #{vae_forward.1} parent=11 // pred_check_branch
          %379 = sbr.rel (%p377) target = $region44
        $region43: #{vae_forward.1} parent=11 // pred_region
          _
        $region44: #{vae_forward.1} parent=11 // pred_fallthru
          _
      $region12: #{vae_forward.1} parent=5 // pred_fallthru
        _
      %p380 = scmp.lt.s32.totalorder %s29, 2
      // Predicated region
      $region45: #{vae_forward.1} parent=5 // pred_check
        %p381 = pneg %p380
      $region46: #{vae_forward.1} parent=5 // pred_check_branch
        %383 = sbr.rel (%p381) target = $region48
      $region47: #{vae_forward.1} parent=5 // pred_region
        // Predicated region
        $region49: #{vae_forward.1} parent=47 // pred_check
          %p384 = pneg %p49
        $region50: #{vae_forward.1} parent=47 // pred_check_branch
          %386 = sbr.rel (%p384) target = $region52
        $region51: #{vae_forward.1} parent=47 // pred_region
          %s387 = sand.u32 %s39, 1
          %s388 = scalar_lea.sflag [#allocation3], %s387
          %s389 = sand.u32 %s39, 1
          %s390 = smul.addr %s389, 512
          %s391 = scalar_lea.vmem [#allocation2], %s390
          %s392 = smul.u32 64, %s29
          %s394 = ssub.s32 8192, 8192
          %395 = vsyncadd %s388, %s394
          %s396 = smul.addr %s392, 2
          %s397 = smul.addr %s396, 64
          %s398 = scalar_lea.hbm %s0, %s397
          %s399 = sshll.u32 %s391, 4
          %s400 = int_to_ptr.vmem [resolvable:$true] %s399
          %405 = dma.hbm_to_vmem [thread:$0]  %s398, 8192, %s400, %s388, 128, 128, 8
        $region52: #{vae_forward.1} parent=47 // pred_fallthru
          _
        // Predicated region
        $region53: #{vae_forward.1} parent=47 // pred_check
          %p406 = pneg %p75
        $region54: #{vae_forward.1} parent=47 // pred_check_branch
          %408 = sbr.rel (%p406) target = $region56
        $region55: #{vae_forward.1} parent=47 // pred_region
          %s409 = sand.u32 %s29, 1
          %s410 = scalar_lea.sflag [#allocation6], %s409
          %s411 = sand.u32 %s65, 1
          %s412 = smul.addr %s411, 512
          %s413 = scalar_lea.vmem [#allocation5], %s412
          %s414 = smul.u32 64, %s29
          %s416 = ssub.s32 8192, 8192
          %417 = vsyncadd %s410, %s416
          %s418 = smul.addr %s414, 128
          %s419 = scalar_lea.hbm %s1, %s418
          %s420 = sshll.u32 %s413, 4
          %s421 = int_to_ptr.vmem [resolvable:$true] %s420
          %426 = dma.hbm_to_vmem [thread:$0]  %s419, 8192, %s421, %s410, 128, 128, 8
        $region56: #{vae_forward.1} parent=47 // pred_fallthru
          _
      $region48: #{vae_forward.1} parent=5 // pred_fallthru
        _
      %p427 = scmp.le.s32.totalorder 1, %s29
      %p428 = scmp.lt.s32.totalorder %s29, 3
      %p429 = pnand %p427, %p428
      %p430 = pneg %p429
      // Predicated region
      $region57: #{vae_forward.1} parent=5 // pred_check
        _
      $region58: #{vae_forward.1} parent=5 // pred_check_branch
        %432 = sbr.rel (%p429) target = $region60
      $region59: #{vae_forward.1} parent=5 // pred_region
        %s433 = ssub.s32 %s29, 1
        %s434 = sand.u32 %s42, 1
        %s435 = scalar_lea.sflag [#allocation3], %s434
        %s436 = sand.u32 %s42, 1
        %s437 = smul.addr %s436, 512
        %s438 = scalar_lea.vmem [#allocation2], %s437
        // Predicated region
        $region61: #{vae_forward.1} parent=59 // pred_check
          %p439 = pneg %p55
        $region62: #{vae_forward.1} parent=59 // pred_check_branch
          %441 = sbr.rel (%p439) target = $region64
        $region63: #{vae_forward.1} parent=59 // pred_region
          %442 = dma.done %s435, 8192
        $region64: #{vae_forward.1} parent=59 // pred_fallthru
          _
        %s443 = sand.u32 %s34, 1
        %s444 = scalar_lea.sflag [#allocation6], %s443
        %s445 = sand.u32 %s68, 1
        %s446 = smul.addr %s445, 512
        %s447 = scalar_lea.vmem [#allocation5], %s446
        // Predicated region
        $region65: #{vae_forward.1} parent=59 // pred_check
          %p448 = pneg %p81
        $region66: #{vae_forward.1} parent=59 // pred_check_branch
          %450 = sbr.rel (%p448) target = $region68
        $region67: #{vae_forward.1} parent=59 // pred_region
          %451 = dma.done %s444, 8192
        $region68: #{vae_forward.1} parent=59 // pred_fallthru
          _
        // Predicated region
        $region69: #{vae_forward.1} parent=59 // pred_check
          %p452 = pneg %p102
        $region70: #{vae_forward.1} parent=59 // pred_check_branch
          %454 = sbr.rel (%p452) target = $region72
        $region71: #{vae_forward.1} parent=59 // pred_region
          %455 = dma.done [#allocation6], 4096
        $region72: #{vae_forward.1} parent=59 // pred_fallthru
          _
        // Predicated region
        $region73: #{vae_forward.1} parent=59 // pred_check
          %p456 = pneg %p144
        $region74: #{vae_forward.1} parent=59 // pred_check_branch
          %458 = sbr.rel (%p456) target = $region76
        $region75: #{vae_forward.1} parent=59 // pred_region
          %459 = dma.done [#allocation9], 4096
        $region76: #{vae_forward.1} parent=59 // pred_fallthru
          _
        // Predicated region
        $region77: #{vae_forward.1} parent=59 // pred_check
          %p460 = pneg %p186
        $region78: #{vae_forward.1} parent=59 // pred_check_branch
          %462 = sbr.rel (%p460) target = $region80
        $region79: #{vae_forward.1} parent=59 // pred_region
          %463 = dma.done [#allocation9], 2048
        $region80: #{vae_forward.1} parent=59 // pred_fallthru
          _
        // Predicated region
        $region81: #{vae_forward.1} parent=59 // pred_check
          %p464 = pneg %p228
        $region82: #{vae_forward.1} parent=59 // pred_check_branch
          %466 = sbr.rel (%p464) target = $region84
        $region83: #{vae_forward.1} parent=59 // pred_region
          %467 = dma.done [#allocation12], 4096
        $region84: #{vae_forward.1} parent=59 // pred_fallthru
          _
        %s468 = sand.u32 %s42, 1
        %s469 = scalar_lea.sflag [#allocation3], %s468
        %s470 = sand.u32 %s42, 1
        %s471 = smul.addr %s470, 512
        %s472 = scalar_lea.vmem [#allocation2], %s471
        %p473 = pneg %p55
        %p474 = pneg %p52
        %s475 = sand.u32 %s34, 1
        %s476 = scalar_lea.sflag [#allocation6], %s475
        %s477 = sand.u32 %s68, 1
        %s478 = smul.addr %s477, 512
        %s479 = scalar_lea.vmem [#allocation5], %s478
        %p480 = pneg %p81
        %p481 = pneg %p78
        %p482 = pneg %p102
        %p483 = pneg %p99
        %p484 = pneg %p123
        %p485 = pneg %p120
        %p486 = pneg %p144
        %p487 = pneg %p141
        %p488 = pneg %p165
        %p489 = pneg %p162
        %p490 = pneg %p186
        %p491 = pneg %p183
        %p492 = pneg %p207
        %p493 = pneg %p204
        %p494 = pneg %p228
        %p495 = pneg %p225
        %p496 = pneg %p249
        %p497 = pneg %p246
        %p498 = pneg %p275
        %p499 = pneg %p272
        %s500 = sand.u32 %s262, 1
        %s501 = scalar_lea.sflag [#allocation4], %s500
        %s502 = sand.u32 %s262, 1
        %s503 = smul.addr %s502, 512
        %s504 = scalar_lea.vmem [#allocation13], %s503
        %p505 = pneg %p301
        %p506 = pneg %p298
        %p507 = scmp.lt.s32.totalorder %s34, 1
        %s508 = scalar_select %p507, %s34, 1
        %s509 = smul.addr %s508, 8
        %s510 = scalar_lea.vmem %s11, %s509
        %s511 = smul.u32 64, %s34
        %s512 = smul.u32 64, %s34
        %s513 = smul.u32 64, %s34
        %p514 = scmp.lt.s32.totalorder %s34, 1
        %s515 = scalar_select %p514, %s34, 1
        %s516 = smul.addr %s515, 8
        %s517 = scalar_lea.vmem %s11, %s516
        %v519 = vld [vmem:[%s438] sm:$0xff]
        %v520 = vld [vmem:[%s438 + $0x8] sm:$0xff]
        %v521 = vld [vmem:[%s438 + $0x10] sm:$0xff]
        %v522 = vld [vmem:[%s438 + $0x18] sm:$0xff]
        %v523 = vld [vmem:[%s438 + $0x20] sm:$0xff]
        %v524 = vld [vmem:[%s438 + $0x28] sm:$0xff]
        %v525 = vld [vmem:[%s438 + $0x30] sm:$0xff]
        %v526 = vld [vmem:[%s438 + $0x38] sm:$0xff]
        %v527 = vld [vmem:[%s438 + $0x40] sm:$0xff]
        %v528 = vld [vmem:[%s438 + $0x48] sm:$0xff]
        %v529 = vld [vmem:[%s438 + $0x50] sm:$0xff]
        %v530 = vld [vmem:[%s438 + $0x58] sm:$0xff]
        %v531 = vld [vmem:[%s438 + $0x60] sm:$0xff]
        %v532 = vld [vmem:[%s438 + $0x68] sm:$0xff]
        %v533 = vld [vmem:[%s438 + $0x70] sm:$0xff]
        %v534 = vld [vmem:[%s438 + $0x78] sm:$0xff]
        %v535 = vld [vmem:[%s438 + $0x80] sm:$0xff]
        %v536 = vld [vmem:[%s438 + $0x88] sm:$0xff]
        %v537 = vld [vmem:[%s438 + $0x90] sm:$0xff]
        %v538 = vld [vmem:[%s438 + $0x98] sm:$0xff]
        %v539 = vld [vmem:[%s438 + $0xa0] sm:$0xff]
        %v540 = vld [vmem:[%s438 + $0xa8] sm:$0xff]
        %v541 = vld [vmem:[%s438 + $0xb0] sm:$0xff]
        %v542 = vld [vmem:[%s438 + $0xb8] sm:$0xff]
        %v543 = vld [vmem:[%s438 + $0xc0] sm:$0xff]
        %v544 = vld [vmem:[%s438 + $0xc8] sm:$0xff]
        %v545 = vld [vmem:[%s438 + $0xd0] sm:$0xff]
        %v546 = vld [vmem:[%s438 + $0xd8] sm:$0xff]
        %v547 = vld [vmem:[%s438 + $0xe0] sm:$0xff]
        %v548 = vld [vmem:[%s438 + $0xe8] sm:$0xff]
        %v549 = vld [vmem:[%s438 + $0xf0] sm:$0xff]
        %v550 = vld [vmem:[%s438 + $0xf8] sm:$0xff]
        %v551 = vld [vmem:[%s438 + $0x100] sm:$0xff]
        %v552 = vld [vmem:[%s438 + $0x108] sm:$0xff]
        %v553 = vld [vmem:[%s438 + $0x110] sm:$0xff]
        %v554 = vld [vmem:[%s438 + $0x118] sm:$0xff]
        %v555 = vld [vmem:[%s438 + $0x120] sm:$0xff]
        %v556 = vld [vmem:[%s438 + $0x128] sm:$0xff]
        %v557 = vld [vmem:[%s438 + $0x130] sm:$0xff]
        %v558 = vld [vmem:[%s438 + $0x138] sm:$0xff]
        %v559 = vld [vmem:[%s438 + $0x140] sm:$0xff]
        %v560 = vld [vmem:[%s438 + $0x148] sm:$0xff]
        %v561 = vld [vmem:[%s438 + $0x150] sm:$0xff]
        %v562 = vld [vmem:[%s438 + $0x158] sm:$0xff]
        %v563 = vld [vmem:[%s438 + $0x160] sm:$0xff]
        %v564 = vld [vmem:[%s438 + $0x168] sm:$0xff]
        %v565 = vld [vmem:[%s438 + $0x170] sm:$0xff]
        %v566 = vld [vmem:[%s438 + $0x178] sm:$0xff]
        %v567 = vld [vmem:[%s438 + $0x180] sm:$0xff]
        %v568 = vld [vmem:[%s438 + $0x188] sm:$0xff]
        %v569 = vld [vmem:[%s438 + $0x190] sm:$0xff]
        %v570 = vld [vmem:[%s438 + $0x198] sm:$0xff]
        %v571 = vld [vmem:[%s438 + $0x1a0] sm:$0xff]
        %v572 = vld [vmem:[%s438 + $0x1a8] sm:$0xff]
        %v573 = vld [vmem:[%s438 + $0x1b0] sm:$0xff]
        %v574 = vld [vmem:[%s438 + $0x1b8] sm:$0xff]
        %v575 = vld [vmem:[%s438 + $0x1c0] sm:$0xff]
        %v576 = vld [vmem:[%s438 + $0x1c8] sm:$0xff]
        %v577 = vld [vmem:[%s438 + $0x1d0] sm:$0xff]
        %v578 = vld [vmem:[%s438 + $0x1d8] sm:$0xff]
        %v579 = vld [vmem:[%s438 + $0x1e0] sm:$0xff]
        %v580 = vld [vmem:[%s438 + $0x1e8] sm:$0xff]
        %v581 = vld [vmem:[%s438 + $0x1f0] sm:$0xff]
        %v582 = vld [vmem:[%s438 + $0x1f8] sm:$0xff]
        %v583 = vunpack.c.l.bf16 %v519
        %v584 = vunpack.c.h.bf16 %v519
        %v585 = vunpack.c.l.bf16 %v520
        %v586 = vunpack.c.h.bf16 %v520
        %v587 = vunpack.c.l.bf16 %v521
        %v588 = vunpack.c.h.bf16 %v521
        %v589 = vunpack.c.l.bf16 %v522
        %v590 = vunpack.c.h.bf16 %v522
        %v591 = vunpack.c.l.bf16 %v523
        %v592 = vunpack.c.h.bf16 %v523
        %v593 = vunpack.c.l.bf16 %v524
        %v594 = vunpack.c.h.bf16 %v524
        %v595 = vunpack.c.l.bf16 %v525
        %v596 = vunpack.c.h.bf16 %v525
        %v597 = vunpack.c.l.bf16 %v526
        %v598 = vunpack.c.h.bf16 %v526
        %v599 = vunpack.c.l.bf16 %v527
        %v600 = vunpack.c.h.bf16 %v527
        %v601 = vunpack.c.l.bf16 %v528
        %v602 = vunpack.c.h.bf16 %v528
        %v603 = vunpack.c.l.bf16 %v529
        %v604 = vunpack.c.h.bf16 %v529
        %v605 = vunpack.c.l.bf16 %v530
        %v606 = vunpack.c.h.bf16 %v530
        %v607 = vunpack.c.l.bf16 %v531
        %v608 = vunpack.c.h.bf16 %v531
        %v609 = vunpack.c.l.bf16 %v532
        %v610 = vunpack.c.h.bf16 %v532
        %v611 = vunpack.c.l.bf16 %v533
        %v612 = vunpack.c.h.bf16 %v533
        %v613 = vunpack.c.l.bf16 %v534
        %v614 = vunpack.c.h.bf16 %v534
        %v615 = vunpack.c.l.bf16 %v535
        %v616 = vunpack.c.h.bf16 %v535
        %v617 = vunpack.c.l.bf16 %v536
        %v618 = vunpack.c.h.bf16 %v536
        %v619 = vunpack.c.l.bf16 %v537
        %v620 = vunpack.c.h.bf16 %v537
        %v621 = vunpack.c.l.bf16 %v538
        %v622 = vunpack.c.h.bf16 %v538
        %v623 = vunpack.c.l.bf16 %v539
        %v624 = vunpack.c.h.bf16 %v539
        %v625 = vunpack.c.l.bf16 %v540
        %v626 = vunpack.c.h.bf16 %v540
        %v627 = vunpack.c.l.bf16 %v541
        %v628 = vunpack.c.h.bf16 %v541
        %v629 = vunpack.c.l.bf16 %v542
        %v630 = vunpack.c.h.bf16 %v542
        %v631 = vunpack.c.l.bf16 %v543
        %v632 = vunpack.c.h.bf16 %v543
        %v633 = vunpack.c.l.bf16 %v544
        %v634 = vunpack.c.h.bf16 %v544
        %v635 = vunpack.c.l.bf16 %v545
        %v636 = vunpack.c.h.bf16 %v545
        %v637 = vunpack.c.l.bf16 %v546
        %v638 = vunpack.c.h.bf16 %v546
        %v639 = vunpack.c.l.bf16 %v547
        %v640 = vunpack.c.h.bf16 %v547
        %v641 = vunpack.c.l.bf16 %v548
        %v642 = vunpack.c.h.bf16 %v548
        %v643 = vunpack.c.l.bf16 %v549
        %v644 = vunpack.c.h.bf16 %v549
        %v645 = vunpack.c.l.bf16 %v550
        %v646 = vunpack.c.h.bf16 %v550
        %v647 = vunpack.c.l.bf16 %v551
        %v648 = vunpack.c.h.bf16 %v551
        %v649 = vunpack.c.l.bf16 %v552
        %v650 = vunpack.c.h.bf16 %v552
        %v651 = vunpack.c.l.bf16 %v553
        %v652 = vunpack.c.h.bf16 %v553
        %v653 = vunpack.c.l.bf16 %v554
        %v654 = vunpack.c.h.bf16 %v554
        %v655 = vunpack.c.l.bf16 %v555
        %v656 = vunpack.c.h.bf16 %v555
        %v657 = vunpack.c.l.bf16 %v556
        %v658 = vunpack.c.h.bf16 %v556
        %v659 = vunpack.c.l.bf16 %v557
        %v660 = vunpack.c.h.bf16 %v557
        %v661 = vunpack.c.l.bf16 %v558
        %v662 = vunpack.c.h.bf16 %v558
        %v663 = vunpack.c.l.bf16 %v559
        %v664 = vunpack.c.h.bf16 %v559
        %v665 = vunpack.c.l.bf16 %v560
        %v666 = vunpack.c.h.bf16 %v560
        %v667 = vunpack.c.l.bf16 %v561
        %v668 = vunpack.c.h.bf16 %v561
        %v669 = vunpack.c.l.bf16 %v562
        %v670 = vunpack.c.h.bf16 %v562
        %v671 = vunpack.c.l.bf16 %v563
        %v672 = vunpack.c.h.bf16 %v563
        %v673 = vunpack.c.l.bf16 %v564
        %v674 = vunpack.c.h.bf16 %v564
        %v675 = vunpack.c.l.bf16 %v565
        %v676 = vunpack.c.h.bf16 %v565
        %v677 = vunpack.c.l.bf16 %v566
        %v678 = vunpack.c.h.bf16 %v566
        %v679 = vunpack.c.l.bf16 %v567
        %v680 = vunpack.c.h.bf16 %v567
        %v681 = vunpack.c.l.bf16 %v568
        %v682 = vunpack.c.h.bf16 %v568
        %v683 = vunpack.c.l.bf16 %v569
        %v684 = vunpack.c.h.bf16 %v569
        %v685 = vunpack.c.l.bf16 %v570
        %v686 = vunpack.c.h.bf16 %v570
        %v687 = vunpack.c.l.bf16 %v571
        %v688 = vunpack.c.h.bf16 %v571
        %v689 = vunpack.c.l.bf16 %v572
        %v690 = vunpack.c.h.bf16 %v572
        %v691 = vunpack.c.l.bf16 %v573
        %v692 = vunpack.c.h.bf16 %v573
        %v693 = vunpack.c.l.bf16 %v574
        %v694 = vunpack.c.h.bf16 %v574
        %v695 = vunpack.c.l.bf16 %v575
        %v696 = vunpack.c.h.bf16 %v575
        %v697 = vunpack.c.l.bf16 %v576
        %v698 = vunpack.c.h.bf16 %v576
        %v699 = vunpack.c.l.bf16 %v577
        %v700 = vunpack.c.h.bf16 %v577
        %v701 = vunpack.c.l.bf16 %v578
        %v702 = vunpack.c.h.bf16 %v578
        %v703 = vunpack.c.l.bf16 %v579
        %v704 = vunpack.c.h.bf16 %v579
        %v705 = vunpack.c.l.bf16 %v580
        %v706 = vunpack.c.h.bf16 %v580
        %v707 = vunpack.c.l.bf16 %v581
        %v708 = vunpack.c.h.bf16 %v581
        %v709 = vunpack.c.l.bf16 %v582
        %v710 = vunpack.c.h.bf16 %v582
        %v711 = vld [vmem:[#allocation7] sm:$0xff]
        %v712 = vld [vmem:[#allocation7 + $0x8] sm:$0xff]
        %v713 = vld [vmem:[#allocation7 + $0x10] sm:$0xff]
        %v714 = vld [vmem:[#allocation7 + $0x18] sm:$0xff]
        %v715 = vld [vmem:[#allocation7 + $0x20] sm:$0xff]
        %v716 = vld [vmem:[#allocation7 + $0x28] sm:$0xff]
        %v717 = vld [vmem:[#allocation7 + $0x30] sm:$0xff]
        %v718 = vld [vmem:[#allocation7 + $0x38] sm:$0xff]
        %v719 = vld [vmem:[#allocation7 + $0x40] sm:$0xff]
        %v720 = vld [vmem:[#allocation7 + $0x48] sm:$0xff]
        %v721 = vld [vmem:[#allocation7 + $0x50] sm:$0xff]
        %v722 = vld [vmem:[#allocation7 + $0x58] sm:$0xff]
        %v723 = vld [vmem:[#allocation7 + $0x60] sm:$0xff]
        %v724 = vld [vmem:[#allocation7 + $0x68] sm:$0xff]
        %v725 = vld [vmem:[#allocation7 + $0x70] sm:$0xff]
        %v726 = vld [vmem:[#allocation7 + $0x78] sm:$0xff]
        %v727 = vld [vmem:[#allocation7 + $0x80] sm:$0xff]
        %v728 = vld [vmem:[#allocation7 + $0x88] sm:$0xff]
        %v729 = vld [vmem:[#allocation7 + $0x90] sm:$0xff]
        %v730 = vld [vmem:[#allocation7 + $0x98] sm:$0xff]
        %v731 = vld [vmem:[#allocation7 + $0xa0] sm:$0xff]
        %v732 = vld [vmem:[#allocation7 + $0xa8] sm:$0xff]
        %v733 = vld [vmem:[#allocation7 + $0xb0] sm:$0xff]
        %v734 = vld [vmem:[#allocation7 + $0xb8] sm:$0xff]
        %v735 = vld [vmem:[#allocation7 + $0xc0] sm:$0xff]
        %v736 = vld [vmem:[#allocation7 + $0xc8] sm:$0xff]
        %v737 = vld [vmem:[#allocation7 + $0xd0] sm:$0xff]
        %v738 = vld [vmem:[#allocation7 + $0xd8] sm:$0xff]
        %v739 = vld [vmem:[#allocation7 + $0xe0] sm:$0xff]
        %v740 = vld [vmem:[#allocation7 + $0xe8] sm:$0xff]
        %v741 = vld [vmem:[#allocation7 + $0xf0] sm:$0xff]
        %v742 = vld [vmem:[#allocation7 + $0xf8] sm:$0xff]
        %v743 = vld [vmem:[%s3] sm:$0x3]
        %v745 = vlaneseq
        %v746 = vshrl.u32 %v745, 7
        %v747 = vsub.s32 0, %v746
        %v748 = vrot.slane %v743, %v747
        %v749 = vlaneseq
        %v750 = vshrl.u32 %v749, 7
        %v751 = vsub.s32 1, %v750
        %v752 = vrot.slane %v743, %v751
        %v819 = vunpack.c.l.b16 %v519
        %v820 = vunpack.c.h.b16 %v519
        %v821 = vunpack.c.l.b16 %v520
        %v822 = vunpack.c.h.b16 %v520
        %v823 = vunpack.c.l.b16 %v521
        %v824 = vunpack.c.h.b16 %v521
        %v825 = vunpack.c.l.b16 %v522
        %v826 = vunpack.c.h.b16 %v522
        %v827 = vunpack.c.l.b16 %v523
        %v828 = vunpack.c.h.b16 %v523
        %v829 = vunpack.c.l.b16 %v524
        %v830 = vunpack.c.h.b16 %v524
        %v831 = vunpack.c.l.b16 %v525
        %v832 = vunpack.c.h.b16 %v525
        %v833 = vunpack.c.l.b16 %v526
        %v834 = vunpack.c.h.b16 %v526
        %v835 = vunpack.c.l.b16 %v527
        %v836 = vunpack.c.h.b16 %v527
        %v837 = vunpack.c.l.b16 %v528
        %v838 = vunpack.c.h.b16 %v528
        %v839 = vunpack.c.l.b16 %v529
        %v840 = vunpack.c.h.b16 %v529
        %v841 = vunpack.c.l.b16 %v530
        %v842 = vunpack.c.h.b16 %v530
        %v843 = vunpack.c.l.b16 %v531
        %v844 = vunpack.c.h.b16 %v531
        %v845 = vunpack.c.l.b16 %v532
        %v846 = vunpack.c.h.b16 %v532
        %v847 = vunpack.c.l.b16 %v533
        %v848 = vunpack.c.h.b16 %v533
        %v849 = vunpack.c.l.b16 %v534
        %v850 = vunpack.c.h.b16 %v534
        %v851 = vunpack.c.l.b16 %v535
        %v852 = vunpack.c.h.b16 %v535
        %v853 = vunpack.c.l.b16 %v536
        %v854 = vunpack.c.h.b16 %v536
        %v855 = vunpack.c.l.b16 %v537
        %v856 = vunpack.c.h.b16 %v537
        %v857 = vunpack.c.l.b16 %v538
        %v858 = vunpack.c.h.b16 %v538
        %v859 = vunpack.c.l.b16 %v539
        %v860 = vunpack.c.h.b16 %v539
        %v861 = vunpack.c.l.b16 %v540
        %v862 = vunpack.c.h.b16 %v540
        %v863 = vunpack.c.l.b16 %v541
        %v864 = vunpack.c.h.b16 %v541
        %v865 = vunpack.c.l.b16 %v542
        %v866 = vunpack.c.h.b16 %v542
        %v867 = vunpack.c.l.b16 %v543
        %v868 = vunpack.c.h.b16 %v543
        %v869 = vunpack.c.l.b16 %v544
        %v870 = vunpack.c.h.b16 %v544
        %v871 = vunpack.c.l.b16 %v545
        %v872 = vunpack.c.h.b16 %v545
        %v873 = vunpack.c.l.b16 %v546
        %v874 = vunpack.c.h.b16 %v546
        %v875 = vunpack.c.l.b16 %v547
        %v876 = vunpack.c.h.b16 %v547
        %v877 = vunpack.c.l.b16 %v548
        %v878 = vunpack.c.h.b16 %v548
        %v879 = vunpack.c.l.b16 %v549
        %v880 = vunpack.c.h.b16 %v549
        %v881 = vunpack.c.l.b16 %v550
        %v882 = vunpack.c.h.b16 %v550
        %v883 = vunpack.c.l.b16 %v551
        %v884 = vunpack.c.h.b16 %v551
        %v885 = vunpack.c.l.b16 %v552
        %v886 = vunpack.c.h.b16 %v552
        %v887 = vunpack.c.l.b16 %v553
        %v888 = vunpack.c.h.b16 %v553
        %v889 = vunpack.c.l.b16 %v554
        %v890 = vunpack.c.h.b16 %v554
        %v891 = vunpack.c.l.b16 %v555
        %v892 = vunpack.c.h.b16 %v555
        %v893 = vunpack.c.l.b16 %v556
        %v894 = vunpack.c.h.b16 %v556
        %v895 = vunpack.c.l.b16 %v557
        %v896 = vunpack.c.h.b16 %v557
        %v897 = vunpack.c.l.b16 %v558
        %v898 = vunpack.c.h.b16 %v558
        %v899 = vunpack.c.l.b16 %v559
        %v900 = vunpack.c.h.b16 %v559
        %v901 = vunpack.c.l.b16 %v560
        %v902 = vunpack.c.h.b16 %v560
        %v903 = vunpack.c.l.b16 %v561
        %v904 = vunpack.c.h.b16 %v561
        %v905 = vunpack.c.l.b16 %v562
        %v906 = vunpack.c.h.b16 %v562
        %v907 = vunpack.c.l.b16 %v563
        %v908 = vunpack.c.h.b16 %v563
        %v909 = vunpack.c.l.b16 %v564
        %v910 = vunpack.c.h.b16 %v564
        %v911 = vunpack.c.l.b16 %v565
        %v912 = vunpack.c.h.b16 %v565
        %v913 = vunpack.c.l.b16 %v566
        %v914 = vunpack.c.h.b16 %v566
        %v915 = vunpack.c.l.b16 %v567
        %v916 = vunpack.c.h.b16 %v567
        %v917 = vunpack.c.l.b16 %v568
        %v918 = vunpack.c.h.b16 %v568
        %v919 = vunpack.c.l.b16 %v569
        %v920 = vunpack.c.h.b16 %v569
        %v921 = vunpack.c.l.b16 %v570
        %v922 = vunpack.c.h.b16 %v570
        %v923 = vunpack.c.l.b16 %v571
        %v924 = vunpack.c.h.b16 %v571
        %v925 = vunpack.c.l.b16 %v572
        %v926 = vunpack.c.h.b16 %v572
        %v927 = vunpack.c.l.b16 %v573
        %v928 = vunpack.c.h.b16 %v573
        %v929 = vunpack.c.l.b16 %v574
        %v930 = vunpack.c.h.b16 %v574
        %v931 = vunpack.c.l.b16 %v575
        %v932 = vunpack.c.h.b16 %v575
        %v933 = vunpack.c.l.b16 %v576
        %v934 = vunpack.c.h.b16 %v576
        %v935 = vunpack.c.l.b16 %v577
        %v936 = vunpack.c.h.b16 %v577
        %v937 = vunpack.c.l.b16 %v578
        %v938 = vunpack.c.h.b16 %v578
        %v939 = vunpack.c.l.b16 %v579
        %v940 = vunpack.c.h.b16 %v579
        %v941 = vunpack.c.l.b16 %v580
        %v942 = vunpack.c.h.b16 %v580
        %v943 = vunpack.c.l.b16 %v581
        %v944 = vunpack.c.h.b16 %v581
        %v945 = vunpack.c.l.b16 %v582
        %v946 = vunpack.c.h.b16 %v582
        %v947 = vpack.c.b16 %v821, %v819
        %v948 = vpack.c.b16 %v822, %v820
        %v949 = vpack.c.b16 %v825, %v823
        %v950 = vpack.c.b16 %v826, %v824
        %v951 = vpack.c.b16 %v829, %v827
        %v952 = vpack.c.b16 %v830, %v828
        %v953 = vpack.c.b16 %v833, %v831
        %v954 = vpack.c.b16 %v834, %v832
        %v955 = vpack.c.b16 %v837, %v835
        %v956 = vpack.c.b16 %v838, %v836
        %v957 = vpack.c.b16 %v841, %v839
        %v958 = vpack.c.b16 %v842, %v840
        %v959 = vpack.c.b16 %v845, %v843
        %v960 = vpack.c.b16 %v846, %v844
        %v961 = vpack.c.b16 %v849, %v847
        %v962 = vpack.c.b16 %v850, %v848
        %v963 = vpack.c.b16 %v853, %v851
        %v964 = vpack.c.b16 %v854, %v852
        %v965 = vpack.c.b16 %v857, %v855
        %v966 = vpack.c.b16 %v858, %v856
        %v967 = vpack.c.b16 %v861, %v859
        %v968 = vpack.c.b16 %v862, %v860
        %v969 = vpack.c.b16 %v865, %v863
        %v970 = vpack.c.b16 %v866, %v864
        %v971 = vpack.c.b16 %v869, %v867
        %v972 = vpack.c.b16 %v870, %v868
        %v973 = vpack.c.b16 %v873, %v871
        %v974 = vpack.c.b16 %v874, %v872
        %v975 = vpack.c.b16 %v877, %v875
        %v976 = vpack.c.b16 %v878, %v876
        %v977 = vpack.c.b16 %v881, %v879
        %v978 = vpack.c.b16 %v882, %v880
        %v979 = vpack.c.b16 %v885, %v883
        %v980 = vpack.c.b16 %v886, %v884
        %v981 = vpack.c.b16 %v889, %v887
        %v982 = vpack.c.b16 %v890, %v888
        %v983 = vpack.c.b16 %v893, %v891
        %v984 = vpack.c.b16 %v894, %v892
        %v985 = vpack.c.b16 %v897, %v895
        %v986 = vpack.c.b16 %v898, %v896
        %v987 = vpack.c.b16 %v901, %v899
        %v988 = vpack.c.b16 %v902, %v900
        %v989 = vpack.c.b16 %v905, %v903
        %v990 = vpack.c.b16 %v906, %v904
        %v991 = vpack.c.b16 %v909, %v907
        %v992 = vpack.c.b16 %v910, %v908
        %v993 = vpack.c.b16 %v913, %v911
        %v994 = vpack.c.b16 %v914, %v912
        %v995 = vpack.c.b16 %v917, %v915
        %v996 = vpack.c.b16 %v918, %v916
        %v997 = vpack.c.b16 %v921, %v919
        %v998 = vpack.c.b16 %v922, %v920
        %v999 = vpack.c.b16 %v925, %v923
        %v1000 = vpack.c.b16 %v926, %v924
        %v1001 = vpack.c.b16 %v929, %v927
        %v1002 = vpack.c.b16 %v930, %v928
        %v1003 = vpack.c.b16 %v933, %v931
        %v1004 = vpack.c.b16 %v934, %v932
        %v1005 = vpack.c.b16 %v937, %v935
        %v1006 = vpack.c.b16 %v938, %v936
        %v1007 = vpack.c.b16 %v941, %v939
        %v1008 = vpack.c.b16 %v942, %v940
        %v1009 = vpack.c.b16 %v945, %v943
        %v1010 = vpack.c.b16 %v946, %v944
        %v1107 = vunpack.c.l.b16 %v711
        %v1108 = vunpack.c.h.b16 %v711
        %v1109 = vunpack.c.l.b16 %v712
        %v1110 = vunpack.c.h.b16 %v712
        %v1111 = vunpack.c.l.b16 %v713
        %v1112 = vunpack.c.h.b16 %v713
        %v1113 = vunpack.c.l.b16 %v714
        %v1114 = vunpack.c.h.b16 %v714
        %v1115 = vunpack.c.l.b16 %v715
        %v1116 = vunpack.c.h.b16 %v715
        %v1117 = vunpack.c.l.b16 %v716
        %v1118 = vunpack.c.h.b16 %v716
        %v1119 = vunpack.c.l.b16 %v717
        %v1120 = vunpack.c.h.b16 %v717
        %v1121 = vunpack.c.l.b16 %v718
        %v1122 = vunpack.c.h.b16 %v718
        %v1123 = vunpack.c.l.b16 %v719
        %v1124 = vunpack.c.h.b16 %v719
        %v1125 = vunpack.c.l.b16 %v720
        %v1126 = vunpack.c.h.b16 %v720
        %v1127 = vunpack.c.l.b16 %v721
        %v1128 = vunpack.c.h.b16 %v721
        %v1129 = vunpack.c.l.b16 %v722
        %v1130 = vunpack.c.h.b16 %v722
        %v1131 = vunpack.c.l.b16 %v723
        %v1132 = vunpack.c.h.b16 %v723
        %v1133 = vunpack.c.l.b16 %v724
        %v1134 = vunpack.c.h.b16 %v724
        %v1135 = vunpack.c.l.b16 %v725
        %v1136 = vunpack.c.h.b16 %v725
        %v1137 = vunpack.c.l.b16 %v726
        %v1138 = vunpack.c.h.b16 %v726
        %v1139 = vunpack.c.l.b16 %v727
        %v1140 = vunpack.c.h.b16 %v727
        %v1141 = vunpack.c.l.b16 %v728
        %v1142 = vunpack.c.h.b16 %v728
        %v1143 = vunpack.c.l.b16 %v729
        %v1144 = vunpack.c.h.b16 %v729
        %v1145 = vunpack.c.l.b16 %v730
        %v1146 = vunpack.c.h.b16 %v730
        %v1147 = vunpack.c.l.b16 %v731
        %v1148 = vunpack.c.h.b16 %v731
        %v1149 = vunpack.c.l.b16 %v732
        %v1150 = vunpack.c.h.b16 %v732
        %v1151 = vunpack.c.l.b16 %v733
        %v1152 = vunpack.c.h.b16 %v733
        %v1153 = vunpack.c.l.b16 %v734
        %v1154 = vunpack.c.h.b16 %v734
        %v1155 = vunpack.c.l.b16 %v735
        %v1156 = vunpack.c.h.b16 %v735
        %v1157 = vunpack.c.l.b16 %v736
        %v1158 = vunpack.c.h.b16 %v736
        %v1159 = vunpack.c.l.b16 %v737
        %v1160 = vunpack.c.h.b16 %v737
        %v1161 = vunpack.c.l.b16 %v738
        %v1162 = vunpack.c.h.b16 %v738
        %v1163 = vunpack.c.l.b16 %v739
        %v1164 = vunpack.c.h.b16 %v739
        %v1165 = vunpack.c.l.b16 %v740
        %v1166 = vunpack.c.h.b16 %v740
        %v1167 = vunpack.c.l.b16 %v741
        %v1168 = vunpack.c.h.b16 %v741
        %v1169 = vunpack.c.l.b16 %v742
        %v1170 = vunpack.c.h.b16 %v742
        %v1171 = vpack.c.b16 %v1109, %v1107
        %v1172 = vpack.c.b16 %v1110, %v1108
        %v1173 = vpack.c.b16 %v1113, %v1111
        %v1174 = vpack.c.b16 %v1114, %v1112
        %v1175 = vpack.c.b16 %v1117, %v1115
        %v1176 = vpack.c.b16 %v1118, %v1116
        %v1177 = vpack.c.b16 %v1121, %v1119
        %v1178 = vpack.c.b16 %v1122, %v1120
        %v1179 = vpack.c.b16 %v1125, %v1123
        %v1180 = vpack.c.b16 %v1126, %v1124
        %v1181 = vpack.c.b16 %v1129, %v1127
        %v1182 = vpack.c.b16 %v1130, %v1128
        %v1183 = vpack.c.b16 %v1133, %v1131
        %v1184 = vpack.c.b16 %v1134, %v1132
        %v1185 = vpack.c.b16 %v1137, %v1135
        %v1186 = vpack.c.b16 %v1138, %v1136
        %v1187 = vpack.c.b16 %v1141, %v1139
        %v1188 = vpack.c.b16 %v1142, %v1140
        %v1189 = vpack.c.b16 %v1145, %v1143
        %v1190 = vpack.c.b16 %v1146, %v1144
        %v1191 = vpack.c.b16 %v1149, %v1147
        %v1192 = vpack.c.b16 %v1150, %v1148
        %v1193 = vpack.c.b16 %v1153, %v1151
        %v1194 = vpack.c.b16 %v1154, %v1152
        %v1195 = vpack.c.b16 %v1157, %v1155
        %v1196 = vpack.c.b16 %v1158, %v1156
        %v1197 = vpack.c.b16 %v1161, %v1159
        %v1198 = vpack.c.b16 %v1162, %v1160
        %v1199 = vpack.c.b16 %v1165, %v1163
        %v1200 = vpack.c.b16 %v1166, %v1164
        %v1201 = vpack.c.b16 %v1169, %v1167
        %v1202 = vpack.c.b16 %v1170, %v1168
        %1235 = vmatprep.subr.bf16.mxu0 %v1172
        %1236 = vmatpush1.bf16.msra.mxu0 %v1171
        %1237 = vmatprep.subr.bf16.mxu0 %v1174
        %1238 = vmatpush1.bf16.msra.mxu0 %v1173
        %1239 = vmatprep.subr.bf16.mxu0 %v1176
        %1240 = vmatpush1.bf16.msra.mxu0 %v1175
        %1241 = vmatprep.subr.bf16.mxu0 %v1178
        %1242 = vmatpush1.bf16.msra.mxu0 %v1177
        %1243 = vmatprep.subr.bf16.mxu0 %v1180
        %1244 = vmatpush1.bf16.msra.mxu0 %v1179
        %1245 = vmatprep.subr.bf16.mxu0 %v1182
        %1246 = vmatpush1.bf16.msra.mxu0 %v1181
        %1247 = vmatprep.subr.bf16.mxu0 %v1184
        %1248 = vmatpush1.bf16.msra.mxu0 %v1183
        %1249 = vmatprep.subr.bf16.mxu0 %v1186
        %1250 = vmatpush1.bf16.msra.mxu0 %v1185
        %1251 = vmatprep.subr.bf16.mxu0 %v1188
        %1252 = vmatpush1.bf16.msra.mxu0 %v1187
        %1253 = vmatprep.subr.bf16.mxu0 %v1190
        %1254 = vmatpush1.bf16.msra.mxu0 %v1189
        %1255 = vmatprep.subr.bf16.mxu0 %v1192
        %1256 = vmatpush1.bf16.msra.mxu0 %v1191
        %1257 = vmatprep.subr.bf16.mxu0 %v1194
        %1258 = vmatpush1.bf16.msra.mxu0 %v1193
        %1259 = vmatprep.subr.bf16.mxu0 %v1196
        %1260 = vmatpush1.bf16.msra.mxu0 %v1195
        %1261 = vmatprep.subr.bf16.mxu0 %v1198
        %1262 = vmatpush1.bf16.msra.mxu0 %v1197
        %1263 = vmatprep.subr.bf16.mxu0 %v1200
        %1264 = vmatpush1.bf16.msra.mxu0 %v1199
        %1265 = vmatprep.subr.bf16.mxu0 %v1202
        %1266 = vmatpush1.bf16.msra.mxu0 %v1201
        %1267 = vmatprep.mubr.bf16.mxu0 %v948
        %1268 = vmatmul.mubr.bf16.gmra.mrb[0].mxu0 %v947
        %v1269 = vpop.f32.mrb[0].mxu0
        %v1270 = vadd.f32 %v748, %v1269
        %v1271 = vpop.f32.mrb[0].mxu0
        %v1272 = vadd.f32 %v752, %v1271
        %v1273 = vpop.f32.mrb[0].mxu0
        %v1274 = vadd.f32 %v748, %v1273
        %v1275 = vpop.f32.mrb[0].mxu0
        %v1276 = vadd.f32 %v752, %v1275
        %1277 = vmatprep.mubr.bf16.mxu0 %v950
        %1278 = vmatmul.mubr.bf16.gmra.mrb[0].mxu0 %v949
        %v1279 = vpop.f32.mrb[0].mxu0
        %v1280 = vadd.f32 %v748, %v1279
        %v1281 = vpop.f32.mrb[0].mxu0
        %v1282 = vadd.f32 %v752, %v1281
        %v1283 = vpop.f32.mrb[0].mxu0
        %v1284 = vadd.f32 %v748, %v1283
        %v1285 = vpop.f32.mrb[0].mxu0
        %v1286 = vadd.f32 %v752, %v1285
        %1287 = vmatprep.mubr.bf16.mxu0 %v952
        %1288 = vmatmul.mubr.bf16.gmra.mrb[0].mxu0 %v951
        %v1289 = vpop.f32.mrb[0].mxu0
        %v1290 = vadd.f32 %v748, %v1289
        %v1291 = vpop.f32.mrb[0].mxu0
        %v1292 = vadd.f32 %v752, %v1291
        %v1293 = vpop.f32.mrb[0].mxu0
        %v1294 = vadd.f32 %v748, %v1293
        %v1295 = vpop.f32.mrb[0].mxu0
        %v1296 = vadd.f32 %v752, %v1295
        %1297 = vmatprep.mubr.bf16.mxu0 %v954
        %1298 = vmatmul.mubr.bf16.gmra.mrb[0].mxu0 %v953
        %v1299 = vpop.f32.mrb[0].mxu0
        %v1300 = vadd.f32 %v748, %v1299
        %v1301 = vpop.f32.mrb[0].mxu0
        %v1302 = vadd.f32 %v752, %v1301
        %v1303 = vpop.f32.mrb[0].mxu0
        %v1304 = vadd.f32 %v748, %v1303
        %v1305 = vpop.f32.mrb[0].mxu0
        %v1306 = vadd.f32 %v752, %v1305
        %1307 = vmatprep.mubr.bf16.mxu0 %v956
        %1308 = vmatmul.mubr.bf16.gmra.mrb[0].mxu0 %v955
        %v1309 = vpop.f32.mrb[0].mxu0
        %v1310 = vadd.f32 %v748, %v1309
        %v1311 = vpop.f32.mrb[0].mxu0
        %v1312 = vadd.f32 %v752, %v1311
        %v1313 = vpop.f32.mrb[0].mxu0
        %v1314 = vadd.f32 %v748, %v1313
        %v1315 = vpop.f32.mrb[0].mxu0
        %v1316 = vadd.f32 %v752, %v1315
        %1317 = vmatprep.mubr.bf16.mxu0 %v958
        %1318 = vmatmul.mubr.bf16.gmra.mrb[0].mxu0 %v957
        %v1319 = vpop.f32.mrb[0].mxu0
        %v1320 = vadd.f32 %v748, %v1319
        %v1321 = vpop.f32.mrb[0].mxu0
        %v1322 = vadd.f32 %v752, %v1321
        %v1323 = vpop.f32.mrb[0].mxu0
        %v1324 = vadd.f32 %v748, %v1323
        %v1325 = vpop.f32.mrb[0].mxu0
        %v1326 = vadd.f32 %v752, %v1325
        %1327 = vmatprep.mubr.bf16.mxu0 %v960
        %1328 = vmatmul.mubr.bf16.gmra.mrb[0].mxu0 %v959
        %v1329 = vpop.f32.mrb[0].mxu0
        %v1330 = vadd.f32 %v748, %v1329
        %v1331 = vpop.f32.mrb[0].mxu0
        %v1332 = vadd.f32 %v752, %v1331
        %v1333 = vpop.f32.mrb[0].mxu0
        %v1334 = vadd.f32 %v748, %v1333
        %v1335 = vpop.f32.mrb[0].mxu0
        %v1336 = vadd.f32 %v752, %v1335
        %1337 = vmatprep.mubr.bf16.mxu0 %v962
        %1338 = vmatmul.mubr.bf16.gmra.mrb[0].mxu0 %v961
        %v1339 = vpop.f32.mrb[0].mxu0
        %v1340 = vadd.f32 %v748, %v1339
        %v1341 = vpop.f32.mrb[0].mxu0
        %v1342 = vadd.f32 %v752, %v1341
        %v1343 = vpop.f32.mrb[0].mxu0
        %v1344 = vadd.f32 %v748, %v1343
        %v1345 = vpop.f32.mrb[0].mxu0
        %v1346 = vadd.f32 %v752, %v1345
        %1347 = vmatprep.mubr.bf16.mxu0 %v964
        %1348 = vmatmul.mubr.bf16.gmra.mrb[0].mxu0 %v963
        %v1349 = vpop.f32.mrb[0].mxu0
        %v1350 = vadd.f32 %v748, %v1349
        %v1351 = vpop.f32.mrb[0].mxu0
        %v1352 = vadd.f32 %v752, %v1351
        %v1353 = vpop.f32.mrb[0].mxu0
        %v1354 = vadd.f32 %v748, %v1353
        %v1355 = vpop.f32.mrb[0].mxu0
        %v1356 = vadd.f32 %v752, %v1355
        %1357 = vmatprep.mubr.bf16.mxu0 %v966
        %1358 = vmatmul.mubr.bf16.gmra.mrb[0].mxu0 %v965
        %v1359 = vpop.f32.mrb[0].mxu0
        %v1360 = vadd.f32 %v748, %v1359
        %v1361 = vpop.f32.mrb[0].mxu0
        %v1362 = vadd.f32 %v752, %v1361
        %v1363 = vpop.f32.mrb[0].mxu0
        %v1364 = vadd.f32 %v748, %v1363
        %v1365 = vpop.f32.mrb[0].mxu0
        %v1366 = vadd.f32 %v752, %v1365
        %1367 = vmatprep.mubr.bf16.mxu0 %v968
        %1368 = vmatmul.mubr.bf16.gmra.mrb[0].mxu0 %v967
        %v1369 = vpop.f32.mrb[0].mxu0
        %v1370 = vadd.f32 %v748, %v1369
        %v1371 = vpop.f32.mrb[0].mxu0
        %v1372 = vadd.f32 %v752, %v1371
        %v1373 = vpop.f32.mrb[0].mxu0
        %v1374 = vadd.f32 %v748, %v1373
        %v1375 = vpop.f32.mrb[0].mxu0
        %v1376 = vadd.f32 %v752, %v1375
        %1377 = vmatprep.mubr.bf16.mxu0 %v970
        %1378 = vmatmul.mubr.bf16.gmra.mrb[0].mxu0 %v969
        %v1379 = vpop.f32.mrb[0].mxu0
        %v1380 = vadd.f32 %v748, %v1379
        %v1381 = vpop.f32.mrb[0].mxu0
        %v1382 = vadd.f32 %v752, %v1381
        %v1383 = vpop.f32.mrb[0].mxu0
        %v1384 = vadd.f32 %v748, %v1383
        %v1385 = vpop.f32.mrb[0].mxu0
        %v1386 = vadd.f32 %v752, %v1385
        %1387 = vmatprep.mubr.bf16.mxu0 %v972
        %1388 = vmatmul.mubr.bf16.gmra.mrb[0].mxu0 %v971
        %v1389 = vpop.f32.mrb[0].mxu0
        %v1390 = vadd.f32 %v748, %v1389
        %v1391 = vpop.f32.mrb[0].mxu0
        %v1392 = vadd.f32 %v752, %v1391
        %v1393 = vpop.f32.mrb[0].mxu0
        %v1394 = vadd.f32 %v748, %v1393
        %v1395 = vpop.f32.mrb[0].mxu0
        %v1396 = vadd.f32 %v752, %v1395
        %1397 = vmatprep.mubr.bf16.mxu0 %v974
        %1398 = vmatmul.mubr.bf16.gmra.mrb[0].mxu0 %v973
        %v1399 = vpop.f32.mrb[0].mxu0
        %v1400 = vadd.f32 %v748, %v1399
        %v1401 = vpop.f32.mrb[0].mxu0
        %v1402 = vadd.f32 %v752, %v1401
        %v1403 = vpop.f32.mrb[0].mxu0
        %v1404 = vadd.f32 %v748, %v1403
        %v1405 = vpop.f32.mrb[0].mxu0
        %v1406 = vadd.f32 %v752, %v1405
        %1407 = vmatprep.mubr.bf16.mxu0 %v976
        %1408 = vmatmul.mubr.bf16.gmra.mrb[0].mxu0 %v975
        %v1409 = vpop.f32.mrb[0].mxu0
        %v1410 = vadd.f32 %v748, %v1409
        %v1411 = vpop.f32.mrb[0].mxu0
        %v1412 = vadd.f32 %v752, %v1411
        %v1413 = vpop.f32.mrb[0].mxu0
        %v1414 = vadd.f32 %v748, %v1413
        %v1415 = vpop.f32.mrb[0].mxu0
        %v1416 = vadd.f32 %v752, %v1415
        %1417 = vmatprep.mubr.bf16.mxu0 %v978
        %1418 = vmatmul.mubr.bf16.gmra.mrb[0].mxu0 %v977
        %v1419 = vpop.f32.mrb[0].mxu0
        %v1420 = vadd.f32 %v748, %v1419
        %v1421 = vpop.f32.mrb[0].mxu0
        %v1422 = vadd.f32 %v752, %v1421
        %v1423 = vpop.f32.mrb[0].mxu0
        %v1424 = vadd.f32 %v748, %v1423
        %v1425 = vpop.f32.mrb[0].mxu0
        %v1426 = vadd.f32 %v752, %v1425
        %1427 = vmatprep.mubr.bf16.mxu0 %v980
        %1428 = vmatmul.mubr.bf16.gmra.mrb[0].mxu0 %v979
        %v1429 = vpop.f32.mrb[0].mxu0
        %v1430 = vadd.f32 %v748, %v1429
        %v1431 = vpop.f32.mrb[0].mxu0
        %v1432 = vadd.f32 %v752, %v1431
        %v1433 = vpop.f32.mrb[0].mxu0
        %v1434 = vadd.f32 %v748, %v1433
        %v1435 = vpop.f32.mrb[0].mxu0
        %v1436 = vadd.f32 %v752, %v1435
        %1437 = vmatprep.mubr.bf16.mxu0 %v982
        %1438 = vmatmul.mubr.bf16.gmra.mrb[0].mxu0 %v981
        %v1439 = vpop.f32.mrb[0].mxu0
        %v1440 = vadd.f32 %v748, %v1439
        %v1441 = vpop.f32.mrb[0].mxu0
        %v1442 = vadd.f32 %v752, %v1441
        %v1443 = vpop.f32.mrb[0].mxu0
        %v1444 = vadd.f32 %v748, %v1443
        %v1445 = vpop.f32.mrb[0].mxu0
        %v1446 = vadd.f32 %v752, %v1445
        %1447 = vmatprep.mubr.bf16.mxu0 %v984
        %1448 = vmatmul.mubr.bf16.gmra.mrb[0].mxu0 %v983
        %v1449 = vpop.f32.mrb[0].mxu0
        %v1450 = vadd.f32 %v748, %v1449
        %v1451 = vpop.f32.mrb[0].mxu0
        %v1452 = vadd.f32 %v752, %v1451
        %v1453 = vpop.f32.mrb[0].mxu0
        %v1454 = vadd.f32 %v748, %v1453
        %v1455 = vpop.f32.mrb[0].mxu0
        %v1456 = vadd.f32 %v752, %v1455
        %1457 = vmatprep.mubr.bf16.mxu0 %v986
        %1458 = vmatmul.mubr.bf16.gmra.mrb[0].mxu0 %v985
        %v1459 = vpop.f32.mrb[0].mxu0
        %v1460 = vadd.f32 %v748, %v1459
        %v1461 = vpop.f32.mrb[0].mxu0
        %v1462 = vadd.f32 %v752, %v1461
        %v1463 = vpop.f32.mrb[0].mxu0
        %v1464 = vadd.f32 %v748, %v1463
        %v1465 = vpop.f32.mrb[0].mxu0
        %v1466 = vadd.f32 %v752, %v1465
        %1467 = vmatprep.mubr.bf16.mxu0 %v988
        %1468 = vmatmul.mubr.bf16.gmra.mrb[0].mxu0 %v987
        %v1469 = vpop.f32.mrb[0].mxu0
        %v1470 = vadd.f32 %v748, %v1469
        %v1471 = vpop.f32.mrb[0].mxu0
        %v1472 = vadd.f32 %v752, %v1471
        %v1473 = vpop.f32.mrb[0].mxu0
        %v1474 = vadd.f32 %v748, %v1473
        %v1475 = vpop.f32.mrb[0].mxu0
        %v1476 = vadd.f32 %v752, %v1475
        %1477 = vmatprep.mubr.bf16.mxu0 %v990
        %1478 = vmatmul.mubr.bf16.gmra.mrb[0].mxu0 %v989
        %v1479 = vpop.f32.mrb[0].mxu0
        %v1480 = vadd.f32 %v748, %v1479
        %v1481 = vpop.f32.mrb[0].mxu0
        %v1482 = vadd.f32 %v752, %v1481
        %v1483 = vpop.f32.mrb[0].mxu0
        %v1484 = vadd.f32 %v748, %v1483
        %v1485 = vpop.f32.mrb[0].mxu0
        %v1486 = vadd.f32 %v752, %v1485
        %1487 = vmatprep.mubr.bf16.mxu0 %v992
        %1488 = vmatmul.mubr.bf16.gmra.mrb[0].mxu0 %v991
        %v1489 = vpop.f32.mrb[0].mxu0
        %v1490 = vadd.f32 %v748, %v1489
        %v1491 = vpop.f32.mrb[0].mxu0
        %v1492 = vadd.f32 %v752, %v1491
        %v1493 = vpop.f32.mrb[0].mxu0
        %v1494 = vadd.f32 %v748, %v1493
        %v1495 = vpop.f32.mrb[0].mxu0
        %v1496 = vadd.f32 %v752, %v1495
        %1497 = vmatprep.mubr.bf16.mxu0 %v994
        %1498 = vmatmul.mubr.bf16.gmra.mrb[0].mxu0 %v993
        %v1499 = vpop.f32.mrb[0].mxu0
        %v1500 = vadd.f32 %v748, %v1499
        %v1501 = vpop.f32.mrb[0].mxu0
        %v1502 = vadd.f32 %v752, %v1501
        %v1503 = vpop.f32.mrb[0].mxu0
        %v1504 = vadd.f32 %v748, %v1503
        %v1505 = vpop.f32.mrb[0].mxu0
        %v1506 = vadd.f32 %v752, %v1505
        %1507 = vmatprep.mubr.bf16.mxu0 %v996
        %1508 = vmatmul.mubr.bf16.gmra.mrb[0].mxu0 %v995
        %v1509 = vpop.f32.mrb[0].mxu0
        %v1510 = vadd.f32 %v748, %v1509
        %v1511 = vpop.f32.mrb[0].mxu0
        %v1512 = vadd.f32 %v752, %v1511
        %v1513 = vpop.f32.mrb[0].mxu0
        %v1514 = vadd.f32 %v748, %v1513
        %v1515 = vpop.f32.mrb[0].mxu0
        %v1516 = vadd.f32 %v752, %v1515
        %1517 = vmatprep.mubr.bf16.mxu0 %v998
        %1518 = vmatmul.mubr.bf16.gmra.mrb[0].mxu0 %v997
        %v1519 = vpop.f32.mrb[0].mxu0
        %v1520 = vadd.f32 %v748, %v1519
        %v1521 = vpop.f32.mrb[0].mxu0
        %v1522 = vadd.f32 %v752, %v1521
        %v1523 = vpop.f32.mrb[0].mxu0
        %v1524 = vadd.f32 %v748, %v1523
        %v1525 = vpop.f32.mrb[0].mxu0
        %v1526 = vadd.f32 %v752, %v1525
        %1527 = vmatprep.mubr.bf16.mxu0 %v1000
        %1528 = vmatmul.mubr.bf16.gmra.mrb[0].mxu0 %v999
        %v1529 = vpop.f32.mrb[0].mxu0
        %v1530 = vadd.f32 %v748, %v1529
        %v1531 = vpop.f32.mrb[0].mxu0
        %v1532 = vadd.f32 %v752, %v1531
        %v1533 = vpop.f32.mrb[0].mxu0
        %v1534 = vadd.f32 %v748, %v1533
        %v1535 = vpop.f32.mrb[0].mxu0
        %v1536 = vadd.f32 %v752, %v1535
        %1537 = vmatprep.mubr.bf16.mxu0 %v1002
        %1538 = vmatmul.mubr.bf16.gmra.mrb[0].mxu0 %v1001
        %v1539 = vpop.f32.mrb[0].mxu0
        %v1540 = vadd.f32 %v748, %v1539
        %v1541 = vpop.f32.mrb[0].mxu0
        %v1542 = vadd.f32 %v752, %v1541
        %v1543 = vpop.f32.mrb[0].mxu0
        %v1544 = vadd.f32 %v748, %v1543
        %v1545 = vpop.f32.mrb[0].mxu0
        %v1546 = vadd.f32 %v752, %v1545
        %1547 = vmatprep.mubr.bf16.mxu0 %v1004
        %1548 = vmatmul.mubr.bf16.gmra.mrb[0].mxu0 %v1003
        %v1549 = vpop.f32.mrb[0].mxu0
        %v1550 = vadd.f32 %v748, %v1549
        %v1551 = vpop.f32.mrb[0].mxu0
        %v1552 = vadd.f32 %v752, %v1551
        %v1553 = vpop.f32.mrb[0].mxu0
        %v1554 = vadd.f32 %v748, %v1553
        %v1555 = vpop.f32.mrb[0].mxu0
        %v1556 = vadd.f32 %v752, %v1555
        %1557 = vmatprep.mubr.bf16.mxu0 %v1006
        %1558 = vmatmul.mubr.bf16.gmra.mrb[0].mxu0 %v1005
        %v1559 = vpop.f32.mrb[0].mxu0
        %v1560 = vadd.f32 %v748, %v1559
        %v1561 = vpop.f32.mrb[0].mxu0
        %v1562 = vadd.f32 %v752, %v1561
        %v1563 = vpop.f32.mrb[0].mxu0
        %v1564 = vadd.f32 %v748, %v1563
        %v1565 = vpop.f32.mrb[0].mxu0
        %v1566 = vadd.f32 %v752, %v1565
        %1567 = vmatprep.mubr.bf16.mxu0 %v1008
        %1568 = vmatmul.mubr.bf16.gmra.mrb[0].mxu0 %v1007
        %v1569 = vpop.f32.mrb[0].mxu0
        %v1570 = vadd.f32 %v748, %v1569
        %v1571 = vpop.f32.mrb[0].mxu0
        %v1572 = vadd.f32 %v752, %v1571
        %v1573 = vpop.f32.mrb[0].mxu0
        %v1574 = vadd.f32 %v748, %v1573
        %v1575 = vpop.f32.mrb[0].mxu0
        %v1576 = vadd.f32 %v752, %v1575
        %1577 = vmatprep.mubr.bf16.mxu0 %v1010
        %1578 = vmatmul.mubr.bf16.gmra.mrb[0].mxu0 %v1009
        %v1579 = vpop.f32.mrb[0].mxu0
        %v1580 = vadd.f32 %v748, %v1579
        %v1581 = vpop.f32.mrb[0].mxu0
        %v1582 = vadd.f32 %v752, %v1581
        %v1583 = vpop.f32.mrb[0].mxu0
        %v1584 = vadd.f32 %v748, %v1583
        %v1585 = vpop.f32.mrb[0].mxu0
        %v1586 = vadd.f32 %v752, %v1585
        %1587 = vdwg.mxu0
        %v1588 = vmax.f32 %v1270, 0.0
        %v1589 = vmax.f32 %v1272, 0.0
        %v1590 = vmax.f32 %v1274, 0.0
        %v1591 = vmax.f32 %v1276, 0.0
        %v1592 = vmax.f32 %v1280, 0.0
        %v1593 = vmax.f32 %v1282, 0.0
        %v1594 = vmax.f32 %v1284, 0.0
        %v1595 = vmax.f32 %v1286, 0.0
        %v1596 = vmax.f32 %v1290, 0.0
        %v1597 = vmax.f32 %v1292, 0.0
        %v1598 = vmax.f32 %v1294, 0.0
        %v1599 = vmax.f32 %v1296, 0.0
        %v1600 = vmax.f32 %v1300, 0.0
        %v1601 = vmax.f32 %v1302, 0.0
        %v1602 = vmax.f32 %v1304, 0.0
        %v1603 = vmax.f32 %v1306, 0.0
        %v1604 = vmax.f32 %v1310, 0.0
        %v1605 = vmax.f32 %v1312, 0.0
        %v1606 = vmax.f32 %v1314, 0.0
        %v1607 = vmax.f32 %v1316, 0.0
        %v1608 = vmax.f32 %v1320, 0.0
        %v1609 = vmax.f32 %v1322, 0.0
        %v1610 = vmax.f32 %v1324, 0.0
        %v1611 = vmax.f32 %v1326, 0.0
        %v1612 = vmax.f32 %v1330, 0.0
        %v1613 = vmax.f32 %v1332, 0.0
        %v1614 = vmax.f32 %v1334, 0.0
        %v1615 = vmax.f32 %v1336, 0.0
        %v1616 = vmax.f32 %v1340, 0.0
        %v1617 = vmax.f32 %v1342, 0.0
        %v1618 = vmax.f32 %v1344, 0.0
        %v1619 = vmax.f32 %v1346, 0.0
        %v1620 = vmax.f32 %v1350, 0.0
        %v1621 = vmax.f32 %v1352, 0.0
        %v1622 = vmax.f32 %v1354, 0.0
        %v1623 = vmax.f32 %v1356, 0.0
        %v1624 = vmax.f32 %v1360, 0.0
        %v1625 = vmax.f32 %v1362, 0.0
        %v1626 = vmax.f32 %v1364, 0.0
        %v1627 = vmax.f32 %v1366, 0.0
        %v1628 = vmax.f32 %v1370, 0.0
        %v1629 = vmax.f32 %v1372, 0.0
        %v1630 = vmax.f32 %v1374, 0.0
        %v1631 = vmax.f32 %v1376, 0.0
        %v1632 = vmax.f32 %v1380, 0.0
        %v1633 = vmax.f32 %v1382, 0.0
        %v1634 = vmax.f32 %v1384, 0.0
        %v1635 = vmax.f32 %v1386, 0.0
        %v1636 = vmax.f32 %v1390, 0.0
        %v1637 = vmax.f32 %v1392, 0.0
        %v1638 = vmax.f32 %v1394, 0.0
        %v1639 = vmax.f32 %v1396, 0.0
        %v1640 = vmax.f32 %v1400, 0.0
        %v1641 = vmax.f32 %v1402, 0.0
        %v1642 = vmax.f32 %v1404, 0.0
        %v1643 = vmax.f32 %v1406, 0.0
        %v1644 = vmax.f32 %v1410, 0.0
        %v1645 = vmax.f32 %v1412, 0.0
        %v1646 = vmax.f32 %v1414, 0.0
        %v1647 = vmax.f32 %v1416, 0.0
        %v1648 = vmax.f32 %v1420, 0.0
        %v1649 = vmax.f32 %v1422, 0.0
        %v1650 = vmax.f32 %v1424, 0.0
        %v1651 = vmax.f32 %v1426, 0.0
        %v1652 = vmax.f32 %v1430, 0.0
        %v1653 = vmax.f32 %v1432, 0.0
        %v1654 = vmax.f32 %v1434, 0.0
        %v1655 = vmax.f32 %v1436, 0.0
        %v1656 = vmax.f32 %v1440, 0.0
        %v1657 = vmax.f32 %v1442, 0.0
        %v1658 = vmax.f32 %v1444, 0.0
        %v1659 = vmax.f32 %v1446, 0.0
        %v1660 = vmax.f32 %v1450, 0.0
        %v1661 = vmax.f32 %v1452, 0.0
        %v1662 = vmax.f32 %v1454, 0.0
        %v1663 = vmax.f32 %v1456, 0.0
        %v1664 = vmax.f32 %v1460, 0.0
        %v1665 = vmax.f32 %v1462, 0.0
        %v1666 = vmax.f32 %v1464, 0.0
        %v1667 = vmax.f32 %v1466, 0.0
        %v1668 = vmax.f32 %v1470, 0.0
        %v1669 = vmax.f32 %v1472, 0.0
        %v1670 = vmax.f32 %v1474, 0.0
        %v1671 = vmax.f32 %v1476, 0.0
        %v1672 = vmax.f32 %v1480, 0.0
        %v1673 = vmax.f32 %v1482, 0.0
        %v1674 = vmax.f32 %v1484, 0.0
        %v1675 = vmax.f32 %v1486, 0.0
        %v1676 = vmax.f32 %v1490, 0.0
        %v1677 = vmax.f32 %v1492, 0.0
        %v1678 = vmax.f32 %v1494, 0.0
        %v1679 = vmax.f32 %v1496, 0.0
        %v1680 = vmax.f32 %v1500, 0.0
        %v1681 = vmax.f32 %v1502, 0.0
        %v1682 = vmax.f32 %v1504, 0.0
        %v1683 = vmax.f32 %v1506, 0.0
        %v1684 = vmax.f32 %v1510, 0.0
        %v1685 = vmax.f32 %v1512, 0.0
        %v1686 = vmax.f32 %v1514, 0.0
        %v1687 = vmax.f32 %v1516, 0.0
        %v1688 = vmax.f32 %v1520, 0.0
        %v1689 = vmax.f32 %v1522, 0.0
        %v1690 = vmax.f32 %v1524, 0.0
        %v1691 = vmax.f32 %v1526, 0.0
        %v1692 = vmax.f32 %v1530, 0.0
        %v1693 = vmax.f32 %v1532, 0.0
        %v1694 = vmax.f32 %v1534, 0.0
        %v1695 = vmax.f32 %v1536, 0.0
        %v1696 = vmax.f32 %v1540, 0.0
        %v1697 = vmax.f32 %v1542, 0.0
        %v1698 = vmax.f32 %v1544, 0.0
        %v1699 = vmax.f32 %v1546, 0.0
        %v1700 = vmax.f32 %v1550, 0.0
        %v1701 = vmax.f32 %v1552, 0.0
        %v1702 = vmax.f32 %v1554, 0.0
        %v1703 = vmax.f32 %v1556, 0.0
        %v1704 = vmax.f32 %v1560, 0.0
        %v1705 = vmax.f32 %v1562, 0.0
        %v1706 = vmax.f32 %v1564, 0.0
        %v1707 = vmax.f32 %v1566, 0.0
        %v1708 = vmax.f32 %v1570, 0.0
        %v1709 = vmax.f32 %v1572, 0.0
        %v1710 = vmax.f32 %v1574, 0.0
        %v1711 = vmax.f32 %v1576, 0.0
        %v1712 = vmax.f32 %v1580, 0.0
        %v1713 = vmax.f32 %v1582, 0.0
        %v1714 = vmax.f32 %v1584, 0.0
        %v1715 = vmax.f32 %v1586, 0.0
        %v1716 = vpack.c.bf16 %v1590, %v1588
        %v1717 = vpack.c.bf16 %v1591, %v1589
        %v1718 = vpack.c.bf16 %v1594, %v1592
        %v1719 = vpack.c.bf16 %v1595, %v1593
        %v1720 = vpack.c.bf16 %v1598, %v1596
        %v1721 = vpack.c.bf16 %v1599, %v1597
        %v1722 = vpack.c.bf16 %v1602, %v1600
        %v1723 = vpack.c.bf16 %v1603, %v1601
        %v1724 = vpack.c.bf16 %v1606, %v1604
        %v1725 = vpack.c.bf16 %v1607, %v1605
        %v1726 = vpack.c.bf16 %v1610, %v1608
        %v1727 = vpack.c.bf16 %v1611, %v1609
        %v1728 = vpack.c.bf16 %v1614, %v1612
        %v1729 = vpack.c.bf16 %v1615, %v1613
        %v1730 = vpack.c.bf16 %v1618, %v1616
        %v1731 = vpack.c.bf16 %v1619, %v1617
        %v1732 = vpack.c.bf16 %v1622, %v1620
        %v1733 = vpack.c.bf16 %v1623, %v1621
        %v1734 = vpack.c.bf16 %v1626, %v1624
        %v1735 = vpack.c.bf16 %v1627, %v1625
        %v1736 = vpack.c.bf16 %v1630, %v1628
        %v1737 = vpack.c.bf16 %v1631, %v1629
        %v1738 = vpack.c.bf16 %v1634, %v1632
        %v1739 = vpack.c.bf16 %v1635, %v1633
        %v1740 = vpack.c.bf16 %v1638, %v1636
        %v1741 = vpack.c.bf16 %v1639, %v1637
        %v1742 = vpack.c.bf16 %v1642, %v1640
        %v1743 = vpack.c.bf16 %v1643, %v1641
        %v1744 = vpack.c.bf16 %v1646, %v1644
        %v1745 = vpack.c.bf16 %v1647, %v1645
        %v1746 = vpack.c.bf16 %v1650, %v1648
        %v1747 = vpack.c.bf16 %v1651, %v1649
        %v1748 = vpack.c.bf16 %v1654, %v1652
        %v1749 = vpack.c.bf16 %v1655, %v1653
        %v1750 = vpack.c.bf16 %v1658, %v1656
        %v1751 = vpack.c.bf16 %v1659, %v1657
        %v1752 = vpack.c.bf16 %v1662, %v1660
        %v1753 = vpack.c.bf16 %v1663, %v1661
        %v1754 = vpack.c.bf16 %v1666, %v1664
        %v1755 = vpack.c.bf16 %v1667, %v1665
        %v1756 = vpack.c.bf16 %v1670, %v1668
        %v1757 = vpack.c.bf16 %v1671, %v1669
        %v1758 = vpack.c.bf16 %v1674, %v1672
        %v1759 = vpack.c.bf16 %v1675, %v1673
        %v1760 = vpack.c.bf16 %v1678, %v1676
        %v1761 = vpack.c.bf16 %v1679, %v1677
        %v1762 = vpack.c.bf16 %v1682, %v1680
        %v1763 = vpack.c.bf16 %v1683, %v1681
        %v1764 = vpack.c.bf16 %v1686, %v1684
        %v1765 = vpack.c.bf16 %v1687, %v1685
        %v1766 = vpack.c.bf16 %v1690, %v1688
        %v1767 = vpack.c.bf16 %v1691, %v1689
        %v1768 = vpack.c.bf16 %v1694, %v1692
        %v1769 = vpack.c.bf16 %v1695, %v1693
        %v1770 = vpack.c.bf16 %v1698, %v1696
        %v1771 = vpack.c.bf16 %v1699, %v1697
        %v1772 = vpack.c.bf16 %v1702, %v1700
        %v1773 = vpack.c.bf16 %v1703, %v1701
        %v1774 = vpack.c.bf16 %v1706, %v1704
        %v1775 = vpack.c.bf16 %v1707, %v1705
        %v1776 = vpack.c.bf16 %v1710, %v1708
        %v1777 = vpack.c.bf16 %v1711, %v1709
        %v1778 = vpack.c.bf16 %v1714, %v1712
        %v1779 = vpack.c.bf16 %v1715, %v1713
        %v1780 = vld [vmem:[#allocation8] sm:$0xff]
        %v1781 = vld [vmem:[#allocation8 + $0x8] sm:$0xff]
        %v1782 = vld [vmem:[#allocation8 + $0x10] sm:$0xff]
        %v1783 = vld [vmem:[#allocation8 + $0x18] sm:$0xff]
        %v1784 = vld [vmem:[#allocation8 + $0x20] sm:$0xff]
        %v1785 = vld [vmem:[#allocation8 + $0x28] sm:$0xff]
        %v1786 = vld [vmem:[#allocation8 + $0x30] sm:$0xff]
        %v1787 = vld [vmem:[#allocation8 + $0x38] sm:$0xff]
        %v1788 = vld [vmem:[#allocation8 + $0x40] sm:$0xff]
        %v1789 = vld [vmem:[#allocation8 + $0x48] sm:$0xff]
        %v1790 = vld [vmem:[#allocation8 + $0x50] sm:$0xff]
        %v1791 = vld [vmem:[#allocation8 + $0x58] sm:$0xff]
        %v1792 = vld [vmem:[#allocation8 + $0x60] sm:$0xff]
        %v1793 = vld [vmem:[#allocation8 + $0x68] sm:$0xff]
        %v1794 = vld [vmem:[#allocation8 + $0x70] sm:$0xff]
        %v1795 = vld [vmem:[#allocation8 + $0x78] sm:$0xff]
        %v1796 = vld [vmem:[#allocation8 + $0x80] sm:$0xff]
        %v1797 = vld [vmem:[#allocation8 + $0x88] sm:$0xff]
        %v1798 = vld [vmem:[#allocation8 + $0x90] sm:$0xff]
        %v1799 = vld [vmem:[#allocation8 + $0x98] sm:$0xff]
        %v1800 = vld [vmem:[#allocation8 + $0xa0] sm:$0xff]
        %v1801 = vld [vmem:[#allocation8 + $0xa8] sm:$0xff]
        %v1802 = vld [vmem:[#allocation8 + $0xb0] sm:$0xff]
        %v1803 = vld [vmem:[#allocation8 + $0xb8] sm:$0xff]
        %v1804 = vld [vmem:[#allocation8 + $0xc0] sm:$0xff]
        %v1805 = vld [vmem:[#allocation8 + $0xc8] sm:$0xff]
        %v1806 = vld [vmem:[#allocation8 + $0xd0] sm:$0xff]
        %v1807 = vld [vmem:[#allocation8 + $0xd8] sm:$0xff]
        %v1808 = vld [vmem:[#allocation8 + $0xe0] sm:$0xff]
        %v1809 = vld [vmem:[#allocation8 + $0xe8] sm:$0xff]
        %v1810 = vld [vmem:[#allocation8 + $0xf0] sm:$0xff]
        %v1811 = vld [vmem:[#allocation8 + $0xf8] sm:$0xff]
        %v1812 = vld [vmem:[%s5] sm:$0x3]
        %v1814 = vlaneseq
        %v1815 = vshrl.u32 %v1814, 7
        %v1816 = vsub.s32 0, %v1815
        %v1817 = vrot.slane %v1812, %v1816
        %v1818 = vlaneseq
        %v1819 = vshrl.u32 %v1818, 7
        %v1820 = vsub.s32 1, %v1819
        %v1821 = vrot.slane %v1812, %v1820
        %v1856 = vunpack.c.l.b16 %v1780
        %v1857 = vunpack.c.h.b16 %v1780
        %v1858 = vunpack.c.l.b16 %v1781
        %v1859 = vunpack.c.h.b16 %v1781
        %v1860 = vunpack.c.l.b16 %v1782
        %v1861 = vunpack.c.h.b16 %v1782
        %v1862 = vunpack.c.l.b16 %v1783
        %v1863 = vunpack.c.h.b16 %v1783
        %v1864 = vunpack.c.l.b16 %v1784
        %v1865 = vunpack.c.h.b16 %v1784
        %v1866 = vunpack.c.l.b16 %v1785
        %v1867 = vunpack.c.h.b16 %v1785
        %v1868 = vunpack.c.l.b16 %v1786
        %v1869 = vunpack.c.h.b16 %v1786
        %v1870 = vunpack.c.l.b16 %v1787
        %v1871 = vunpack.c.h.b16 %v1787
        %v1872 = vunpack.c.l.b16 %v1788
        %v1873 = vunpack.c.h.b16 %v1788
        %v1874 = vunpack.c.l.b16 %v1789
        %v1875 = vunpack.c.h.b16 %v1789
        %v1876 = vunpack.c.l.b16 %v1790
        %v1877 = vunpack.c.h.b16 %v1790
        %v1878 = vunpack.c.l.b16 %v1791
        %v1879 = vunpack.c.h.b16 %v1791
        %v1880 = vunpack.c.l.b16 %v1792
        %v1881 = vunpack.c.h.b16 %v1792
        %v1882 = vunpack.c.l.b16 %v1793
        %v1883 = vunpack.c.h.b16 %v1793
        %v1884 = vunpack.c.l.b16 %v1794
        %v1885 = vunpack.c.h.b16 %v1794
        %v1886 = vunpack.c.l.b16 %v1795
        %v1887 = vunpack.c.h.b16 %v1795
        %v1888 = vunpack.c.l.b16 %v1796
        %v1889 = vunpack.c.h.b16 %v1796
        %v1890 = vunpack.c.l.b16 %v1797
        %v1891 = vunpack.c.h.b16 %v1797
        %v1892 = vunpack.c.l.b16 %v1798
        %v1893 = vunpack.c.h.b16 %v1798
        %v1894 = vunpack.c.l.b16 %v1799
        %v1895 = vunpack.c.h.b16 %v1799
        %v1896 = vunpack.c.l.b16 %v1800
        %v1897 = vunpack.c.h.b16 %v1800
        %v1898 = vunpack.c.l.b16 %v1801
        %v1899 = vunpack.c.h.b16 %v1801
        %v1900 = vunpack.c.l.b16 %v1802
        %v1901 = vunpack.c.h.b16 %v1802
        %v1902 = vunpack.c.l.b16 %v1803
        %v1903 = vunpack.c.h.b16 %v1803
        %v1904 = vunpack.c.l.b16 %v1804
        %v1905 = vunpack.c.h.b16 %v1804
        %v1906 = vunpack.c.l.b16 %v1805
        %v1907 = vunpack.c.h.b16 %v1805
        %v1908 = vunpack.c.l.b16 %v1806
        %v1909 = vunpack.c.h.b16 %v1806
        %v1910 = vunpack.c.l.b16 %v1807
        %v1911 = vunpack.c.h.b16 %v1807
        %v1912 = vunpack.c.l.b16 %v1808
        %v1913 = vunpack.c.h.b16 %v1808
        %v1914 = vunpack.c.l.b16 %v1809
        %v1915 = vunpack.c.h.b16 %v1809
        %v1916 = vunpack.c.l.b16 %v1810
        %v1917 = vunpack.c.h.b16 %v1810
        %v1918 = vunpack.c.l.b16 %v1811
        %v1919 = vunpack.c.h.b16 %v1811
        %v1920 = vpack.c.b16 %v1858, %v1856
        %v1921 = vpack.c.b16 %v1859, %v1857
        %v1922 = vpack.c.b16 %v1862, %v1860
        %v1923 = vpack.c.b16 %v1863, %v1861
        %v1924 = vpack.c.b16 %v1866, %v1864
        %v1925 = vpack.c.b16 %v1867, %v1865
        %v1926 = vpack.c.b16 %v1870, %v1868
        %v1927 = vpack.c.b16 %v1871, %v1869
        %v1928 = vpack.c.b16 %v1874, %v1872
        %v1929 = vpack.c.b16 %v1875, %v1873
        %v1930 = vpack.c.b16 %v1878, %v1876
        %v1931 = vpack.c.b16 %v1879, %v1877
        %v1932 = vpack.c.b16 %v1882, %v1880
        %v1933 = vpack.c.b16 %v1883, %v1881
        %v1934 = vpack.c.b16 %v1886, %v1884
        %v1935 = vpack.c.b16 %v1887, %v1885
        %v1936 = vpack.c.b16 %v1890, %v1888
        %v1937 = vpack.c.b16 %v1891, %v1889
        %v1938 = vpack.c.b16 %v1894, %v1892
        %v1939 = vpack.c.b16 %v1895, %v1893
        %v1940 = vpack.c.b16 %v1898, %v1896
        %v1941 = vpack.c.b16 %v1899, %v1897
        %v1942 = vpack.c.b16 %v1902, %v1900
        %v1943 = vpack.c.b16 %v1903, %v1901
        %v1944 = vpack.c.b16 %v1906, %v1904
        %v1945 = vpack.c.b16 %v1907, %v1905
        %v1946 = vpack.c.b16 %v1910, %v1908
        %v1947 = vpack.c.b16 %v1911, %v1909
        %v1948 = vpack.c.b16 %v1914, %v1912
        %v1949 = vpack.c.b16 %v1915, %v1913
        %v1950 = vpack.c.b16 %v1918, %v1916
        %v1951 = vpack.c.b16 %v1919, %v1917
        %1984 = vmatprep.subr.bf16.mxu0 %v1921
        %1985 = vmatpush1.bf16.msra.mxu0 %v1920
        %1986 = vmatprep.subr.bf16.mxu0 %v1923
        %1987 = vmatpush1.bf16.msra.mxu0 %v1922
        %1988 = vmatprep.subr.bf16.mxu0 %v1925
        %1989 = vmatpush1.bf16.msra.mxu0 %v1924
        %1990 = vmatprep.subr.bf16.mxu0 %v1927
        %1991 = vmatpush1.bf16.msra.mxu0 %v1926
        %1992 = vmatprep.subr.bf16.mxu0 %v1929
        %1993 = vmatpush1.bf16.msra.mxu0 %v1928
        %1994 = vmatprep.subr.bf16.mxu0 %v1931
        %1995 = vmatpush1.bf16.msra.mxu0 %v1930
        %1996 = vmatprep.subr.bf16.mxu0 %v1933
        %1997 = vmatpush1.bf16.msra.mxu0 %v1932
        %1998 = vmatprep.subr.bf16.mxu0 %v1935
        %1999 = vmatpush1.bf16.msra.mxu0 %v1934
        %2000 = vmatprep.subr.bf16.mxu0 %v1937
        %2001 = vmatpush1.bf16.msra.mxu0 %v1936
        %2002 = vmatprep.subr.bf16.mxu0 %v1939
        %2003 = vmatpush1.bf16.msra.mxu0 %v1938
        %2004 = vmatprep.subr.bf16.mxu0 %v1941
        %2005 = vmatpush1.bf16.msra.mxu0 %v1940
        %2006 = vmatprep.subr.bf16.mxu0 %v1943
        %2007 = vmatpush1.bf16.msra.mxu0 %v1942
        %2008 = vmatprep.subr.bf16.mxu0 %v1945
        %2009 = vmatpush1.bf16.msra.mxu0 %v1944
        %2010 = vmatprep.subr.bf16.mxu0 %v1947
        %2011 = vmatpush1.bf16.msra.mxu0 %v1946
        %2012 = vmatprep.subr.bf16.mxu0 %v1949
        %2013 = vmatpush1.bf16.msra.mxu0 %v1948
        %2014 = vmatprep.subr.bf16.mxu0 %v1951
        %2015 = vmatpush1.bf16.msra.mxu0 %v1950
        %2016 = vmatprep.mubr.bf16.mxu0 %v1717
        %2017 = vmatmul.mubr.bf16.gmra.mrb[0].mxu0 %v1716
        %v2018 = vpop.f32.mrb[0].mxu0
        %v2019 = vadd.f32 %v1817, %v2018
        %v2020 = vpop.f32.mrb[0].mxu0
        %v2021 = vadd.f32 %v1821, %v2020
        %v2022 = vpop.f32.mrb[0].mxu0
        %v2023 = vadd.f32 %v1817, %v2022
        %v2024 = vpop.f32.mrb[0].mxu0
        %v2025 = vadd.f32 %v1821, %v2024
        %2026 = vmatprep.mubr.bf16.mxu0 %v1719
        %2027 = vmatmul.mubr.bf16.gmra.mrb[0].mxu0 %v1718
        %v2028 = vpop.f32.mrb[0].mxu0
        %v2029 = vadd.f32 %v1817, %v2028
        %v2030 = vpop.f32.mrb[0].mxu0
        %v2031 = vadd.f32 %v1821, %v2030
        %v2032 = vpop.f32.mrb[0].mxu0
        %v2033 = vadd.f32 %v1817, %v2032
        %v2034 = vpop.f32.mrb[0].mxu0
        %v2035 = vadd.f32 %v1821, %v2034
        %2036 = vmatprep.mubr.bf16.mxu0 %v1721
        %2037 = vmatmul.mubr.bf16.gmra.mrb[0].mxu0 %v1720
        %v2038 = vpop.f32.mrb[0].mxu0
        %v2039 = vadd.f32 %v1817, %v2038
        %v2040 = vpop.f32.mrb[0].mxu0
        %v2041 = vadd.f32 %v1821, %v2040
        %v2042 = vpop.f32.mrb[0].mxu0
        %v2043 = vadd.f32 %v1817, %v2042
        %v2044 = vpop.f32.mrb[0].mxu0
        %v2045 = vadd.f32 %v1821, %v2044
        %2046 = vmatprep.mubr.bf16.mxu0 %v1723
        %2047 = vmatmul.mubr.bf16.gmra.mrb[0].mxu0 %v1722
        %v2048 = vpop.f32.mrb[0].mxu0
        %v2049 = vadd.f32 %v1817, %v2048
        %v2050 = vpop.f32.mrb[0].mxu0
        %v2051 = vadd.f32 %v1821, %v2050
        %v2052 = vpop.f32.mrb[0].mxu0
        %v2053 = vadd.f32 %v1817, %v2052
        %v2054 = vpop.f32.mrb[0].mxu0
        %v2055 = vadd.f32 %v1821, %v2054
        %2056 = vmatprep.mubr.bf16.mxu0 %v1725
        %2057 = vmatmul.mubr.bf16.gmra.mrb[0].mxu0 %v1724
        %v2058 = vpop.f32.mrb[0].mxu0
        %v2059 = vadd.f32 %v1817, %v2058
        %v2060 = vpop.f32.mrb[0].mxu0
        %v2061 = vadd.f32 %v1821, %v2060
        %v2062 = vpop.f32.mrb[0].mxu0
        %v2063 = vadd.f32 %v1817, %v2062
        %v2064 = vpop.f32.mrb[0].mxu0
        %v2065 = vadd.f32 %v1821, %v2064
        %2066 = vmatprep.mubr.bf16.mxu0 %v1727
        %2067 = vmatmul.mubr.bf16.gmra.mrb[0].mxu0 %v1726
        %v2068 = vpop.f32.mrb[0].mxu0
        %v2069 = vadd.f32 %v1817, %v2068
        %v2070 = vpop.f32.mrb[0].mxu0
        %v2071 = vadd.f32 %v1821, %v2070
        %v2072 = vpop.f32.mrb[0].mxu0
        %v2073 = vadd.f32 %v1817, %v2072
        %v2074 = vpop.f32.mrb[0].mxu0
        %v2075 = vadd.f32 %v1821, %v2074
        %2076 = vmatprep.mubr.bf16.mxu0 %v1729
        %2077 = vmatmul.mubr.bf16.gmra.mrb[0].mxu0 %v1728
        %v2078 = vpop.f32.mrb[0].mxu0
        %v2079 = vadd.f32 %v1817, %v2078
        %v2080 = vpop.f32.mrb[0].mxu0
        %v2081 = vadd.f32 %v1821, %v2080
        %v2082 = vpop.f32.mrb[0].mxu0
        %v2083 = vadd.f32 %v1817, %v2082
        %v2084 = vpop.f32.mrb[0].mxu0
        %v2085 = vadd.f32 %v1821, %v2084
        %2086 = vmatprep.mubr.bf16.mxu0 %v1731
        %2087 = vmatmul.mubr.bf16.gmra.mrb[0].mxu0 %v1730
        %v2088 = vpop.f32.mrb[0].mxu0
        %v2089 = vadd.f32 %v1817, %v2088
        %v2090 = vpop.f32.mrb[0].mxu0
        %v2091 = vadd.f32 %v1821, %v2090
        %v2092 = vpop.f32.mrb[0].mxu0
        %v2093 = vadd.f32 %v1817, %v2092
        %v2094 = vpop.f32.mrb[0].mxu0
        %v2095 = vadd.f32 %v1821, %v2094
        %2096 = vmatprep.mubr.bf16.mxu0 %v1733
        %2097 = vmatmul.mubr.bf16.gmra.mrb[0].mxu0 %v1732
        %v2098 = vpop.f32.mrb[0].mxu0
        %v2099 = vadd.f32 %v1817, %v2098
        %v2100 = vpop.f32.mrb[0].mxu0
        %v2101 = vadd.f32 %v1821, %v2100
        %v2102 = vpop.f32.mrb[0].mxu0
        %v2103 = vadd.f32 %v1817, %v2102
        %v2104 = vpop.f32.mrb[0].mxu0
        %v2105 = vadd.f32 %v1821, %v2104
        %2106 = vmatprep.mubr.bf16.mxu0 %v1735
        %2107 = vmatmul.mubr.bf16.gmra.mrb[0].mxu0 %v1734
        %v2108 = vpop.f32.mrb[0].mxu0
        %v2109 = vadd.f32 %v1817, %v2108
        %v2110 = vpop.f32.mrb[0].mxu0
        %v2111 = vadd.f32 %v1821, %v2110
        %v2112 = vpop.f32.mrb[0].mxu0
        %v2113 = vadd.f32 %v1817, %v2112
        %v2114 = vpop.f32.mrb[0].mxu0
        %v2115 = vadd.f32 %v1821, %v2114
        %2116 = vmatprep.mubr.bf16.mxu0 %v1737
        %2117 = vmatmul.mubr.bf16.gmra.mrb[0].mxu0 %v1736
        %v2118 = vpop.f32.mrb[0].mxu0
        %v2119 = vadd.f32 %v1817, %v2118
        %v2120 = vpop.f32.mrb[0].mxu0
        %v2121 = vadd.f32 %v1821, %v2120
        %v2122 = vpop.f32.mrb[0].mxu0
        %v2123 = vadd.f32 %v1817, %v2122
        %v2124 = vpop.f32.mrb[0].mxu0
        %v2125 = vadd.f32 %v1821, %v2124
        %2126 = vmatprep.mubr.bf16.mxu0 %v1739
        %2127 = vmatmul.mubr.bf16.gmra.mrb[0].mxu0 %v1738
        %v2128 = vpop.f32.mrb[0].mxu0
        %v2129 = vadd.f32 %v1817, %v2128
        %v2130 = vpop.f32.mrb[0].mxu0
        %v2131 = vadd.f32 %v1821, %v2130
        %v2132 = vpop.f32.mrb[0].mxu0
        %v2133 = vadd.f32 %v1817, %v2132
        %v2134 = vpop.f32.mrb[0].mxu0
        %v2135 = vadd.f32 %v1821, %v2134
        %2136 = vmatprep.mubr.bf16.mxu0 %v1741
        %2137 = vmatmul.mubr.bf16.gmra.mrb[0].mxu0 %v1740
        %v2138 = vpop.f32.mrb[0].mxu0
        %v2139 = vadd.f32 %v1817, %v2138
        %v2140 = vpop.f32.mrb[0].mxu0
        %v2141 = vadd.f32 %v1821, %v2140
        %v2142 = vpop.f32.mrb[0].mxu0
        %v2143 = vadd.f32 %v1817, %v2142
        %v2144 = vpop.f32.mrb[0].mxu0
        %v2145 = vadd.f32 %v1821, %v2144
        %2146 = vmatprep.mubr.bf16.mxu0 %v1743
        %2147 = vmatmul.mubr.bf16.gmra.mrb[0].mxu0 %v1742
        %v2148 = vpop.f32.mrb[0].mxu0
        %v2149 = vadd.f32 %v1817, %v2148
        %v2150 = vpop.f32.mrb[0].mxu0
        %v2151 = vadd.f32 %v1821, %v2150
        %v2152 = vpop.f32.mrb[0].mxu0
        %v2153 = vadd.f32 %v1817, %v2152
        %v2154 = vpop.f32.mrb[0].mxu0
        %v2155 = vadd.f32 %v1821, %v2154
        %2156 = vmatprep.mubr.bf16.mxu0 %v1745
        %2157 = vmatmul.mubr.bf16.gmra.mrb[0].mxu0 %v1744
        %v2158 = vpop.f32.mrb[0].mxu0
        %v2159 = vadd.f32 %v1817, %v2158
        %v2160 = vpop.f32.mrb[0].mxu0
        %v2161 = vadd.f32 %v1821, %v2160
        %v2162 = vpop.f32.mrb[0].mxu0
        %v2163 = vadd.f32 %v1817, %v2162
        %v2164 = vpop.f32.mrb[0].mxu0
        %v2165 = vadd.f32 %v1821, %v2164
        %2166 = vmatprep.mubr.bf16.mxu0 %v1747
        %2167 = vmatmul.mubr.bf16.gmra.mrb[0].mxu0 %v1746
        %v2168 = vpop.f32.mrb[0].mxu0
        %v2169 = vadd.f32 %v1817, %v2168
        %v2170 = vpop.f32.mrb[0].mxu0
        %v2171 = vadd.f32 %v1821, %v2170
        %v2172 = vpop.f32.mrb[0].mxu0
        %v2173 = vadd.f32 %v1817, %v2172
        %v2174 = vpop.f32.mrb[0].mxu0
        %v2175 = vadd.f32 %v1821, %v2174
        %2176 = vmatprep.mubr.bf16.mxu0 %v1749
        %2177 = vmatmul.mubr.bf16.gmra.mrb[0].mxu0 %v1748
        %v2178 = vpop.f32.mrb[0].mxu0
        %v2179 = vadd.f32 %v1817, %v2178
        %v2180 = vpop.f32.mrb[0].mxu0
        %v2181 = vadd.f32 %v1821, %v2180
        %v2182 = vpop.f32.mrb[0].mxu0
        %v2183 = vadd.f32 %v1817, %v2182
        %v2184 = vpop.f32.mrb[0].mxu0
        %v2185 = vadd.f32 %v1821, %v2184
        %2186 = vmatprep.mubr.bf16.mxu0 %v1751
        %2187 = vmatmul.mubr.bf16.gmra.mrb[0].mxu0 %v1750
        %v2188 = vpop.f32.mrb[0].mxu0
        %v2189 = vadd.f32 %v1817, %v2188
        %v2190 = vpop.f32.mrb[0].mxu0
        %v2191 = vadd.f32 %v1821, %v2190
        %v2192 = vpop.f32.mrb[0].mxu0
        %v2193 = vadd.f32 %v1817, %v2192
        %v2194 = vpop.f32.mrb[0].mxu0
        %v2195 = vadd.f32 %v1821, %v2194
        %2196 = vmatprep.mubr.bf16.mxu0 %v1753
        %2197 = vmatmul.mubr.bf16.gmra.mrb[0].mxu0 %v1752
        %v2198 = vpop.f32.mrb[0].mxu0
        %v2199 = vadd.f32 %v1817, %v2198
        %v2200 = vpop.f32.mrb[0].mxu0
        %v2201 = vadd.f32 %v1821, %v2200
        %v2202 = vpop.f32.mrb[0].mxu0
        %v2203 = vadd.f32 %v1817, %v2202
        %v2204 = vpop.f32.mrb[0].mxu0
        %v2205 = vadd.f32 %v1821, %v2204
        %2206 = vmatprep.mubr.bf16.mxu0 %v1755
        %2207 = vmatmul.mubr.bf16.gmra.mrb[0].mxu0 %v1754
        %v2208 = vpop.f32.mrb[0].mxu0
        %v2209 = vadd.f32 %v1817, %v2208
        %v2210 = vpop.f32.mrb[0].mxu0
        %v2211 = vadd.f32 %v1821, %v2210
        %v2212 = vpop.f32.mrb[0].mxu0
        %v2213 = vadd.f32 %v1817, %v2212
        %v2214 = vpop.f32.mrb[0].mxu0
        %v2215 = vadd.f32 %v1821, %v2214
        %2216 = vmatprep.mubr.bf16.mxu0 %v1757
        %2217 = vmatmul.mubr.bf16.gmra.mrb[0].mxu0 %v1756
        %v2218 = vpop.f32.mrb[0].mxu0
        %v2219 = vadd.f32 %v1817, %v2218
        %v2220 = vpop.f32.mrb[0].mxu0
        %v2221 = vadd.f32 %v1821, %v2220
        %v2222 = vpop.f32.mrb[0].mxu0
        %v2223 = vadd.f32 %v1817, %v2222
        %v2224 = vpop.f32.mrb[0].mxu0
        %v2225 = vadd.f32 %v1821, %v2224
        %2226 = vmatprep.mubr.bf16.mxu0 %v1759
        %2227 = vmatmul.mubr.bf16.gmra.mrb[0].mxu0 %v1758
        %v2228 = vpop.f32.mrb[0].mxu0
        %v2229 = vadd.f32 %v1817, %v2228
        %v2230 = vpop.f32.mrb[0].mxu0
        %v2231 = vadd.f32 %v1821, %v2230
        %v2232 = vpop.f32.mrb[0].mxu0
        %v2233 = vadd.f32 %v1817, %v2232
        %v2234 = vpop.f32.mrb[0].mxu0
        %v2235 = vadd.f32 %v1821, %v2234
        %2236 = vmatprep.mubr.bf16.mxu0 %v1761
        %2237 = vmatmul.mubr.bf16.gmra.mrb[0].mxu0 %v1760
        %v2238 = vpop.f32.mrb[0].mxu0
        %v2239 = vadd.f32 %v1817, %v2238
        %v2240 = vpop.f32.mrb[0].mxu0
        %v2241 = vadd.f32 %v1821, %v2240
        %v2242 = vpop.f32.mrb[0].mxu0
        %v2243 = vadd.f32 %v1817, %v2242
        %v2244 = vpop.f32.mrb[0].mxu0
        %v2245 = vadd.f32 %v1821, %v2244
        %2246 = vmatprep.mubr.bf16.mxu0 %v1763
        %2247 = vmatmul.mubr.bf16.gmra.mrb[0].mxu0 %v1762
        %v2248 = vpop.f32.mrb[0].mxu0
        %v2249 = vadd.f32 %v1817, %v2248
        %v2250 = vpop.f32.mrb[0].mxu0
        %v2251 = vadd.f32 %v1821, %v2250
        %v2252 = vpop.f32.mrb[0].mxu0
        %v2253 = vadd.f32 %v1817, %v2252
        %v2254 = vpop.f32.mrb[0].mxu0
        %v2255 = vadd.f32 %v1821, %v2254
        %2256 = vmatprep.mubr.bf16.mxu0 %v1765
        %2257 = vmatmul.mubr.bf16.gmra.mrb[0].mxu0 %v1764
        %v2258 = vpop.f32.mrb[0].mxu0
        %v2259 = vadd.f32 %v1817, %v2258
        %v2260 = vpop.f32.mrb[0].mxu0
        %v2261 = vadd.f32 %v1821, %v2260
        %v2262 = vpop.f32.mrb[0].mxu0
        %v2263 = vadd.f32 %v1817, %v2262
        %v2264 = vpop.f32.mrb[0].mxu0
        %v2265 = vadd.f32 %v1821, %v2264
        %2266 = vmatprep.mubr.bf16.mxu0 %v1767
        %2267 = vmatmul.mubr.bf16.gmra.mrb[0].mxu0 %v1766
        %v2268 = vpop.f32.mrb[0].mxu0
        %v2269 = vadd.f32 %v1817, %v2268
        %v2270 = vpop.f32.mrb[0].mxu0
        %v2271 = vadd.f32 %v1821, %v2270
        %v2272 = vpop.f32.mrb[0].mxu0
        %v2273 = vadd.f32 %v1817, %v2272
        %v2274 = vpop.f32.mrb[0].mxu0
        %v2275 = vadd.f32 %v1821, %v2274
        %2276 = vmatprep.mubr.bf16.mxu0 %v1769
        %2277 = vmatmul.mubr.bf16.gmra.mrb[0].mxu0 %v1768
        %v2278 = vpop.f32.mrb[0].mxu0
        %v2279 = vadd.f32 %v1817, %v2278
        %v2280 = vpop.f32.mrb[0].mxu0
        %v2281 = vadd.f32 %v1821, %v2280
        %v2282 = vpop.f32.mrb[0].mxu0
        %v2283 = vadd.f32 %v1817, %v2282
        %v2284 = vpop.f32.mrb[0].mxu0
        %v2285 = vadd.f32 %v1821, %v2284
        %2286 = vmatprep.mubr.bf16.mxu0 %v1771
        %2287 = vmatmul.mubr.bf16.gmra.mrb[0].mxu0 %v1770
        %v2288 = vpop.f32.mrb[0].mxu0
        %v2289 = vadd.f32 %v1817, %v2288
        %v2290 = vpop.f32.mrb[0].mxu0
        %v2291 = vadd.f32 %v1821, %v2290
        %v2292 = vpop.f32.mrb[0].mxu0
        %v2293 = vadd.f32 %v1817, %v2292
        %v2294 = vpop.f32.mrb[0].mxu0
        %v2295 = vadd.f32 %v1821, %v2294
        %2296 = vmatprep.mubr.bf16.mxu0 %v1773
        %2297 = vmatmul.mubr.bf16.gmra.mrb[0].mxu0 %v1772
        %v2298 = vpop.f32.mrb[0].mxu0
        %v2299 = vadd.f32 %v1817, %v2298
        %v2300 = vpop.f32.mrb[0].mxu0
        %v2301 = vadd.f32 %v1821, %v2300
        %v2302 = vpop.f32.mrb[0].mxu0
        %v2303 = vadd.f32 %v1817, %v2302
        %v2304 = vpop.f32.mrb[0].mxu0
        %v2305 = vadd.f32 %v1821, %v2304
        %2306 = vmatprep.mubr.bf16.mxu0 %v1775
        %2307 = vmatmul.mubr.bf16.gmra.mrb[0].mxu0 %v1774
        %v2308 = vpop.f32.mrb[0].mxu0
        %v2309 = vadd.f32 %v1817, %v2308
        %v2310 = vpop.f32.mrb[0].mxu0
        %v2311 = vadd.f32 %v1821, %v2310
        %v2312 = vpop.f32.mrb[0].mxu0
        %v2313 = vadd.f32 %v1817, %v2312
        %v2314 = vpop.f32.mrb[0].mxu0
        %v2315 = vadd.f32 %v1821, %v2314
        %2316 = vmatprep.mubr.bf16.mxu0 %v1777
        %2317 = vmatmul.mubr.bf16.gmra.mrb[0].mxu0 %v1776
        %v2318 = vpop.f32.mrb[0].mxu0
        %v2319 = vadd.f32 %v1817, %v2318
        %v2320 = vpop.f32.mrb[0].mxu0
        %v2321 = vadd.f32 %v1821, %v2320
        %v2322 = vpop.f32.mrb[0].mxu0
        %v2323 = vadd.f32 %v1817, %v2322
        %v2324 = vpop.f32.mrb[0].mxu0
        %v2325 = vadd.f32 %v1821, %v2324
        %2326 = vmatprep.mubr.bf16.mxu0 %v1779
        %2327 = vmatmul.mubr.bf16.gmra.mrb[0].mxu0 %v1778
        %v2328 = vpop.f32.mrb[0].mxu0
        %v2329 = vadd.f32 %v1817, %v2328
        %v2330 = vpop.f32.mrb[0].mxu0
        %v2331 = vadd.f32 %v1821, %v2330
        %v2332 = vpop.f32.mrb[0].mxu0
        %v2333 = vadd.f32 %v1817, %v2332
        %v2334 = vpop.f32.mrb[0].mxu0
        %v2335 = vadd.f32 %v1821, %v2334
        %2336 = vdwg.mxu0
        %v2337 = vmul.f32 %v2021, 0.5
        %v2338 = vmul.f32 %v2025, 0.5
        %v2339 = vmul.f32 %v2031, 0.5
        %v2340 = vmul.f32 %v2035, 0.5
        %v2341 = vmul.f32 %v2041, 0.5
        %v2342 = vmul.f32 %v2045, 0.5
        %v2343 = vmul.f32 %v2051, 0.5
        %v2344 = vmul.f32 %v2055, 0.5
        %v2345 = vmul.f32 %v2061, 0.5
        %v2346 = vmul.f32 %v2065, 0.5
        %v2347 = vmul.f32 %v2071, 0.5
        %v2348 = vmul.f32 %v2075, 0.5
        %v2349 = vmul.f32 %v2081, 0.5
        %v2350 = vmul.f32 %v2085, 0.5
        %v2351 = vmul.f32 %v2091, 0.5
        %v2352 = vmul.f32 %v2095, 0.5
        %v2353 = vmul.f32 %v2101, 0.5
        %v2354 = vmul.f32 %v2105, 0.5
        %v2355 = vmul.f32 %v2111, 0.5
        %v2356 = vmul.f32 %v2115, 0.5
        %v2357 = vmul.f32 %v2121, 0.5
        %v2358 = vmul.f32 %v2125, 0.5
        %v2359 = vmul.f32 %v2131, 0.5
        %v2360 = vmul.f32 %v2135, 0.5
        %v2361 = vmul.f32 %v2141, 0.5
        %v2362 = vmul.f32 %v2145, 0.5
        %v2363 = vmul.f32 %v2151, 0.5
        %v2364 = vmul.f32 %v2155, 0.5
        %v2365 = vmul.f32 %v2161, 0.5
        %v2366 = vmul.f32 %v2165, 0.5
        %v2367 = vmul.f32 %v2171, 0.5
        %v2368 = vmul.f32 %v2175, 0.5
        %v2369 = vmul.f32 %v2181, 0.5
        %v2370 = vmul.f32 %v2185, 0.5
        %v2371 = vmul.f32 %v2191, 0.5
        %v2372 = vmul.f32 %v2195, 0.5
        %v2373 = vmul.f32 %v2201, 0.5
        %v2374 = vmul.f32 %v2205, 0.5
        %v2375 = vmul.f32 %v2211, 0.5
        %v2376 = vmul.f32 %v2215, 0.5
        %v2377 = vmul.f32 %v2221, 0.5
        %v2378 = vmul.f32 %v2225, 0.5
        %v2379 = vmul.f32 %v2231, 0.5
        %v2380 = vmul.f32 %v2235, 0.5
        %v2381 = vmul.f32 %v2241, 0.5
        %v2382 = vmul.f32 %v2245, 0.5
        %v2383 = vmul.f32 %v2251, 0.5
        %v2384 = vmul.f32 %v2255, 0.5
        %v2385 = vmul.f32 %v2261, 0.5
        %v2386 = vmul.f32 %v2265, 0.5
        %v2387 = vmul.f32 %v2271, 0.5
        %v2388 = vmul.f32 %v2275, 0.5
        %v2389 = vmul.f32 %v2281, 0.5
        %v2390 = vmul.f32 %v2285, 0.5
        %v2391 = vmul.f32 %v2291, 0.5
        %v2392 = vmul.f32 %v2295, 0.5
        %v2393 = vmul.f32 %v2301, 0.5
        %v2394 = vmul.f32 %v2305, 0.5
        %v2395 = vmul.f32 %v2311, 0.5
        %v2396 = vmul.f32 %v2315, 0.5
        %v2397 = vmul.f32 %v2321, 0.5
        %v2398 = vmul.f32 %v2325, 0.5
        %v2399 = vmul.f32 %v2331, 0.5
        %v2400 = vmul.f32 %v2335, 0.5
        %v2401 = vmul.f32 %v2337, 1.442695
        %v2402 = vpow.pop %v2401
        %v2403 = vmul.f32 %v2338, 1.442695
        %v2404 = vpow.pop %v2403
        %v2405 = vmul.f32 %v2339, 1.442695
        %v2406 = vpow.pop %v2405
        %v2407 = vmul.f32 %v2340, 1.442695
        %v2408 = vpow.pop %v2407
        %v2409 = vmul.f32 %v2341, 1.442695
        %v2410 = vpow.pop %v2409
        %v2411 = vmul.f32 %v2342, 1.442695
        %v2412 = vpow.pop %v2411
        %v2413 = vmul.f32 %v2343, 1.442695
        %v2414 = vpow.pop %v2413
        %v2415 = vmul.f32 %v2344, 1.442695
        %v2416 = vpow.pop %v2415
        %v2417 = vmul.f32 %v2345, 1.442695
        %v2418 = vpow.pop %v2417
        %v2419 = vmul.f32 %v2346, 1.442695
        %v2420 = vpow.pop %v2419
        %v2421 = vmul.f32 %v2347, 1.442695
        %v2422 = vpow.pop %v2421
        %v2423 = vmul.f32 %v2348, 1.442695
        %v2424 = vpow.pop %v2423
        %v2425 = vmul.f32 %v2349, 1.442695
        %v2426 = vpow.pop %v2425
        %v2427 = vmul.f32 %v2350, 1.442695
        %v2428 = vpow.pop %v2427
        %v2429 = vmul.f32 %v2351, 1.442695
        %v2430 = vpow.pop %v2429
        %v2431 = vmul.f32 %v2352, 1.442695
        %v2432 = vpow.pop %v2431
        %v2433 = vmul.f32 %v2353, 1.442695
        %v2434 = vpow.pop %v2433
        %v2435 = vmul.f32 %v2354, 1.442695
        %v2436 = vpow.pop %v2435
        %v2437 = vmul.f32 %v2355, 1.442695
        %v2438 = vpow.pop %v2437
        %v2439 = vmul.f32 %v2356, 1.442695
        %v2440 = vpow.pop %v2439
        %v2441 = vmul.f32 %v2357, 1.442695
        %v2442 = vpow.pop %v2441
        %v2443 = vmul.f32 %v2358, 1.442695
        %v2444 = vpow.pop %v2443
        %v2445 = vmul.f32 %v2359, 1.442695
        %v2446 = vpow.pop %v2445
        %v2447 = vmul.f32 %v2360, 1.442695
        %v2448 = vpow.pop %v2447
        %v2449 = vmul.f32 %v2361, 1.442695
        %v2450 = vpow.pop %v2449
        %v2451 = vmul.f32 %v2362, 1.442695
        %v2452 = vpow.pop %v2451
        %v2453 = vmul.f32 %v2363, 1.442695
        %v2454 = vpow.pop %v2453
        %v2455 = vmul.f32 %v2364, 1.442695
        %v2456 = vpow.pop %v2455
        %v2457 = vmul.f32 %v2365, 1.442695
        %v2458 = vpow.pop %v2457
        %v2459 = vmul.f32 %v2366, 1.442695
        %v2460 = vpow.pop %v2459
        %v2461 = vmul.f32 %v2367, 1.442695
        %v2462 = vpow.pop %v2461
        %v2463 = vmul.f32 %v2368, 1.442695
        %v2464 = vpow.pop %v2463
        %v2465 = vmul.f32 %v2369, 1.442695
        %v2466 = vpow.pop %v2465
        %v2467 = vmul.f32 %v2370, 1.442695
        %v2468 = vpow.pop %v2467
        %v2469 = vmul.f32 %v2371, 1.442695
        %v2470 = vpow.pop %v2469
        %v2471 = vmul.f32 %v2372, 1.442695
        %v2472 = vpow.pop %v2471
        %v2473 = vmul.f32 %v2373, 1.442695
        %v2474 = vpow.pop %v2473
        %v2475 = vmul.f32 %v2374, 1.442695
        %v2476 = vpow.pop %v2475
        %v2477 = vmul.f32 %v2375, 1.442695
        %v2478 = vpow.pop %v2477
        %v2479 = vmul.f32 %v2376, 1.442695
        %v2480 = vpow.pop %v2479
        %v2481 = vmul.f32 %v2377, 1.442695
        %v2482 = vpow.pop %v2481
        %v2483 = vmul.f32 %v2378, 1.442695
        %v2484 = vpow.pop %v2483
        %v2485 = vmul.f32 %v2379, 1.442695
        %v2486 = vpow.pop %v2485
        %v2487 = vmul.f32 %v2380, 1.442695
        %v2488 = vpow.pop %v2487
        %v2489 = vmul.f32 %v2381, 1.442695
        %v2490 = vpow.pop %v2489
        %v2491 = vmul.f32 %v2382, 1.442695
        %v2492 = vpow.pop %v2491
        %v2493 = vmul.f32 %v2383, 1.442695
        %v2494 = vpow.pop %v2493
        %v2495 = vmul.f32 %v2384, 1.442695
        %v2496 = vpow.pop %v2495
        %v2497 = vmul.f32 %v2385, 1.442695
        %v2498 = vpow.pop %v2497
        %v2499 = vmul.f32 %v2386, 1.442695
        %v2500 = vpow.pop %v2499
        %v2501 = vmul.f32 %v2387, 1.442695
        %v2502 = vpow.pop %v2501
        %v2503 = vmul.f32 %v2388, 1.442695
        %v2504 = vpow.pop %v2503
        %v2505 = vmul.f32 %v2389, 1.442695
        %v2506 = vpow.pop %v2505
        %v2507 = vmul.f32 %v2390, 1.442695
        %v2508 = vpow.pop %v2507
        %v2509 = vmul.f32 %v2391, 1.442695
        %v2510 = vpow.pop %v2509
        %v2511 = vmul.f32 %v2392, 1.442695
        %v2512 = vpow.pop %v2511
        %v2513 = vmul.f32 %v2393, 1.442695
        %v2514 = vpow.pop %v2513
        %v2515 = vmul.f32 %v2394, 1.442695
        %v2516 = vpow.pop %v2515
        %v2517 = vmul.f32 %v2395, 1.442695
        %v2518 = vpow.pop %v2517
        %v2519 = vmul.f32 %v2396, 1.442695
        %v2520 = vpow.pop %v2519
        %v2521 = vmul.f32 %v2397, 1.442695
        %v2522 = vpow.pop %v2521
        %v2523 = vmul.f32 %v2398, 1.442695
        %v2524 = vpow.pop %v2523
        %v2525 = vmul.f32 %v2399, 1.442695
        %v2526 = vpow.pop %v2525
        %v2527 = vmul.f32 %v2400, 1.442695
        %v2528 = vpow.pop %v2527
        %v2529 = vld [vmem:[%s447] sm:$0xff]
        %v2530 = vld [vmem:[%s447 + $0x8] sm:$0xff]
        %v2531 = vld [vmem:[%s447 + $0x10] sm:$0xff]
        %v2532 = vld [vmem:[%s447 + $0x18] sm:$0xff]
        %v2533 = vld [vmem:[%s447 + $0x20] sm:$0xff]
        %v2534 = vld [vmem:[%s447 + $0x28] sm:$0xff]
        %v2535 = vld [vmem:[%s447 + $0x30] sm:$0xff]
        %v2536 = vld [vmem:[%s447 + $0x38] sm:$0xff]
        %v2537 = vld [vmem:[%s447 + $0x40] sm:$0xff]
        %v2538 = vld [vmem:[%s447 + $0x48] sm:$0xff]
        %v2539 = vld [vmem:[%s447 + $0x50] sm:$0xff]
        %v2540 = vld [vmem:[%s447 + $0x58] sm:$0xff]
        %v2541 = vld [vmem:[%s447 + $0x60] sm:$0xff]
        %v2542 = vld [vmem:[%s447 + $0x68] sm:$0xff]
        %v2543 = vld [vmem:[%s447 + $0x70] sm:$0xff]
        %v2544 = vld [vmem:[%s447 + $0x78] sm:$0xff]
        %v2545 = vld [vmem:[%s447 + $0x80] sm:$0xff]
        %v2546 = vld [vmem:[%s447 + $0x88] sm:$0xff]
        %v2547 = vld [vmem:[%s447 + $0x90] sm:$0xff]
        %v2548 = vld [vmem:[%s447 + $0x98] sm:$0xff]
        %v2549 = vld [vmem:[%s447 + $0xa0] sm:$0xff]
        %v2550 = vld [vmem:[%s447 + $0xa8] sm:$0xff]
        %v2551 = vld [vmem:[%s447 + $0xb0] sm:$0xff]
        %v2552 = vld [vmem:[%s447 + $0xb8] sm:$0xff]
        %v2553 = vld [vmem:[%s447 + $0xc0] sm:$0xff]
        %v2554 = vld [vmem:[%s447 + $0xc8] sm:$0xff]
        %v2555 = vld [vmem:[%s447 + $0xd0] sm:$0xff]
        %v2556 = vld [vmem:[%s447 + $0xd8] sm:$0xff]
        %v2557 = vld [vmem:[%s447 + $0xe0] sm:$0xff]
        %v2558 = vld [vmem:[%s447 + $0xe8] sm:$0xff]
        %v2559 = vld [vmem:[%s447 + $0xf0] sm:$0xff]
        %v2560 = vld [vmem:[%s447 + $0xf8] sm:$0xff]
        %v2561 = vld [vmem:[%s447 + $0x100] sm:$0xff]
        %v2562 = vld [vmem:[%s447 + $0x108] sm:$0xff]
        %v2563 = vld [vmem:[%s447 + $0x110] sm:$0xff]
        %v2564 = vld [vmem:[%s447 + $0x118] sm:$0xff]
        %v2565 = vld [vmem:[%s447 + $0x120] sm:$0xff]
        %v2566 = vld [vmem:[%s447 + $0x128] sm:$0xff]
        %v2567 = vld [vmem:[%s447 + $0x130] sm:$0xff]
        %v2568 = vld [vmem:[%s447 + $0x138] sm:$0xff]
        %v2569 = vld [vmem:[%s447 + $0x140] sm:$0xff]
        %v2570 = vld [vmem:[%s447 + $0x148] sm:$0xff]
        %v2571 = vld [vmem:[%s447 + $0x150] sm:$0xff]
        %v2572 = vld [vmem:[%s447 + $0x158] sm:$0xff]
        %v2573 = vld [vmem:[%s447 + $0x160] sm:$0xff]
        %v2574 = vld [vmem:[%s447 + $0x168] sm:$0xff]
        %v2575 = vld [vmem:[%s447 + $0x170] sm:$0xff]
        %v2576 = vld [vmem:[%s447 + $0x178] sm:$0xff]
        %v2577 = vld [vmem:[%s447 + $0x180] sm:$0xff]
        %v2578 = vld [vmem:[%s447 + $0x188] sm:$0xff]
        %v2579 = vld [vmem:[%s447 + $0x190] sm:$0xff]
        %v2580 = vld [vmem:[%s447 + $0x198] sm:$0xff]
        %v2581 = vld [vmem:[%s447 + $0x1a0] sm:$0xff]
        %v2582 = vld [vmem:[%s447 + $0x1a8] sm:$0xff]
        %v2583 = vld [vmem:[%s447 + $0x1b0] sm:$0xff]
        %v2584 = vld [vmem:[%s447 + $0x1b8] sm:$0xff]
        %v2585 = vld [vmem:[%s447 + $0x1c0] sm:$0xff]
        %v2586 = vld [vmem:[%s447 + $0x1c8] sm:$0xff]
        %v2587 = vld [vmem:[%s447 + $0x1d0] sm:$0xff]
        %v2588 = vld [vmem:[%s447 + $0x1d8] sm:$0xff]
        %v2589 = vld [vmem:[%s447 + $0x1e0] sm:$0xff]
        %v2590 = vld [vmem:[%s447 + $0x1e8] sm:$0xff]
        %v2591 = vld [vmem:[%s447 + $0x1f0] sm:$0xff]
        %v2592 = vld [vmem:[%s447 + $0x1f8] sm:$0xff]
        %v2593 = vmul.f32 %v2402, %v2529
        %v2594 = vmul.f32 %v2404, %v2530
        %v2595 = vmul.f32 %v2406, %v2531
        %v2596 = vmul.f32 %v2408, %v2532
        %v2597 = vmul.f32 %v2410, %v2533
        %v2598 = vmul.f32 %v2412, %v2534
        %v2599 = vmul.f32 %v2414, %v2535
        %v2600 = vmul.f32 %v2416, %v2536
        %v2601 = vmul.f32 %v2418, %v2537
        %v2602 = vmul.f32 %v2420, %v2538
        %v2603 = vmul.f32 %v2422, %v2539
        %v2604 = vmul.f32 %v2424, %v2540
        %v2605 = vmul.f32 %v2426, %v2541
        %v2606 = vmul.f32 %v2428, %v2542
        %v2607 = vmul.f32 %v2430, %v2543
        %v2608 = vmul.f32 %v2432, %v2544
        %v2609 = vmul.f32 %v2434, %v2545
        %v2610 = vmul.f32 %v2436, %v2546
        %v2611 = vmul.f32 %v2438, %v2547
        %v2612 = vmul.f32 %v2440, %v2548
        %v2613 = vmul.f32 %v2442, %v2549
        %v2614 = vmul.f32 %v2444, %v2550
        %v2615 = vmul.f32 %v2446, %v2551
        %v2616 = vmul.f32 %v2448, %v2552
        %v2617 = vmul.f32 %v2450, %v2553
        %v2618 = vmul.f32 %v2452, %v2554
        %v2619 = vmul.f32 %v2454, %v2555
        %v2620 = vmul.f32 %v2456, %v2556
        %v2621 = vmul.f32 %v2458, %v2557
        %v2622 = vmul.f32 %v2460, %v2558
        %v2623 = vmul.f32 %v2462, %v2559
        %v2624 = vmul.f32 %v2464, %v2560
        %v2625 = vmul.f32 %v2466, %v2561
        %v2626 = vmul.f32 %v2468, %v2562
        %v2627 = vmul.f32 %v2470, %v2563
        %v2628 = vmul.f32 %v2472, %v2564
        %v2629 = vmul.f32 %v2474, %v2565
        %v2630 = vmul.f32 %v2476, %v2566
        %v2631 = vmul.f32 %v2478, %v2567
        %v2632 = vmul.f32 %v2480, %v2568
        %v2633 = vmul.f32 %v2482, %v2569
        %v2634 = vmul.f32 %v2484, %v2570
        %v2635 = vmul.f32 %v2486, %v2571
        %v2636 = vmul.f32 %v2488, %v2572
        %v2637 = vmul.f32 %v2490, %v2573
        %v2638 = vmul.f32 %v2492, %v2574
        %v2639 = vmul.f32 %v2494, %v2575
        %v2640 = vmul.f32 %v2496, %v2576
        %v2641 = vmul.f32 %v2498, %v2577
        %v2642 = vmul.f32 %v2500, %v2578
        %v2643 = vmul.f32 %v2502, %v2579
        %v2644 = vmul.f32 %v2504, %v2580
        %v2645 = vmul.f32 %v2506, %v2581
        %v2646 = vmul.f32 %v2508, %v2582
        %v2647 = vmul.f32 %v2510, %v2583
        %v2648 = vmul.f32 %v2512, %v2584
        %v2649 = vmul.f32 %v2514, %v2585
        %v2650 = vmul.f32 %v2516, %v2586
        %v2651 = vmul.f32 %v2518, %v2587
        %v2652 = vmul.f32 %v2520, %v2588
        %v2653 = vmul.f32 %v2522, %v2589
        %v2654 = vmul.f32 %v2524, %v2590
        %v2655 = vmul.f32 %v2526, %v2591
        %v2656 = vmul.f32 %v2528, %v2592
        %v2657 = vadd.f32 %v2019, %v2593
        %v2658 = vadd.f32 %v2023, %v2594
        %v2659 = vadd.f32 %v2029, %v2595
        %v2660 = vadd.f32 %v2033, %v2596
        %v2661 = vadd.f32 %v2039, %v2597
        %v2662 = vadd.f32 %v2043, %v2598
        %v2663 = vadd.f32 %v2049, %v2599
        %v2664 = vadd.f32 %v2053, %v2600
        %v2665 = vadd.f32 %v2059, %v2601
        %v2666 = vadd.f32 %v2063, %v2602
        %v2667 = vadd.f32 %v2069, %v2603
        %v2668 = vadd.f32 %v2073, %v2604
        %v2669 = vadd.f32 %v2079, %v2605
        %v2670 = vadd.f32 %v2083, %v2606
        %v2671 = vadd.f32 %v2089, %v2607
        %v2672 = vadd.f32 %v2093, %v2608
        %v2673 = vadd.f32 %v2099, %v2609
        %v2674 = vadd.f32 %v2103, %v2610
        %v2675 = vadd.f32 %v2109, %v2611
        %v2676 = vadd.f32 %v2113, %v2612
        %v2677 = vadd.f32 %v2119, %v2613
        %v2678 = vadd.f32 %v2123, %v2614
        %v2679 = vadd.f32 %v2129, %v2615
        %v2680 = vadd.f32 %v2133, %v2616
        %v2681 = vadd.f32 %v2139, %v2617
        %v2682 = vadd.f32 %v2143, %v2618
        %v2683 = vadd.f32 %v2149, %v2619
        %v2684 = vadd.f32 %v2153, %v2620
        %v2685 = vadd.f32 %v2159, %v2621
        %v2686 = vadd.f32 %v2163, %v2622
        %v2687 = vadd.f32 %v2169, %v2623
        %v2688 = vadd.f32 %v2173, %v2624
        %v2689 = vadd.f32 %v2179, %v2625
        %v2690 = vadd.f32 %v2183, %v2626
        %v2691 = vadd.f32 %v2189, %v2627
        %v2692 = vadd.f32 %v2193, %v2628
        %v2693 = vadd.f32 %v2199, %v2629
        %v2694 = vadd.f32 %v2203, %v2630
        %v2695 = vadd.f32 %v2209, %v2631
        %v2696 = vadd.f32 %v2213, %v2632
        %v2697 = vadd.f32 %v2219, %v2633
        %v2698 = vadd.f32 %v2223, %v2634
        %v2699 = vadd.f32 %v2229, %v2635
        %v2700 = vadd.f32 %v2233, %v2636
        %v2701 = vadd.f32 %v2239, %v2637
        %v2702 = vadd.f32 %v2243, %v2638
        %v2703 = vadd.f32 %v2249, %v2639
        %v2704 = vadd.f32 %v2253, %v2640
        %v2705 = vadd.f32 %v2259, %v2641
        %v2706 = vadd.f32 %v2263, %v2642
        %v2707 = vadd.f32 %v2269, %v2643
        %v2708 = vadd.f32 %v2273, %v2644
        %v2709 = vadd.f32 %v2279, %v2645
        %v2710 = vadd.f32 %v2283, %v2646
        %v2711 = vadd.f32 %v2289, %v2647
        %v2712 = vadd.f32 %v2293, %v2648
        %v2713 = vadd.f32 %v2299, %v2649
        %v2714 = vadd.f32 %v2303, %v2650
        %v2715 = vadd.f32 %v2309, %v2651
        %v2716 = vadd.f32 %v2313, %v2652
        %v2717 = vadd.f32 %v2319, %v2653
        %v2718 = vadd.f32 %v2323, %v2654
        %v2719 = vadd.f32 %v2329, %v2655
        %v2720 = vadd.f32 %v2333, %v2656
        %v2721 = vpack.c.bf16 %v2658, %v2657
        %v2722 = vpack.c.bf16 %v2660, %v2659
        %v2723 = vpack.c.bf16 %v2662, %v2661
        %v2724 = vpack.c.bf16 %v2664, %v2663
        %v2725 = vpack.c.bf16 %v2666, %v2665
        %v2726 = vpack.c.bf16 %v2668, %v2667
        %v2727 = vpack.c.bf16 %v2670, %v2669
        %v2728 = vpack.c.bf16 %v2672, %v2671
        %v2729 = vpack.c.bf16 %v2674, %v2673
        %v2730 = vpack.c.bf16 %v2676, %v2675
        %v2731 = vpack.c.bf16 %v2678, %v2677
        %v2732 = vpack.c.bf16 %v2680, %v2679
        %v2733 = vpack.c.bf16 %v2682, %v2681
        %v2734 = vpack.c.bf16 %v2684, %v2683
        %v2735 = vpack.c.bf16 %v2686, %v2685
        %v2736 = vpack.c.bf16 %v2688, %v2687
        %v2737 = vpack.c.bf16 %v2690, %v2689
        %v2738 = vpack.c.bf16 %v2692, %v2691
        %v2739 = vpack.c.bf16 %v2694, %v2693
        %v2740 = vpack.c.bf16 %v2696, %v2695
        %v2741 = vpack.c.bf16 %v2698, %v2697
        %v2742 = vpack.c.bf16 %v2700, %v2699
        %v2743 = vpack.c.bf16 %v2702, %v2701
        %v2744 = vpack.c.bf16 %v2704, %v2703
        %v2745 = vpack.c.bf16 %v2706, %v2705
        %v2746 = vpack.c.bf16 %v2708, %v2707
        %v2747 = vpack.c.bf16 %v2710, %v2709
        %v2748 = vpack.c.bf16 %v2712, %v2711
        %v2749 = vpack.c.bf16 %v2714, %v2713
        %v2750 = vpack.c.bf16 %v2716, %v2715
        %v2751 = vpack.c.bf16 %v2718, %v2717
        %v2752 = vpack.c.bf16 %v2720, %v2719
        %v2753 = vld [vmem:[#allocation10] sm:$0xff]
        %v2754 = vld [vmem:[#allocation10 + $0x8] sm:$0xff]
        %v2755 = vld [vmem:[#allocation10 + $0x10] sm:$0xff]
        %v2756 = vld [vmem:[#allocation10 + $0x18] sm:$0xff]
        %v2757 = vld [vmem:[#allocation10 + $0x20] sm:$0xff]
        %v2758 = vld [vmem:[#allocation10 + $0x28] sm:$0xff]
        %v2759 = vld [vmem:[#allocation10 + $0x30] sm:$0xff]
        %v2760 = vld [vmem:[#allocation10 + $0x38] sm:$0xff]
        %v2761 = vld [vmem:[#allocation10 + $0x40] sm:$0xff]
        %v2762 = vld [vmem:[#allocation10 + $0x48] sm:$0xff]
        %v2763 = vld [vmem:[#allocation10 + $0x50] sm:$0xff]
        %v2764 = vld [vmem:[#allocation10 + $0x58] sm:$0xff]
        %v2765 = vld [vmem:[#allocation10 + $0x60] sm:$0xff]
        %v2766 = vld [vmem:[#allocation10 + $0x68] sm:$0xff]
        %v2767 = vld [vmem:[#allocation10 + $0x70] sm:$0xff]
        %v2768 = vld [vmem:[#allocation10 + $0x78] sm:$0xff]
        %v2769 = vld [vmem:[%s7] sm:$0x3]
        %v2771 = vlaneseq
        %v2772 = vshrl.u32 %v2771, 7
        %v2773 = vsub.s32 0, %v2772
        %v2774 = vrot.slane %v2769, %v2773
        %v2775 = vlaneseq
        %v2776 = vshrl.u32 %v2775, 7
        %v2777 = vsub.s32 1, %v2776
        %v2778 = vrot.slane %v2769, %v2777
        %v2797 = vunpack.c.l.b16 %v2753
        %v2798 = vunpack.c.h.b16 %v2753
        %v2799 = vunpack.c.l.b16 %v2754
        %v2800 = vunpack.c.h.b16 %v2754
        %v2801 = vunpack.c.l.b16 %v2755
        %v2802 = vunpack.c.h.b16 %v2755
        %v2803 = vunpack.c.l.b16 %v2756
        %v2804 = vunpack.c.h.b16 %v2756
        %v2805 = vunpack.c.l.b16 %v2757
        %v2806 = vunpack.c.h.b16 %v2757
        %v2807 = vunpack.c.l.b16 %v2758
        %v2808 = vunpack.c.h.b16 %v2758
        %v2809 = vunpack.c.l.b16 %v2759
        %v2810 = vunpack.c.h.b16 %v2759
        %v2811 = vunpack.c.l.b16 %v2760
        %v2812 = vunpack.c.h.b16 %v2760
        %v2813 = vunpack.c.l.b16 %v2761
        %v2814 = vunpack.c.h.b16 %v2761
        %v2815 = vunpack.c.l.b16 %v2762
        %v2816 = vunpack.c.h.b16 %v2762
        %v2817 = vunpack.c.l.b16 %v2763
        %v2818 = vunpack.c.h.b16 %v2763
        %v2819 = vunpack.c.l.b16 %v2764
        %v2820 = vunpack.c.h.b16 %v2764
        %v2821 = vunpack.c.l.b16 %v2765
        %v2822 = vunpack.c.h.b16 %v2765
        %v2823 = vunpack.c.l.b16 %v2766
        %v2824 = vunpack.c.h.b16 %v2766
        %v2825 = vunpack.c.l.b16 %v2767
        %v2826 = vunpack.c.h.b16 %v2767
        %v2827 = vunpack.c.l.b16 %v2768
        %v2828 = vunpack.c.h.b16 %v2768
        %v2829 = vpack.c.b16 %v2799, %v2797
        %v2830 = vpack.c.b16 %v2800, %v2798
        %v2831 = vpack.c.b16 %v2803, %v2801
        %v2832 = vpack.c.b16 %v2804, %v2802
        %v2833 = vpack.c.b16 %v2807, %v2805
        %v2834 = vpack.c.b16 %v2808, %v2806
        %v2835 = vpack.c.b16 %v2811, %v2809
        %v2836 = vpack.c.b16 %v2812, %v2810
        %v2837 = vpack.c.b16 %v2815, %v2813
        %v2838 = vpack.c.b16 %v2816, %v2814
        %v2839 = vpack.c.b16 %v2819, %v2817
        %v2840 = vpack.c.b16 %v2820, %v2818
        %v2841 = vpack.c.b16 %v2823, %v2821
        %v2842 = vpack.c.b16 %v2824, %v2822
        %v2843 = vpack.c.b16 %v2827, %v2825
        %v2844 = vpack.c.b16 %v2828, %v2826
        %2861 = vmatprep.subr.bf16.mxu0 %v2830
        %2862 = vmatpush1.bf16.msra.mxu0 %v2829
        %2863 = vmatprep.subr.bf16.mxu0 %v2832
        %2864 = vmatpush1.bf16.msra.mxu0 %v2831
        %2865 = vmatprep.subr.bf16.mxu0 %v2834
        %2866 = vmatpush1.bf16.msra.mxu0 %v2833
        %2867 = vmatprep.subr.bf16.mxu0 %v2836
        %2868 = vmatpush1.bf16.msra.mxu0 %v2835
        %2869 = vmatprep.subr.bf16.mxu0 %v2838
        %2870 = vmatpush1.bf16.msra.mxu0 %v2837
        %2871 = vmatprep.subr.bf16.mxu0 %v2840
        %2872 = vmatpush1.bf16.msra.mxu0 %v2839
        %2873 = vmatprep.subr.bf16.mxu0 %v2842
        %2874 = vmatpush1.bf16.msra.mxu0 %v2841
        %2875 = vmatprep.subr.bf16.mxu0 %v2844
        %2876 = vmatpush1.bf16.msra.mxu0 %v2843
        %2877 = vmatprep.subr.bf16.mxu0 0
        %2878 = vmatpush1.bf16.msra.mxu0 0
        %2879 = vmatprep.subr.bf16.mxu0 0
        %2880 = vmatpush1.bf16.msra.mxu0 0
        %2881 = vmatprep.subr.bf16.mxu0 0
        %2882 = vmatpush1.bf16.msra.mxu0 0
        %2883 = vmatprep.subr.bf16.mxu0 0
        %2884 = vmatpush1.bf16.msra.mxu0 0
        %2885 = vmatprep.subr.bf16.mxu0 0
        %2886 = vmatpush1.bf16.msra.mxu0 0
        %2887 = vmatprep.subr.bf16.mxu0 0
        %2888 = vmatpush1.bf16.msra.mxu0 0
        %2889 = vmatprep.subr.bf16.mxu0 0
        %2890 = vmatpush1.bf16.msra.mxu0 0
        %2891 = vmatprep.subr.bf16.mxu0 0
        %2892 = vmatpush1.bf16.msra.mxu0 0
        %2893 = vmatprep.mubr.bf16.mxu0 0
        %2894 = vmatmul.mubr.bf16.gmra.mrb[0].mxu0 %v2721
        %v2895 = vpop.f32.mrb[0].mxu0
        %v2896 = vadd.f32 %v2774, %v2895
        %v2897 = vpop.f32.mrb[0].mxu0
        %v2898 = vadd.f32 %v2778, %v2897
        %v2899 = vpop.f32.mrb[0].mxu0
        %v2900 = vadd.f32 %v2774, %v2899
        %v2901 = vpop.f32.mrb[0].mxu0
        %v2902 = vadd.f32 %v2778, %v2901
        %2903 = vmatprep.mubr.bf16.mxu0 0
        %2904 = vmatmul.mubr.bf16.gmra.mrb[0].mxu0 %v2722
        %v2905 = vpop.f32.mrb[0].mxu0
        %v2906 = vadd.f32 %v2774, %v2905
        %v2907 = vpop.f32.mrb[0].mxu0
        %v2908 = vadd.f32 %v2778, %v2907
        %v2909 = vpop.f32.mrb[0].mxu0
        %v2910 = vadd.f32 %v2774, %v2909
        %v2911 = vpop.f32.mrb[0].mxu0
        %v2912 = vadd.f32 %v2778, %v2911
        %2913 = vmatprep.mubr.bf16.mxu0 0
        %2914 = vmatmul.mubr.bf16.gmra.mrb[0].mxu0 %v2723
        %v2915 = vpop.f32.mrb[0].mxu0
        %v2916 = vadd.f32 %v2774, %v2915
        %v2917 = vpop.f32.mrb[0].mxu0
        %v2918 = vadd.f32 %v2778, %v2917
        %v2919 = vpop.f32.mrb[0].mxu0
        %v2920 = vadd.f32 %v2774, %v2919
        %v2921 = vpop.f32.mrb[0].mxu0
        %v2922 = vadd.f32 %v2778, %v2921
        %2923 = vmatprep.mubr.bf16.mxu0 0
        %2924 = vmatmul.mubr.bf16.gmra.mrb[0].mxu0 %v2724
        %v2925 = vpop.f32.mrb[0].mxu0
        %v2926 = vadd.f32 %v2774, %v2925
        %v2927 = vpop.f32.mrb[0].mxu0
        %v2928 = vadd.f32 %v2778, %v2927
        %v2929 = vpop.f32.mrb[0].mxu0
        %v2930 = vadd.f32 %v2774, %v2929
        %v2931 = vpop.f32.mrb[0].mxu0
        %v2932 = vadd.f32 %v2778, %v2931
        %2933 = vmatprep.mubr.bf16.mxu0 0
        %2934 = vmatmul.mubr.bf16.gmra.mrb[0].mxu0 %v2725
        %v2935 = vpop.f32.mrb[0].mxu0
        %v2936 = vadd.f32 %v2774, %v2935
        %v2937 = vpop.f32.mrb[0].mxu0
        %v2938 = vadd.f32 %v2778, %v2937
        %v2939 = vpop.f32.mrb[0].mxu0
        %v2940 = vadd.f32 %v2774, %v2939
        %v2941 = vpop.f32.mrb[0].mxu0
        %v2942 = vadd.f32 %v2778, %v2941
        %2943 = vmatprep.mubr.bf16.mxu0 0
        %2944 = vmatmul.mubr.bf16.gmra.mrb[0].mxu0 %v2726
        %v2945 = vpop.f32.mrb[0].mxu0
        %v2946 = vadd.f32 %v2774, %v2945
        %v2947 = vpop.f32.mrb[0].mxu0
        %v2948 = vadd.f32 %v2778, %v2947
        %v2949 = vpop.f32.mrb[0].mxu0
        %v2950 = vadd.f32 %v2774, %v2949
        %v2951 = vpop.f32.mrb[0].mxu0
        %v2952 = vadd.f32 %v2778, %v2951
        %2953 = vmatprep.mubr.bf16.mxu0 0
        %2954 = vmatmul.mubr.bf16.gmra.mrb[0].mxu0 %v2727
        %v2955 = vpop.f32.mrb[0].mxu0
        %v2956 = vadd.f32 %v2774, %v2955
        %v2957 = vpop.f32.mrb[0].mxu0
        %v2958 = vadd.f32 %v2778, %v2957
        %v2959 = vpop.f32.mrb[0].mxu0
        %v2960 = vadd.f32 %v2774, %v2959
        %v2961 = vpop.f32.mrb[0].mxu0
        %v2962 = vadd.f32 %v2778, %v2961
        %2963 = vmatprep.mubr.bf16.mxu0 0
        %2964 = vmatmul.mubr.bf16.gmra.mrb[0].mxu0 %v2728
        %v2965 = vpop.f32.mrb[0].mxu0
        %v2966 = vadd.f32 %v2774, %v2965
        %v2967 = vpop.f32.mrb[0].mxu0
        %v2968 = vadd.f32 %v2778, %v2967
        %v2969 = vpop.f32.mrb[0].mxu0
        %v2970 = vadd.f32 %v2774, %v2969
        %v2971 = vpop.f32.mrb[0].mxu0
        %v2972 = vadd.f32 %v2778, %v2971
        %2973 = vmatprep.mubr.bf16.mxu0 0
        %2974 = vmatmul.mubr.bf16.gmra.mrb[0].mxu0 %v2729
        %v2975 = vpop.f32.mrb[0].mxu0
        %v2976 = vadd.f32 %v2774, %v2975
        %v2977 = vpop.f32.mrb[0].mxu0
        %v2978 = vadd.f32 %v2778, %v2977
        %v2979 = vpop.f32.mrb[0].mxu0
        %v2980 = vadd.f32 %v2774, %v2979
        %v2981 = vpop.f32.mrb[0].mxu0
        %v2982 = vadd.f32 %v2778, %v2981
        %2983 = vmatprep.mubr.bf16.mxu0 0
        %2984 = vmatmul.mubr.bf16.gmra.mrb[0].mxu0 %v2730
        %v2985 = vpop.f32.mrb[0].mxu0
        %v2986 = vadd.f32 %v2774, %v2985
        %v2987 = vpop.f32.mrb[0].mxu0
        %v2988 = vadd.f32 %v2778, %v2987
        %v2989 = vpop.f32.mrb[0].mxu0
        %v2990 = vadd.f32 %v2774, %v2989
        %v2991 = vpop.f32.mrb[0].mxu0
        %v2992 = vadd.f32 %v2778, %v2991
        %2993 = vmatprep.mubr.bf16.mxu0 0
        %2994 = vmatmul.mubr.bf16.gmra.mrb[0].mxu0 %v2731
        %v2995 = vpop.f32.mrb[0].mxu0
        %v2996 = vadd.f32 %v2774, %v2995
        %v2997 = vpop.f32.mrb[0].mxu0
        %v2998 = vadd.f32 %v2778, %v2997
        %v2999 = vpop.f32.mrb[0].mxu0
        %v3000 = vadd.f32 %v2774, %v2999
        %v3001 = vpop.f32.mrb[0].mxu0
        %v3002 = vadd.f32 %v2778, %v3001
        %3003 = vmatprep.mubr.bf16.mxu0 0
        %3004 = vmatmul.mubr.bf16.gmra.mrb[0].mxu0 %v2732
        %v3005 = vpop.f32.mrb[0].mxu0
        %v3006 = vadd.f32 %v2774, %v3005
        %v3007 = vpop.f32.mrb[0].mxu0
        %v3008 = vadd.f32 %v2778, %v3007
        %v3009 = vpop.f32.mrb[0].mxu0
        %v3010 = vadd.f32 %v2774, %v3009
        %v3011 = vpop.f32.mrb[0].mxu0
        %v3012 = vadd.f32 %v2778, %v3011
        %3013 = vmatprep.mubr.bf16.mxu0 0
        %3014 = vmatmul.mubr.bf16.gmra.mrb[0].mxu0 %v2733
        %v3015 = vpop.f32.mrb[0].mxu0
        %v3016 = vadd.f32 %v2774, %v3015
        %v3017 = vpop.f32.mrb[0].mxu0
        %v3018 = vadd.f32 %v2778, %v3017
        %v3019 = vpop.f32.mrb[0].mxu0
        %v3020 = vadd.f32 %v2774, %v3019
        %v3021 = vpop.f32.mrb[0].mxu0
        %v3022 = vadd.f32 %v2778, %v3021
        %3023 = vmatprep.mubr.bf16.mxu0 0
        %3024 = vmatmul.mubr.bf16.gmra.mrb[0].mxu0 %v2734
        %v3025 = vpop.f32.mrb[0].mxu0
        %v3026 = vadd.f32 %v2774, %v3025
        %v3027 = vpop.f32.mrb[0].mxu0
        %v3028 = vadd.f32 %v2778, %v3027
        %v3029 = vpop.f32.mrb[0].mxu0
        %v3030 = vadd.f32 %v2774, %v3029
        %v3031 = vpop.f32.mrb[0].mxu0
        %v3032 = vadd.f32 %v2778, %v3031
        %3033 = vmatprep.mubr.bf16.mxu0 0
        %3034 = vmatmul.mubr.bf16.gmra.mrb[0].mxu0 %v2735
        %v3035 = vpop.f32.mrb[0].mxu0
        %v3036 = vadd.f32 %v2774, %v3035
        %v3037 = vpop.f32.mrb[0].mxu0
        %v3038 = vadd.f32 %v2778, %v3037
        %v3039 = vpop.f32.mrb[0].mxu0
        %v3040 = vadd.f32 %v2774, %v3039
        %v3041 = vpop.f32.mrb[0].mxu0
        %v3042 = vadd.f32 %v2778, %v3041
        %3043 = vmatprep.mubr.bf16.mxu0 0
        %3044 = vmatmul.mubr.bf16.gmra.mrb[0].mxu0 %v2736
        %v3045 = vpop.f32.mrb[0].mxu0
        %v3046 = vadd.f32 %v2774, %v3045
        %v3047 = vpop.f32.mrb[0].mxu0
        %v3048 = vadd.f32 %v2778, %v3047
        %v3049 = vpop.f32.mrb[0].mxu0
        %v3050 = vadd.f32 %v2774, %v3049
        %v3051 = vpop.f32.mrb[0].mxu0
        %v3052 = vadd.f32 %v2778, %v3051
        %3053 = vmatprep.mubr.bf16.mxu0 0
        %3054 = vmatmul.mubr.bf16.gmra.mrb[0].mxu0 %v2737
        %v3055 = vpop.f32.mrb[0].mxu0
        %v3056 = vadd.f32 %v2774, %v3055
        %v3057 = vpop.f32.mrb[0].mxu0
        %v3058 = vadd.f32 %v2778, %v3057
        %v3059 = vpop.f32.mrb[0].mxu0
        %v3060 = vadd.f32 %v2774, %v3059
        %v3061 = vpop.f32.mrb[0].mxu0
        %v3062 = vadd.f32 %v2778, %v3061
        %3063 = vmatprep.mubr.bf16.mxu0 0
        %3064 = vmatmul.mubr.bf16.gmra.mrb[0].mxu0 %v2738
        %v3065 = vpop.f32.mrb[0].mxu0
        %v3066 = vadd.f32 %v2774, %v3065
        %v3067 = vpop.f32.mrb[0].mxu0
        %v3068 = vadd.f32 %v2778, %v3067
        %v3069 = vpop.f32.mrb[0].mxu0
        %v3070 = vadd.f32 %v2774, %v3069
        %v3071 = vpop.f32.mrb[0].mxu0
        %v3072 = vadd.f32 %v2778, %v3071
        %3073 = vmatprep.mubr.bf16.mxu0 0
        %3074 = vmatmul.mubr.bf16.gmra.mrb[0].mxu0 %v2739
        %v3075 = vpop.f32.mrb[0].mxu0
        %v3076 = vadd.f32 %v2774, %v3075
        %v3077 = vpop.f32.mrb[0].mxu0
        %v3078 = vadd.f32 %v2778, %v3077
        %v3079 = vpop.f32.mrb[0].mxu0
        %v3080 = vadd.f32 %v2774, %v3079
        %v3081 = vpop.f32.mrb[0].mxu0
        %v3082 = vadd.f32 %v2778, %v3081
        %3083 = vmatprep.mubr.bf16.mxu0 0
        %3084 = vmatmul.mubr.bf16.gmra.mrb[0].mxu0 %v2740
        %v3085 = vpop.f32.mrb[0].mxu0
        %v3086 = vadd.f32 %v2774, %v3085
        %v3087 = vpop.f32.mrb[0].mxu0
        %v3088 = vadd.f32 %v2778, %v3087
        %v3089 = vpop.f32.mrb[0].mxu0
        %v3090 = vadd.f32 %v2774, %v3089
        %v3091 = vpop.f32.mrb[0].mxu0
        %v3092 = vadd.f32 %v2778, %v3091
        %3093 = vmatprep.mubr.bf16.mxu0 0
        %3094 = vmatmul.mubr.bf16.gmra.mrb[0].mxu0 %v2741
        %v3095 = vpop.f32.mrb[0].mxu0
        %v3096 = vadd.f32 %v2774, %v3095
        %v3097 = vpop.f32.mrb[0].mxu0
        %v3098 = vadd.f32 %v2778, %v3097
        %v3099 = vpop.f32.mrb[0].mxu0
        %v3100 = vadd.f32 %v2774, %v3099
        %v3101 = vpop.f32.mrb[0].mxu0
        %v3102 = vadd.f32 %v2778, %v3101
        %3103 = vmatprep.mubr.bf16.mxu0 0
        %3104 = vmatmul.mubr.bf16.gmra.mrb[0].mxu0 %v2742
        %v3105 = vpop.f32.mrb[0].mxu0
        %v3106 = vadd.f32 %v2774, %v3105
        %v3107 = vpop.f32.mrb[0].mxu0
        %v3108 = vadd.f32 %v2778, %v3107
        %v3109 = vpop.f32.mrb[0].mxu0
        %v3110 = vadd.f32 %v2774, %v3109
        %v3111 = vpop.f32.mrb[0].mxu0
        %v3112 = vadd.f32 %v2778, %v3111
        %3113 = vmatprep.mubr.bf16.mxu0 0
        %3114 = vmatmul.mubr.bf16.gmra.mrb[0].mxu0 %v2743
        %v3115 = vpop.f32.mrb[0].mxu0
        %v3116 = vadd.f32 %v2774, %v3115
        %v3117 = vpop.f32.mrb[0].mxu0
        %v3118 = vadd.f32 %v2778, %v3117
        %v3119 = vpop.f32.mrb[0].mxu0
        %v3120 = vadd.f32 %v2774, %v3119
        %v3121 = vpop.f32.mrb[0].mxu0
        %v3122 = vadd.f32 %v2778, %v3121
        %3123 = vmatprep.mubr.bf16.mxu0 0
        %3124 = vmatmul.mubr.bf16.gmra.mrb[0].mxu0 %v2744
        %v3125 = vpop.f32.mrb[0].mxu0
        %v3126 = vadd.f32 %v2774, %v3125
        %v3127 = vpop.f32.mrb[0].mxu0
        %v3128 = vadd.f32 %v2778, %v3127
        %v3129 = vpop.f32.mrb[0].mxu0
        %v3130 = vadd.f32 %v2774, %v3129
        %v3131 = vpop.f32.mrb[0].mxu0
        %v3132 = vadd.f32 %v2778, %v3131
        %3133 = vmatprep.mubr.bf16.mxu0 0
        %3134 = vmatmul.mubr.bf16.gmra.mrb[0].mxu0 %v2745
        %v3135 = vpop.f32.mrb[0].mxu0
        %v3136 = vadd.f32 %v2774, %v3135
        %v3137 = vpop.f32.mrb[0].mxu0
        %v3138 = vadd.f32 %v2778, %v3137
        %v3139 = vpop.f32.mrb[0].mxu0
        %v3140 = vadd.f32 %v2774, %v3139
        %v3141 = vpop.f32.mrb[0].mxu0
        %v3142 = vadd.f32 %v2778, %v3141
        %3143 = vmatprep.mubr.bf16.mxu0 0
        %3144 = vmatmul.mubr.bf16.gmra.mrb[0].mxu0 %v2746
        %v3145 = vpop.f32.mrb[0].mxu0
        %v3146 = vadd.f32 %v2774, %v3145
        %v3147 = vpop.f32.mrb[0].mxu0
        %v3148 = vadd.f32 %v2778, %v3147
        %v3149 = vpop.f32.mrb[0].mxu0
        %v3150 = vadd.f32 %v2774, %v3149
        %v3151 = vpop.f32.mrb[0].mxu0
        %v3152 = vadd.f32 %v2778, %v3151
        %3153 = vmatprep.mubr.bf16.mxu0 0
        %3154 = vmatmul.mubr.bf16.gmra.mrb[0].mxu0 %v2747
        %v3155 = vpop.f32.mrb[0].mxu0
        %v3156 = vadd.f32 %v2774, %v3155
        %v3157 = vpop.f32.mrb[0].mxu0
        %v3158 = vadd.f32 %v2778, %v3157
        %v3159 = vpop.f32.mrb[0].mxu0
        %v3160 = vadd.f32 %v2774, %v3159
        %v3161 = vpop.f32.mrb[0].mxu0
        %v3162 = vadd.f32 %v2778, %v3161
        %3163 = vmatprep.mubr.bf16.mxu0 0
        %3164 = vmatmul.mubr.bf16.gmra.mrb[0].mxu0 %v2748
        %v3165 = vpop.f32.mrb[0].mxu0
        %v3166 = vadd.f32 %v2774, %v3165
        %v3167 = vpop.f32.mrb[0].mxu0
        %v3168 = vadd.f32 %v2778, %v3167
        %v3169 = vpop.f32.mrb[0].mxu0
        %v3170 = vadd.f32 %v2774, %v3169
        %v3171 = vpop.f32.mrb[0].mxu0
        %v3172 = vadd.f32 %v2778, %v3171
        %3173 = vmatprep.mubr.bf16.mxu0 0
        %3174 = vmatmul.mubr.bf16.gmra.mrb[0].mxu0 %v2749
        %v3175 = vpop.f32.mrb[0].mxu0
        %v3176 = vadd.f32 %v2774, %v3175
        %v3177 = vpop.f32.mrb[0].mxu0
        %v3178 = vadd.f32 %v2778, %v3177
        %v3179 = vpop.f32.mrb[0].mxu0
        %v3180 = vadd.f32 %v2774, %v3179
        %v3181 = vpop.f32.mrb[0].mxu0
        %v3182 = vadd.f32 %v2778, %v3181
        %3183 = vmatprep.mubr.bf16.mxu0 0
        %3184 = vmatmul.mubr.bf16.gmra.mrb[0].mxu0 %v2750
        %v3185 = vpop.f32.mrb[0].mxu0
        %v3186 = vadd.f32 %v2774, %v3185
        %v3187 = vpop.f32.mrb[0].mxu0
        %v3188 = vadd.f32 %v2778, %v3187
        %v3189 = vpop.f32.mrb[0].mxu0
        %v3190 = vadd.f32 %v2774, %v3189
        %v3191 = vpop.f32.mrb[0].mxu0
        %v3192 = vadd.f32 %v2778, %v3191
        %3193 = vmatprep.mubr.bf16.mxu0 0
        %3194 = vmatmul.mubr.bf16.gmra.mrb[0].mxu0 %v2751
        %v3195 = vpop.f32.mrb[0].mxu0
        %v3196 = vadd.f32 %v2774, %v3195
        %v3197 = vpop.f32.mrb[0].mxu0
        %v3198 = vadd.f32 %v2778, %v3197
        %v3199 = vpop.f32.mrb[0].mxu0
        %v3200 = vadd.f32 %v2774, %v3199
        %v3201 = vpop.f32.mrb[0].mxu0
        %v3202 = vadd.f32 %v2778, %v3201
        %3203 = vmatprep.mubr.bf16.mxu0 0
        %3204 = vmatmul.mubr.bf16.gmra.mrb[0].mxu0 %v2752
        %v3205 = vpop.f32.mrb[0].mxu0
        %v3206 = vadd.f32 %v2774, %v3205
        %v3207 = vpop.f32.mrb[0].mxu0
        %v3208 = vadd.f32 %v2778, %v3207
        %v3209 = vpop.f32.mrb[0].mxu0
        %v3210 = vadd.f32 %v2774, %v3209
        %v3211 = vpop.f32.mrb[0].mxu0
        %v3212 = vadd.f32 %v2778, %v3211
        %3213 = vdwg.mxu0
        %v3214 = vmax.f32 %v2896, 0.0
        %v3215 = vmax.f32 %v2898, 0.0
        %v3216 = vmax.f32 %v2900, 0.0
        %v3217 = vmax.f32 %v2902, 0.0
        %v3218 = vmax.f32 %v2906, 0.0
        %v3219 = vmax.f32 %v2908, 0.0
        %v3220 = vmax.f32 %v2910, 0.0
        %v3221 = vmax.f32 %v2912, 0.0
        %v3222 = vmax.f32 %v2916, 0.0
        %v3223 = vmax.f32 %v2918, 0.0
        %v3224 = vmax.f32 %v2920, 0.0
        %v3225 = vmax.f32 %v2922, 0.0
        %v3226 = vmax.f32 %v2926, 0.0
        %v3227 = vmax.f32 %v2928, 0.0
        %v3228 = vmax.f32 %v2930, 0.0
        %v3229 = vmax.f32 %v2932, 0.0
        %v3230 = vmax.f32 %v2936, 0.0
        %v3231 = vmax.f32 %v2938, 0.0
        %v3232 = vmax.f32 %v2940, 0.0
        %v3233 = vmax.f32 %v2942, 0.0
        %v3234 = vmax.f32 %v2946, 0.0
        %v3235 = vmax.f32 %v2948, 0.0
        %v3236 = vmax.f32 %v2950, 0.0
        %v3237 = vmax.f32 %v2952, 0.0
        %v3238 = vmax.f32 %v2956, 0.0
        %v3239 = vmax.f32 %v2958, 0.0
        %v3240 = vmax.f32 %v2960, 0.0
        %v3241 = vmax.f32 %v2962, 0.0
        %v3242 = vmax.f32 %v2966, 0.0
        %v3243 = vmax.f32 %v2968, 0.0
        %v3244 = vmax.f32 %v2970, 0.0
        %v3245 = vmax.f32 %v2972, 0.0
        %v3246 = vmax.f32 %v2976, 0.0
        %v3247 = vmax.f32 %v2978, 0.0
        %v3248 = vmax.f32 %v2980, 0.0
        %v3249 = vmax.f32 %v2982, 0.0
        %v3250 = vmax.f32 %v2986, 0.0
        %v3251 = vmax.f32 %v2988, 0.0
        %v3252 = vmax.f32 %v2990, 0.0
        %v3253 = vmax.f32 %v2992, 0.0
        %v3254 = vmax.f32 %v2996, 0.0
        %v3255 = vmax.f32 %v2998, 0.0
        %v3256 = vmax.f32 %v3000, 0.0
        %v3257 = vmax.f32 %v3002, 0.0
        %v3258 = vmax.f32 %v3006, 0.0
        %v3259 = vmax.f32 %v3008, 0.0
        %v3260 = vmax.f32 %v3010, 0.0
        %v3261 = vmax.f32 %v3012, 0.0
        %v3262 = vmax.f32 %v3016, 0.0
        %v3263 = vmax.f32 %v3018, 0.0
        %v3264 = vmax.f32 %v3020, 0.0
        %v3265 = vmax.f32 %v3022, 0.0
        %v3266 = vmax.f32 %v3026, 0.0
        %v3267 = vmax.f32 %v3028, 0.0
        %v3268 = vmax.f32 %v3030, 0.0
        %v3269 = vmax.f32 %v3032, 0.0
        %v3270 = vmax.f32 %v3036, 0.0
        %v3271 = vmax.f32 %v3038, 0.0
        %v3272 = vmax.f32 %v3040, 0.0
        %v3273 = vmax.f32 %v3042, 0.0
        %v3274 = vmax.f32 %v3046, 0.0
        %v3275 = vmax.f32 %v3048, 0.0
        %v3276 = vmax.f32 %v3050, 0.0
        %v3277 = vmax.f32 %v3052, 0.0
        %v3278 = vmax.f32 %v3056, 0.0
        %v3279 = vmax.f32 %v3058, 0.0
        %v3280 = vmax.f32 %v3060, 0.0
        %v3281 = vmax.f32 %v3062, 0.0
        %v3282 = vmax.f32 %v3066, 0.0
        %v3283 = vmax.f32 %v3068, 0.0
        %v3284 = vmax.f32 %v3070, 0.0
        %v3285 = vmax.f32 %v3072, 0.0
        %v3286 = vmax.f32 %v3076, 0.0
        %v3287 = vmax.f32 %v3078, 0.0
        %v3288 = vmax.f32 %v3080, 0.0
        %v3289 = vmax.f32 %v3082, 0.0
        %v3290 = vmax.f32 %v3086, 0.0
        %v3291 = vmax.f32 %v3088, 0.0
        %v3292 = vmax.f32 %v3090, 0.0
        %v3293 = vmax.f32 %v3092, 0.0
        %v3294 = vmax.f32 %v3096, 0.0
        %v3295 = vmax.f32 %v3098, 0.0
        %v3296 = vmax.f32 %v3100, 0.0
        %v3297 = vmax.f32 %v3102, 0.0
        %v3298 = vmax.f32 %v3106, 0.0
        %v3299 = vmax.f32 %v3108, 0.0
        %v3300 = vmax.f32 %v3110, 0.0
        %v3301 = vmax.f32 %v3112, 0.0
        %v3302 = vmax.f32 %v3116, 0.0
        %v3303 = vmax.f32 %v3118, 0.0
        %v3304 = vmax.f32 %v3120, 0.0
        %v3305 = vmax.f32 %v3122, 0.0
        %v3306 = vmax.f32 %v3126, 0.0
        %v3307 = vmax.f32 %v3128, 0.0
        %v3308 = vmax.f32 %v3130, 0.0
        %v3309 = vmax.f32 %v3132, 0.0
        %v3310 = vmax.f32 %v3136, 0.0
        %v3311 = vmax.f32 %v3138, 0.0
        %v3312 = vmax.f32 %v3140, 0.0
        %v3313 = vmax.f32 %v3142, 0.0
        %v3314 = vmax.f32 %v3146, 0.0
        %v3315 = vmax.f32 %v3148, 0.0
        %v3316 = vmax.f32 %v3150, 0.0
        %v3317 = vmax.f32 %v3152, 0.0
        %v3318 = vmax.f32 %v3156, 0.0
        %v3319 = vmax.f32 %v3158, 0.0
        %v3320 = vmax.f32 %v3160, 0.0
        %v3321 = vmax.f32 %v3162, 0.0
        %v3322 = vmax.f32 %v3166, 0.0
        %v3323 = vmax.f32 %v3168, 0.0
        %v3324 = vmax.f32 %v3170, 0.0
        %v3325 = vmax.f32 %v3172, 0.0
        %v3326 = vmax.f32 %v3176, 0.0
        %v3327 = vmax.f32 %v3178, 0.0
        %v3328 = vmax.f32 %v3180, 0.0
        %v3329 = vmax.f32 %v3182, 0.0
        %v3330 = vmax.f32 %v3186, 0.0
        %v3331 = vmax.f32 %v3188, 0.0
        %v3332 = vmax.f32 %v3190, 0.0
        %v3333 = vmax.f32 %v3192, 0.0
        %v3334 = vmax.f32 %v3196, 0.0
        %v3335 = vmax.f32 %v3198, 0.0
        %v3336 = vmax.f32 %v3200, 0.0
        %v3337 = vmax.f32 %v3202, 0.0
        %v3338 = vmax.f32 %v3206, 0.0
        %v3339 = vmax.f32 %v3208, 0.0
        %v3340 = vmax.f32 %v3210, 0.0
        %v3341 = vmax.f32 %v3212, 0.0
        %v3342 = vpack.c.bf16 %v3216, %v3214
        %v3343 = vpack.c.bf16 %v3217, %v3215
        %v3344 = vpack.c.bf16 %v3220, %v3218
        %v3345 = vpack.c.bf16 %v3221, %v3219
        %v3346 = vpack.c.bf16 %v3224, %v3222
        %v3347 = vpack.c.bf16 %v3225, %v3223
        %v3348 = vpack.c.bf16 %v3228, %v3226
        %v3349 = vpack.c.bf16 %v3229, %v3227
        %v3350 = vpack.c.bf16 %v3232, %v3230
        %v3351 = vpack.c.bf16 %v3233, %v3231
        %v3352 = vpack.c.bf16 %v3236, %v3234
        %v3353 = vpack.c.bf16 %v3237, %v3235
        %v3354 = vpack.c.bf16 %v3240, %v3238
        %v3355 = vpack.c.bf16 %v3241, %v3239
        %v3356 = vpack.c.bf16 %v3244, %v3242
        %v3357 = vpack.c.bf16 %v3245, %v3243
        %v3358 = vpack.c.bf16 %v3248, %v3246
        %v3359 = vpack.c.bf16 %v3249, %v3247
        %v3360 = vpack.c.bf16 %v3252, %v3250
        %v3361 = vpack.c.bf16 %v3253, %v3251
        %v3362 = vpack.c.bf16 %v3256, %v3254
        %v3363 = vpack.c.bf16 %v3257, %v3255
        %v3364 = vpack.c.bf16 %v3260, %v3258
        %v3365 = vpack.c.bf16 %v3261, %v3259
        %v3366 = vpack.c.bf16 %v3264, %v3262
        %v3367 = vpack.c.bf16 %v3265, %v3263
        %v3368 = vpack.c.bf16 %v3268, %v3266
        %v3369 = vpack.c.bf16 %v3269, %v3267
        %v3370 = vpack.c.bf16 %v3272, %v3270
        %v3371 = vpack.c.bf16 %v3273, %v3271
        %v3372 = vpack.c.bf16 %v3276, %v3274
        %v3373 = vpack.c.bf16 %v3277, %v3275
        %v3374 = vpack.c.bf16 %v3280, %v3278
        %v3375 = vpack.c.bf16 %v3281, %v3279
        %v3376 = vpack.c.bf16 %v3284, %v3282
        %v3377 = vpack.c.bf16 %v3285, %v3283
        %v3378 = vpack.c.bf16 %v3288, %v3286
        %v3379 = vpack.c.bf16 %v3289, %v3287
        %v3380 = vpack.c.bf16 %v3292, %v3290
        %v3381 = vpack.c.bf16 %v3293, %v3291
        %v3382 = vpack.c.bf16 %v3296, %v3294
        %v3383 = vpack.c.bf16 %v3297, %v3295
        %v3384 = vpack.c.bf16 %v3300, %v3298
        %v3385 = vpack.c.bf16 %v3301, %v3299
        %v3386 = vpack.c.bf16 %v3304, %v3302
        %v3387 = vpack.c.bf16 %v3305, %v3303
        %v3388 = vpack.c.bf16 %v3308, %v3306
        %v3389 = vpack.c.bf16 %v3309, %v3307
        %v3390 = vpack.c.bf16 %v3312, %v3310
        %v3391 = vpack.c.bf16 %v3313, %v3311
        %v3392 = vpack.c.bf16 %v3316, %v3314
        %v3393 = vpack.c.bf16 %v3317, %v3315
        %v3394 = vpack.c.bf16 %v3320, %v3318
        %v3395 = vpack.c.bf16 %v3321, %v3319
        %v3396 = vpack.c.bf16 %v3324, %v3322
        %v3397 = vpack.c.bf16 %v3325, %v3323
        %v3398 = vpack.c.bf16 %v3328, %v3326
        %v3399 = vpack.c.bf16 %v3329, %v3327
        %v3400 = vpack.c.bf16 %v3332, %v3330
        %v3401 = vpack.c.bf16 %v3333, %v3331
        %v3402 = vpack.c.bf16 %v3336, %v3334
        %v3403 = vpack.c.bf16 %v3337, %v3335
        %v3404 = vpack.c.bf16 %v3340, %v3338
        %v3405 = vpack.c.bf16 %v3341, %v3339
        %v3406 = vld [vmem:[#allocation11] sm:$0xff]
        %v3407 = vld [vmem:[#allocation11 + $0x8] sm:$0xff]
        %v3408 = vld [vmem:[#allocation11 + $0x10] sm:$0xff]
        %v3409 = vld [vmem:[#allocation11 + $0x18] sm:$0xff]
        %v3410 = vld [vmem:[#allocation11 + $0x20] sm:$0xff]
        %v3411 = vld [vmem:[#allocation11 + $0x28] sm:$0xff]
        %v3412 = vld [vmem:[#allocation11 + $0x30] sm:$0xff]
        %v3413 = vld [vmem:[#allocation11 + $0x38] sm:$0xff]
        %v3414 = vld [vmem:[#allocation11 + $0x40] sm:$0xff]
        %v3415 = vld [vmem:[#allocation11 + $0x48] sm:$0xff]
        %v3416 = vld [vmem:[#allocation11 + $0x50] sm:$0xff]
        %v3417 = vld [vmem:[#allocation11 + $0x58] sm:$0xff]
        %v3418 = vld [vmem:[#allocation11 + $0x60] sm:$0xff]
        %v3419 = vld [vmem:[#allocation11 + $0x68] sm:$0xff]
        %v3420 = vld [vmem:[#allocation11 + $0x70] sm:$0xff]
        %v3421 = vld [vmem:[#allocation11 + $0x78] sm:$0xff]
        %v3422 = vld [vmem:[#allocation11 + $0x80] sm:$0xff]
        %v3423 = vld [vmem:[#allocation11 + $0x88] sm:$0xff]
        %v3424 = vld [vmem:[#allocation11 + $0x90] sm:$0xff]
        %v3425 = vld [vmem:[#allocation11 + $0x98] sm:$0xff]
        %v3426 = vld [vmem:[#allocation11 + $0xa0] sm:$0xff]
        %v3427 = vld [vmem:[#allocation11 + $0xa8] sm:$0xff]
        %v3428 = vld [vmem:[#allocation11 + $0xb0] sm:$0xff]
        %v3429 = vld [vmem:[#allocation11 + $0xb8] sm:$0xff]
        %v3430 = vld [vmem:[#allocation11 + $0xc0] sm:$0xff]
        %v3431 = vld [vmem:[#allocation11 + $0xc8] sm:$0xff]
        %v3432 = vld [vmem:[#allocation11 + $0xd0] sm:$0xff]
        %v3433 = vld [vmem:[#allocation11 + $0xd8] sm:$0xff]
        %v3434 = vld [vmem:[#allocation11 + $0xe0] sm:$0xff]
        %v3435 = vld [vmem:[#allocation11 + $0xe8] sm:$0xff]
        %v3436 = vld [vmem:[#allocation11 + $0xf0] sm:$0xff]
        %v3437 = vld [vmem:[#allocation11 + $0xf8] sm:$0xff]
        %v3438 = vld [vmem:[%s9] sm:$0x3]
        %v3440 = vlaneseq
        %v3441 = vshrl.u32 %v3440, 7
        %v3442 = vsub.s32 0, %v3441
        %v3443 = vrot.slane %v3438, %v3442
        %v3444 = vlaneseq
        %v3445 = vshrl.u32 %v3444, 7
        %v3446 = vsub.s32 1, %v3445
        %v3447 = vrot.slane %v3438, %v3446
        %v3482 = vunpack.c.l.b16 %v3406
        %v3483 = vunpack.c.h.b16 %v3406
        %v3484 = vunpack.c.l.b16 %v3407
        %v3485 = vunpack.c.h.b16 %v3407
        %v3486 = vunpack.c.l.b16 %v3408
        %v3487 = vunpack.c.h.b16 %v3408
        %v3488 = vunpack.c.l.b16 %v3409
        %v3489 = vunpack.c.h.b16 %v3409
        %v3490 = vunpack.c.l.b16 %v3410
        %v3491 = vunpack.c.h.b16 %v3410
        %v3492 = vunpack.c.l.b16 %v3411
        %v3493 = vunpack.c.h.b16 %v3411
        %v3494 = vunpack.c.l.b16 %v3412
        %v3495 = vunpack.c.h.b16 %v3412
        %v3496 = vunpack.c.l.b16 %v3413
        %v3497 = vunpack.c.h.b16 %v3413
        %v3498 = vunpack.c.l.b16 %v3414
        %v3499 = vunpack.c.h.b16 %v3414
        %v3500 = vunpack.c.l.b16 %v3415
        %v3501 = vunpack.c.h.b16 %v3415
        %v3502 = vunpack.c.l.b16 %v3416
        %v3503 = vunpack.c.h.b16 %v3416
        %v3504 = vunpack.c.l.b16 %v3417
        %v3505 = vunpack.c.h.b16 %v3417
        %v3506 = vunpack.c.l.b16 %v3418
        %v3507 = vunpack.c.h.b16 %v3418
        %v3508 = vunpack.c.l.b16 %v3419
        %v3509 = vunpack.c.h.b16 %v3419
        %v3510 = vunpack.c.l.b16 %v3420
        %v3511 = vunpack.c.h.b16 %v3420
        %v3512 = vunpack.c.l.b16 %v3421
        %v3513 = vunpack.c.h.b16 %v3421
        %v3514 = vunpack.c.l.b16 %v3422
        %v3515 = vunpack.c.h.b16 %v3422
        %v3516 = vunpack.c.l.b16 %v3423
        %v3517 = vunpack.c.h.b16 %v3423
        %v3518 = vunpack.c.l.b16 %v3424
        %v3519 = vunpack.c.h.b16 %v3424
        %v3520 = vunpack.c.l.b16 %v3425
        %v3521 = vunpack.c.h.b16 %v3425
        %v3522 = vunpack.c.l.b16 %v3426
        %v3523 = vunpack.c.h.b16 %v3426
        %v3524 = vunpack.c.l.b16 %v3427
        %v3525 = vunpack.c.h.b16 %v3427
        %v3526 = vunpack.c.l.b16 %v3428
        %v3527 = vunpack.c.h.b16 %v3428
        %v3528 = vunpack.c.l.b16 %v3429
        %v3529 = vunpack.c.h.b16 %v3429
        %v3530 = vunpack.c.l.b16 %v3430
        %v3531 = vunpack.c.h.b16 %v3430
        %v3532 = vunpack.c.l.b16 %v3431
        %v3533 = vunpack.c.h.b16 %v3431
        %v3534 = vunpack.c.l.b16 %v3432
        %v3535 = vunpack.c.h.b16 %v3432
        %v3536 = vunpack.c.l.b16 %v3433
        %v3537 = vunpack.c.h.b16 %v3433
        %v3538 = vunpack.c.l.b16 %v3434
        %v3539 = vunpack.c.h.b16 %v3434
        %v3540 = vunpack.c.l.b16 %v3435
        %v3541 = vunpack.c.h.b16 %v3435
        %v3542 = vunpack.c.l.b16 %v3436
        %v3543 = vunpack.c.h.b16 %v3436
        %v3544 = vunpack.c.l.b16 %v3437
        %v3545 = vunpack.c.h.b16 %v3437
        %v3546 = vpack.c.b16 %v3484, %v3482
        %v3547 = vpack.c.b16 %v3485, %v3483
        %v3548 = vpack.c.b16 %v3488, %v3486
        %v3549 = vpack.c.b16 %v3489, %v3487
        %v3550 = vpack.c.b16 %v3492, %v3490
        %v3551 = vpack.c.b16 %v3493, %v3491
        %v3552 = vpack.c.b16 %v3496, %v3494
        %v3553 = vpack.c.b16 %v3497, %v3495
        %v3554 = vpack.c.b16 %v3500, %v3498
        %v3555 = vpack.c.b16 %v3501, %v3499
        %v3556 = vpack.c.b16 %v3504, %v3502
        %v3557 = vpack.c.b16 %v3505, %v3503
        %v3558 = vpack.c.b16 %v3508, %v3506
        %v3559 = vpack.c.b16 %v3509, %v3507
        %v3560 = vpack.c.b16 %v3512, %v3510
        %v3561 = vpack.c.b16 %v3513, %v3511
        %v3562 = vpack.c.b16 %v3516, %v3514
        %v3563 = vpack.c.b16 %v3517, %v3515
        %v3564 = vpack.c.b16 %v3520, %v3518
        %v3565 = vpack.c.b16 %v3521, %v3519
        %v3566 = vpack.c.b16 %v3524, %v3522
        %v3567 = vpack.c.b16 %v3525, %v3523
        %v3568 = vpack.c.b16 %v3528, %v3526
        %v3569 = vpack.c.b16 %v3529, %v3527
        %v3570 = vpack.c.b16 %v3532, %v3530
        %v3571 = vpack.c.b16 %v3533, %v3531
        %v3572 = vpack.c.b16 %v3536, %v3534
        %v3573 = vpack.c.b16 %v3537, %v3535
        %v3574 = vpack.c.b16 %v3540, %v3538
        %v3575 = vpack.c.b16 %v3541, %v3539
        %v3576 = vpack.c.b16 %v3544, %v3542
        %v3577 = vpack.c.b16 %v3545, %v3543
        %3610 = vmatprep.subr.bf16.mxu0 %v3547
        %3611 = vmatpush1.bf16.msra.mxu0 %v3546
        %3612 = vmatprep.subr.bf16.mxu0 %v3549
        %3613 = vmatpush1.bf16.msra.mxu0 %v3548
        %3614 = vmatprep.subr.bf16.mxu0 %v3551
        %3615 = vmatpush1.bf16.msra.mxu0 %v3550
        %3616 = vmatprep.subr.bf16.mxu0 %v3553
        %3617 = vmatpush1.bf16.msra.mxu0 %v3552
        %3618 = vmatprep.subr.bf16.mxu0 %v3555
        %3619 = vmatpush1.bf16.msra.mxu0 %v3554
        %3620 = vmatprep.subr.bf16.mxu0 %v3557
        %3621 = vmatpush1.bf16.msra.mxu0 %v3556
        %3622 = vmatprep.subr.bf16.mxu0 %v3559
        %3623 = vmatpush1.bf16.msra.mxu0 %v3558
        %3624 = vmatprep.subr.bf16.mxu0 %v3561
        %3625 = vmatpush1.bf16.msra.mxu0 %v3560
        %3626 = vmatprep.subr.bf16.mxu0 %v3563
        %3627 = vmatpush1.bf16.msra.mxu0 %v3562
        %3628 = vmatprep.subr.bf16.mxu0 %v3565
        %3629 = vmatpush1.bf16.msra.mxu0 %v3564
        %3630 = vmatprep.subr.bf16.mxu0 %v3567
        %3631 = vmatpush1.bf16.msra.mxu0 %v3566
        %3632 = vmatprep.subr.bf16.mxu0 %v3569
        %3633 = vmatpush1.bf16.msra.mxu0 %v3568
        %3634 = vmatprep.subr.bf16.mxu0 %v3571
        %3635 = vmatpush1.bf16.msra.mxu0 %v3570
        %3636 = vmatprep.subr.bf16.mxu0 %v3573
        %3637 = vmatpush1.bf16.msra.mxu0 %v3572
        %3638 = vmatprep.subr.bf16.mxu0 %v3575
        %3639 = vmatpush1.bf16.msra.mxu0 %v3574
        %3640 = vmatprep.subr.bf16.mxu0 %v3577
        %3641 = vmatpush1.bf16.msra.mxu0 %v3576
        %3642 = vmatprep.mubr.bf16.mxu0 %v3343
        %3643 = vmatmul.mubr.bf16.gmra.mrb[0].mxu0 %v3342
        %v3644 = vpop.f32.mrb[0].mxu0
        %v3645 = vadd.f32 %v3443, %v3644
        %v3646 = vpop.f32.mrb[0].mxu0
        %v3647 = vadd.f32 %v3447, %v3646
        %v3648 = vpop.f32.mrb[0].mxu0
        %v3649 = vadd.f32 %v3443, %v3648
        %v3650 = vpop.f32.mrb[0].mxu0
        %v3651 = vadd.f32 %v3447, %v3650
        %3652 = vmatprep.mubr.bf16.mxu0 %v3345
        %3653 = vmatmul.mubr.bf16.gmra.mrb[0].mxu0 %v3344
        %v3654 = vpop.f32.mrb[0].mxu0
        %v3655 = vadd.f32 %v3443, %v3654
        %v3656 = vpop.f32.mrb[0].mxu0
        %v3657 = vadd.f32 %v3447, %v3656
        %v3658 = vpop.f32.mrb[0].mxu0
        %v3659 = vadd.f32 %v3443, %v3658
        %v3660 = vpop.f32.mrb[0].mxu0
        %v3661 = vadd.f32 %v3447, %v3660
        %3662 = vmatprep.mubr.bf16.mxu0 %v3347
        %3663 = vmatmul.mubr.bf16.gmra.mrb[0].mxu0 %v3346
        %v3664 = vpop.f32.mrb[0].mxu0
        %v3665 = vadd.f32 %v3443, %v3664
        %v3666 = vpop.f32.mrb[0].mxu0
        %v3667 = vadd.f32 %v3447, %v3666
        %v3668 = vpop.f32.mrb[0].mxu0
        %v3669 = vadd.f32 %v3443, %v3668
        %v3670 = vpop.f32.mrb[0].mxu0
        %v3671 = vadd.f32 %v3447, %v3670
        %3672 = vmatprep.mubr.bf16.mxu0 %v3349
        %3673 = vmatmul.mubr.bf16.gmra.mrb[0].mxu0 %v3348
        %v3674 = vpop.f32.mrb[0].mxu0
        %v3675 = vadd.f32 %v3443, %v3674
        %v3676 = vpop.f32.mrb[0].mxu0
        %v3677 = vadd.f32 %v3447, %v3676
        %v3678 = vpop.f32.mrb[0].mxu0
        %v3679 = vadd.f32 %v3443, %v3678
        %v3680 = vpop.f32.mrb[0].mxu0
        %v3681 = vadd.f32 %v3447, %v3680
        %3682 = vmatprep.mubr.bf16.mxu0 %v3351
        %3683 = vmatmul.mubr.bf16.gmra.mrb[0].mxu0 %v3350
        %v3684 = vpop.f32.mrb[0].mxu0
        %v3685 = vadd.f32 %v3443, %v3684
        %v3686 = vpop.f32.mrb[0].mxu0
        %v3687 = vadd.f32 %v3447, %v3686
        %v3688 = vpop.f32.mrb[0].mxu0
        %v3689 = vadd.f32 %v3443, %v3688
        %v3690 = vpop.f32.mrb[0].mxu0
        %v3691 = vadd.f32 %v3447, %v3690
        %3692 = vmatprep.mubr.bf16.mxu0 %v3353
        %3693 = vmatmul.mubr.bf16.gmra.mrb[0].mxu0 %v3352
        %v3694 = vpop.f32.mrb[0].mxu0
        %v3695 = vadd.f32 %v3443, %v3694
        %v3696 = vpop.f32.mrb[0].mxu0
        %v3697 = vadd.f32 %v3447, %v3696
        %v3698 = vpop.f32.mrb[0].mxu0
        %v3699 = vadd.f32 %v3443, %v3698
        %v3700 = vpop.f32.mrb[0].mxu0
        %v3701 = vadd.f32 %v3447, %v3700
        %3702 = vmatprep.mubr.bf16.mxu0 %v3355
        %3703 = vmatmul.mubr.bf16.gmra.mrb[0].mxu0 %v3354
        %v3704 = vpop.f32.mrb[0].mxu0
        %v3705 = vadd.f32 %v3443, %v3704
        %v3706 = vpop.f32.mrb[0].mxu0
        %v3707 = vadd.f32 %v3447, %v3706
        %v3708 = vpop.f32.mrb[0].mxu0
        %v3709 = vadd.f32 %v3443, %v3708
        %v3710 = vpop.f32.mrb[0].mxu0
        %v3711 = vadd.f32 %v3447, %v3710
        %3712 = vmatprep.mubr.bf16.mxu0 %v3357
        %3713 = vmatmul.mubr.bf16.gmra.mrb[0].mxu0 %v3356
        %v3714 = vpop.f32.mrb[0].mxu0
        %v3715 = vadd.f32 %v3443, %v3714
        %v3716 = vpop.f32.mrb[0].mxu0
        %v3717 = vadd.f32 %v3447, %v3716
        %v3718 = vpop.f32.mrb[0].mxu0
        %v3719 = vadd.f32 %v3443, %v3718
        %v3720 = vpop.f32.mrb[0].mxu0
        %v3721 = vadd.f32 %v3447, %v3720
        %3722 = vmatprep.mubr.bf16.mxu0 %v3359
        %3723 = vmatmul.mubr.bf16.gmra.mrb[0].mxu0 %v3358
        %v3724 = vpop.f32.mrb[0].mxu0
        %v3725 = vadd.f32 %v3443, %v3724
        %v3726 = vpop.f32.mrb[0].mxu0
        %v3727 = vadd.f32 %v3447, %v3726
        %v3728 = vpop.f32.mrb[0].mxu0
        %v3729 = vadd.f32 %v3443, %v3728
        %v3730 = vpop.f32.mrb[0].mxu0
        %v3731 = vadd.f32 %v3447, %v3730
        %3732 = vmatprep.mubr.bf16.mxu0 %v3361
        %3733 = vmatmul.mubr.bf16.gmra.mrb[0].mxu0 %v3360
        %v3734 = vpop.f32.mrb[0].mxu0
        %v3735 = vadd.f32 %v3443, %v3734
        %v3736 = vpop.f32.mrb[0].mxu0
        %v3737 = vadd.f32 %v3447, %v3736
        %v3738 = vpop.f32.mrb[0].mxu0
        %v3739 = vadd.f32 %v3443, %v3738
        %v3740 = vpop.f32.mrb[0].mxu0
        %v3741 = vadd.f32 %v3447, %v3740
        %3742 = vmatprep.mubr.bf16.mxu0 %v3363
        %3743 = vmatmul.mubr.bf16.gmra.mrb[0].mxu0 %v3362
        %v3744 = vpop.f32.mrb[0].mxu0
        %v3745 = vadd.f32 %v3443, %v3744
        %v3746 = vpop.f32.mrb[0].mxu0
        %v3747 = vadd.f32 %v3447, %v3746
        %v3748 = vpop.f32.mrb[0].mxu0
        %v3749 = vadd.f32 %v3443, %v3748
        %v3750 = vpop.f32.mrb[0].mxu0
        %v3751 = vadd.f32 %v3447, %v3750
        %3752 = vmatprep.mubr.bf16.mxu0 %v3365
        %3753 = vmatmul.mubr.bf16.gmra.mrb[0].mxu0 %v3364
        %v3754 = vpop.f32.mrb[0].mxu0
        %v3755 = vadd.f32 %v3443, %v3754
        %v3756 = vpop.f32.mrb[0].mxu0
        %v3757 = vadd.f32 %v3447, %v3756
        %v3758 = vpop.f32.mrb[0].mxu0
        %v3759 = vadd.f32 %v3443, %v3758
        %v3760 = vpop.f32.mrb[0].mxu0
        %v3761 = vadd.f32 %v3447, %v3760
        %3762 = vmatprep.mubr.bf16.mxu0 %v3367
        %3763 = vmatmul.mubr.bf16.gmra.mrb[0].mxu0 %v3366
        %v3764 = vpop.f32.mrb[0].mxu0
        %v3765 = vadd.f32 %v3443, %v3764
        %v3766 = vpop.f32.mrb[0].mxu0
        %v3767 = vadd.f32 %v3447, %v3766
        %v3768 = vpop.f32.mrb[0].mxu0
        %v3769 = vadd.f32 %v3443, %v3768
        %v3770 = vpop.f32.mrb[0].mxu0
        %v3771 = vadd.f32 %v3447, %v3770
        %3772 = vmatprep.mubr.bf16.mxu0 %v3369
        %3773 = vmatmul.mubr.bf16.gmra.mrb[0].mxu0 %v3368
        %v3774 = vpop.f32.mrb[0].mxu0
        %v3775 = vadd.f32 %v3443, %v3774
        %v3776 = vpop.f32.mrb[0].mxu0
        %v3777 = vadd.f32 %v3447, %v3776
        %v3778 = vpop.f32.mrb[0].mxu0
        %v3779 = vadd.f32 %v3443, %v3778
        %v3780 = vpop.f32.mrb[0].mxu0
        %v3781 = vadd.f32 %v3447, %v3780
        %3782 = vmatprep.mubr.bf16.mxu0 %v3371
        %3783 = vmatmul.mubr.bf16.gmra.mrb[0].mxu0 %v3370
        %v3784 = vpop.f32.mrb[0].mxu0
        %v3785 = vadd.f32 %v3443, %v3784
        %v3786 = vpop.f32.mrb[0].mxu0
        %v3787 = vadd.f32 %v3447, %v3786
        %v3788 = vpop.f32.mrb[0].mxu0
        %v3789 = vadd.f32 %v3443, %v3788
        %v3790 = vpop.f32.mrb[0].mxu0
        %v3791 = vadd.f32 %v3447, %v3790
        %3792 = vmatprep.mubr.bf16.mxu0 %v3373
        %3793 = vmatmul.mubr.bf16.gmra.mrb[0].mxu0 %v3372
        %v3794 = vpop.f32.mrb[0].mxu0
        %v3795 = vadd.f32 %v3443, %v3794
        %v3796 = vpop.f32.mrb[0].mxu0
        %v3797 = vadd.f32 %v3447, %v3796
        %v3798 = vpop.f32.mrb[0].mxu0
        %v3799 = vadd.f32 %v3443, %v3798
        %v3800 = vpop.f32.mrb[0].mxu0
        %v3801 = vadd.f32 %v3447, %v3800
        %3802 = vmatprep.mubr.bf16.mxu0 %v3375
        %3803 = vmatmul.mubr.bf16.gmra.mrb[0].mxu0 %v3374
        %v3804 = vpop.f32.mrb[0].mxu0
        %v3805 = vadd.f32 %v3443, %v3804
        %v3806 = vpop.f32.mrb[0].mxu0
        %v3807 = vadd.f32 %v3447, %v3806
        %v3808 = vpop.f32.mrb[0].mxu0
        %v3809 = vadd.f32 %v3443, %v3808
        %v3810 = vpop.f32.mrb[0].mxu0
        %v3811 = vadd.f32 %v3447, %v3810
        %3812 = vmatprep.mubr.bf16.mxu0 %v3377
        %3813 = vmatmul.mubr.bf16.gmra.mrb[0].mxu0 %v3376
        %v3814 = vpop.f32.mrb[0].mxu0
        %v3815 = vadd.f32 %v3443, %v3814
        %v3816 = vpop.f32.mrb[0].mxu0
        %v3817 = vadd.f32 %v3447, %v3816
        %v3818 = vpop.f32.mrb[0].mxu0
        %v3819 = vadd.f32 %v3443, %v3818
        %v3820 = vpop.f32.mrb[0].mxu0
        %v3821 = vadd.f32 %v3447, %v3820
        %3822 = vmatprep.mubr.bf16.mxu0 %v3379
        %3823 = vmatmul.mubr.bf16.gmra.mrb[0].mxu0 %v3378
        %v3824 = vpop.f32.mrb[0].mxu0
        %v3825 = vadd.f32 %v3443, %v3824
        %v3826 = vpop.f32.mrb[0].mxu0
        %v3827 = vadd.f32 %v3447, %v3826
        %v3828 = vpop.f32.mrb[0].mxu0
        %v3829 = vadd.f32 %v3443, %v3828
        %v3830 = vpop.f32.mrb[0].mxu0
        %v3831 = vadd.f32 %v3447, %v3830
        %3832 = vmatprep.mubr.bf16.mxu0 %v3381
        %3833 = vmatmul.mubr.bf16.gmra.mrb[0].mxu0 %v3380
        %v3834 = vpop.f32.mrb[0].mxu0
        %v3835 = vadd.f32 %v3443, %v3834
        %v3836 = vpop.f32.mrb[0].mxu0
        %v3837 = vadd.f32 %v3447, %v3836
        %v3838 = vpop.f32.mrb[0].mxu0
        %v3839 = vadd.f32 %v3443, %v3838
        %v3840 = vpop.f32.mrb[0].mxu0
        %v3841 = vadd.f32 %v3447, %v3840
        %3842 = vmatprep.mubr.bf16.mxu0 %v3383
        %3843 = vmatmul.mubr.bf16.gmra.mrb[0].mxu0 %v3382
        %v3844 = vpop.f32.mrb[0].mxu0
        %v3845 = vadd.f32 %v3443, %v3844
        %v3846 = vpop.f32.mrb[0].mxu0
        %v3847 = vadd.f32 %v3447, %v3846
        %v3848 = vpop.f32.mrb[0].mxu0
        %v3849 = vadd.f32 %v3443, %v3848
        %v3850 = vpop.f32.mrb[0].mxu0
        %v3851 = vadd.f32 %v3447, %v3850
        %3852 = vmatprep.mubr.bf16.mxu0 %v3385
        %3853 = vmatmul.mubr.bf16.gmra.mrb[0].mxu0 %v3384
        %v3854 = vpop.f32.mrb[0].mxu0
        %v3855 = vadd.f32 %v3443, %v3854
        %v3856 = vpop.f32.mrb[0].mxu0
        %v3857 = vadd.f32 %v3447, %v3856
        %v3858 = vpop.f32.mrb[0].mxu0
        %v3859 = vadd.f32 %v3443, %v3858
        %v3860 = vpop.f32.mrb[0].mxu0
        %v3861 = vadd.f32 %v3447, %v3860
        %3862 = vmatprep.mubr.bf16.mxu0 %v3387
        %3863 = vmatmul.mubr.bf16.gmra.mrb[0].mxu0 %v3386
        %v3864 = vpop.f32.mrb[0].mxu0
        %v3865 = vadd.f32 %v3443, %v3864
        %v3866 = vpop.f32.mrb[0].mxu0
        %v3867 = vadd.f32 %v3447, %v3866
        %v3868 = vpop.f32.mrb[0].mxu0
        %v3869 = vadd.f32 %v3443, %v3868
        %v3870 = vpop.f32.mrb[0].mxu0
        %v3871 = vadd.f32 %v3447, %v3870
        %3872 = vmatprep.mubr.bf16.mxu0 %v3389
        %3873 = vmatmul.mubr.bf16.gmra.mrb[0].mxu0 %v3388
        %v3874 = vpop.f32.mrb[0].mxu0
        %v3875 = vadd.f32 %v3443, %v3874
        %v3876 = vpop.f32.mrb[0].mxu0
        %v3877 = vadd.f32 %v3447, %v3876
        %v3878 = vpop.f32.mrb[0].mxu0
        %v3879 = vadd.f32 %v3443, %v3878
        %v3880 = vpop.f32.mrb[0].mxu0
        %v3881 = vadd.f32 %v3447, %v3880
        %3882 = vmatprep.mubr.bf16.mxu0 %v3391
        %3883 = vmatmul.mubr.bf16.gmra.mrb[0].mxu0 %v3390
        %v3884 = vpop.f32.mrb[0].mxu0
        %v3885 = vadd.f32 %v3443, %v3884
        %v3886 = vpop.f32.mrb[0].mxu0
        %v3887 = vadd.f32 %v3447, %v3886
        %v3888 = vpop.f32.mrb[0].mxu0
        %v3889 = vadd.f32 %v3443, %v3888
        %v3890 = vpop.f32.mrb[0].mxu0
        %v3891 = vadd.f32 %v3447, %v3890
        %3892 = vmatprep.mubr.bf16.mxu0 %v3393
        %3893 = vmatmul.mubr.bf16.gmra.mrb[0].mxu0 %v3392
        %v3894 = vpop.f32.mrb[0].mxu0
        %v3895 = vadd.f32 %v3443, %v3894
        %v3896 = vpop.f32.mrb[0].mxu0
        %v3897 = vadd.f32 %v3447, %v3896
        %v3898 = vpop.f32.mrb[0].mxu0
        %v3899 = vadd.f32 %v3443, %v3898
        %v3900 = vpop.f32.mrb[0].mxu0
        %v3901 = vadd.f32 %v3447, %v3900
        %3902 = vmatprep.mubr.bf16.mxu0 %v3395
        %3903 = vmatmul.mubr.bf16.gmra.mrb[0].mxu0 %v3394
        %v3904 = vpop.f32.mrb[0].mxu0
        %v3905 = vadd.f32 %v3443, %v3904
        %v3906 = vpop.f32.mrb[0].mxu0
        %v3907 = vadd.f32 %v3447, %v3906
        %v3908 = vpop.f32.mrb[0].mxu0
        %v3909 = vadd.f32 %v3443, %v3908
        %v3910 = vpop.f32.mrb[0].mxu0
        %v3911 = vadd.f32 %v3447, %v3910
        %3912 = vmatprep.mubr.bf16.mxu0 %v3397
        %3913 = vmatmul.mubr.bf16.gmra.mrb[0].mxu0 %v3396
        %v3914 = vpop.f32.mrb[0].mxu0
        %v3915 = vadd.f32 %v3443, %v3914
        %v3916 = vpop.f32.mrb[0].mxu0
        %v3917 = vadd.f32 %v3447, %v3916
        %v3918 = vpop.f32.mrb[0].mxu0
        %v3919 = vadd.f32 %v3443, %v3918
        %v3920 = vpop.f32.mrb[0].mxu0
        %v3921 = vadd.f32 %v3447, %v3920
        %3922 = vmatprep.mubr.bf16.mxu0 %v3399
        %3923 = vmatmul.mubr.bf16.gmra.mrb[0].mxu0 %v3398
        %v3924 = vpop.f32.mrb[0].mxu0
        %v3925 = vadd.f32 %v3443, %v3924
        %v3926 = vpop.f32.mrb[0].mxu0
        %v3927 = vadd.f32 %v3447, %v3926
        %v3928 = vpop.f32.mrb[0].mxu0
        %v3929 = vadd.f32 %v3443, %v3928
        %v3930 = vpop.f32.mrb[0].mxu0
        %v3931 = vadd.f32 %v3447, %v3930
        %3932 = vmatprep.mubr.bf16.mxu0 %v3401
        %3933 = vmatmul.mubr.bf16.gmra.mrb[0].mxu0 %v3400
        %v3934 = vpop.f32.mrb[0].mxu0
        %v3935 = vadd.f32 %v3443, %v3934
        %v3936 = vpop.f32.mrb[0].mxu0
        %v3937 = vadd.f32 %v3447, %v3936
        %v3938 = vpop.f32.mrb[0].mxu0
        %v3939 = vadd.f32 %v3443, %v3938
        %v3940 = vpop.f32.mrb[0].mxu0
        %v3941 = vadd.f32 %v3447, %v3940
        %3942 = vmatprep.mubr.bf16.mxu0 %v3403
        %3943 = vmatmul.mubr.bf16.gmra.mrb[0].mxu0 %v3402
        %v3944 = vpop.f32.mrb[0].mxu0
        %v3945 = vadd.f32 %v3443, %v3944
        %v3946 = vpop.f32.mrb[0].mxu0
        %v3947 = vadd.f32 %v3447, %v3946
        %v3948 = vpop.f32.mrb[0].mxu0
        %v3949 = vadd.f32 %v3443, %v3948
        %v3950 = vpop.f32.mrb[0].mxu0
        %v3951 = vadd.f32 %v3447, %v3950
        %3952 = vmatprep.mubr.bf16.mxu0 %v3405
        %3953 = vmatmul.mubr.bf16.gmra.mrb[0].mxu0 %v3404
        %v3954 = vpop.f32.mrb[0].mxu0
        %v3955 = vadd.f32 %v3443, %v3954
        %v3956 = vpop.f32.mrb[0].mxu0
        %v3957 = vadd.f32 %v3447, %v3956
        %v3958 = vpop.f32.mrb[0].mxu0
        %v3959 = vadd.f32 %v3443, %v3958
        %v3960 = vpop.f32.mrb[0].mxu0
        %v3961 = vadd.f32 %v3447, %v3960
        %3962 = vdwg.mxu0
        %v3963 = vsub.f32 %v3645, %v583
        %v3964 = vsub.f32 %v3647, %v584
        %v3965 = vsub.f32 %v3649, %v585
        %v3966 = vsub.f32 %v3651, %v586
        %v3967 = vsub.f32 %v3655, %v587
        %v3968 = vsub.f32 %v3657, %v588
        %v3969 = vsub.f32 %v3659, %v589
        %v3970 = vsub.f32 %v3661, %v590
        %v3971 = vsub.f32 %v3665, %v591
        %v3972 = vsub.f32 %v3667, %v592
        %v3973 = vsub.f32 %v3669, %v593
        %v3974 = vsub.f32 %v3671, %v594
        %v3975 = vsub.f32 %v3675, %v595
        %v3976 = vsub.f32 %v3677, %v596
        %v3977 = vsub.f32 %v3679, %v597
        %v3978 = vsub.f32 %v3681, %v598
        %v3979 = vsub.f32 %v3685, %v599
        %v3980 = vsub.f32 %v3687, %v600
        %v3981 = vsub.f32 %v3689, %v601
        %v3982 = vsub.f32 %v3691, %v602
        %v3983 = vsub.f32 %v3695, %v603
        %v3984 = vsub.f32 %v3697, %v604
        %v3985 = vsub.f32 %v3699, %v605
        %v3986 = vsub.f32 %v3701, %v606
        %v3987 = vsub.f32 %v3705, %v607
        %v3988 = vsub.f32 %v3707, %v608
        %v3989 = vsub.f32 %v3709, %v609
        %v3990 = vsub.f32 %v3711, %v610
        %v3991 = vsub.f32 %v3715, %v611
        %v3992 = vsub.f32 %v3717, %v612
        %v3993 = vsub.f32 %v3719, %v613
        %v3994 = vsub.f32 %v3721, %v614
        %v3995 = vsub.f32 %v3725, %v615
        %v3996 = vsub.f32 %v3727, %v616
        %v3997 = vsub.f32 %v3729, %v617
        %v3998 = vsub.f32 %v3731, %v618
        %v3999 = vsub.f32 %v3735, %v619
        %v4000 = vsub.f32 %v3737, %v620
        %v4001 = vsub.f32 %v3739, %v621
        %v4002 = vsub.f32 %v3741, %v622
        %v4003 = vsub.f32 %v3745, %v623
        %v4004 = vsub.f32 %v3747, %v624
        %v4005 = vsub.f32 %v3749, %v625
        %v4006 = vsub.f32 %v3751, %v626
        %v4007 = vsub.f32 %v3755, %v627
        %v4008 = vsub.f32 %v3757, %v628
        %v4009 = vsub.f32 %v3759, %v629
        %v4010 = vsub.f32 %v3761, %v630
        %v4011 = vsub.f32 %v3765, %v631
        %v4012 = vsub.f32 %v3767, %v632
        %v4013 = vsub.f32 %v3769, %v633
        %v4014 = vsub.f32 %v3771, %v634
        %v4015 = vsub.f32 %v3775, %v635
        %v4016 = vsub.f32 %v3777, %v636
        %v4017 = vsub.f32 %v3779, %v637
        %v4018 = vsub.f32 %v3781, %v638
        %v4019 = vsub.f32 %v3785, %v639
        %v4020 = vsub.f32 %v3787, %v640
        %v4021 = vsub.f32 %v3789, %v641
        %v4022 = vsub.f32 %v3791, %v642
        %v4023 = vsub.f32 %v3795, %v643
        %v4024 = vsub.f32 %v3797, %v644
        %v4025 = vsub.f32 %v3799, %v645
        %v4026 = vsub.f32 %v3801, %v646
        %v4027 = vsub.f32 %v3805, %v647
        %v4028 = vsub.f32 %v3807, %v648
        %v4029 = vsub.f32 %v3809, %v649
        %v4030 = vsub.f32 %v3811, %v650
        %v4031 = vsub.f32 %v3815, %v651
        %v4032 = vsub.f32 %v3817, %v652
        %v4033 = vsub.f32 %v3819, %v653
        %v4034 = vsub.f32 %v3821, %v654
        %v4035 = vsub.f32 %v3825, %v655
        %v4036 = vsub.f32 %v3827, %v656
        %v4037 = vsub.f32 %v3829, %v657
        %v4038 = vsub.f32 %v3831, %v658
        %v4039 = vsub.f32 %v3835, %v659
        %v4040 = vsub.f32 %v3837, %v660
        %v4041 = vsub.f32 %v3839, %v661
        %v4042 = vsub.f32 %v3841, %v662
        %v4043 = vsub.f32 %v3845, %v663
        %v4044 = vsub.f32 %v3847, %v664
        %v4045 = vsub.f32 %v3849, %v665
        %v4046 = vsub.f32 %v3851, %v666
        %v4047 = vsub.f32 %v3855, %v667
        %v4048 = vsub.f32 %v3857, %v668
        %v4049 = vsub.f32 %v3859, %v669
        %v4050 = vsub.f32 %v3861, %v670
        %v4051 = vsub.f32 %v3865, %v671
        %v4052 = vsub.f32 %v3867, %v672
        %v4053 = vsub.f32 %v3869, %v673
        %v4054 = vsub.f32 %v3871, %v674
        %v4055 = vsub.f32 %v3875, %v675
        %v4056 = vsub.f32 %v3877, %v676
        %v4057 = vsub.f32 %v3879, %v677
        %v4058 = vsub.f32 %v3881, %v678
        %v4059 = vsub.f32 %v3885, %v679
        %v4060 = vsub.f32 %v3887, %v680
        %v4061 = vsub.f32 %v3889, %v681
        %v4062 = vsub.f32 %v3891, %v682
        %v4063 = vsub.f32 %v3895, %v683
        %v4064 = vsub.f32 %v3897, %v684
        %v4065 = vsub.f32 %v3899, %v685
        %v4066 = vsub.f32 %v3901, %v686
        %v4067 = vsub.f32 %v3905, %v687
        %v4068 = vsub.f32 %v3907, %v688
        %v4069 = vsub.f32 %v3909, %v689
        %v4070 = vsub.f32 %v3911, %v690
        %v4071 = vsub.f32 %v3915, %v691
        %v4072 = vsub.f32 %v3917, %v692
        %v4073 = vsub.f32 %v3919, %v693
        %v4074 = vsub.f32 %v3921, %v694
        %v4075 = vsub.f32 %v3925, %v695
        %v4076 = vsub.f32 %v3927, %v696
        %v4077 = vsub.f32 %v3929, %v697
        %v4078 = vsub.f32 %v3931, %v698
        %v4079 = vsub.f32 %v3935, %v699
        %v4080 = vsub.f32 %v3937, %v700
        %v4081 = vsub.f32 %v3939, %v701
        %v4082 = vsub.f32 %v3941, %v702
        %v4083 = vsub.f32 %v3945, %v703
        %v4084 = vsub.f32 %v3947, %v704
        %v4085 = vsub.f32 %v3949, %v705
        %v4086 = vsub.f32 %v3951, %v706
        %v4087 = vsub.f32 %v3955, %v707
        %v4088 = vsub.f32 %v3957, %v708
        %v4089 = vsub.f32 %v3959, %v709
        %v4090 = vsub.f32 %v3961, %v710
        %v4091 = vmul.f32 %v3963, %v3963
        %v4092 = vmul.f32 %v3964, %v3964
        %v4093 = vmul.f32 %v3965, %v3965
        %v4094 = vmul.f32 %v3966, %v3966
        %v4095 = vmul.f32 %v3967, %v3967
        %v4096 = vmul.f32 %v3968, %v3968
        %v4097 = vmul.f32 %v3969, %v3969
        %v4098 = vmul.f32 %v3970, %v3970
        %v4099 = vmul.f32 %v3971, %v3971
        %v4100 = vmul.f32 %v3972, %v3972
        %v4101 = vmul.f32 %v3973, %v3973
        %v4102 = vmul.f32 %v3974, %v3974
        %v4103 = vmul.f32 %v3975, %v3975
        %v4104 = vmul.f32 %v3976, %v3976
        %v4105 = vmul.f32 %v3977, %v3977
        %v4106 = vmul.f32 %v3978, %v3978
        %v4107 = vmul.f32 %v3979, %v3979
        %v4108 = vmul.f32 %v3980, %v3980
        %v4109 = vmul.f32 %v3981, %v3981
        %v4110 = vmul.f32 %v3982, %v3982
        %v4111 = vmul.f32 %v3983, %v3983
        %v4112 = vmul.f32 %v3984, %v3984
        %v4113 = vmul.f32 %v3985, %v3985
        %v4114 = vmul.f32 %v3986, %v3986
        %v4115 = vmul.f32 %v3987, %v3987
        %v4116 = vmul.f32 %v3988, %v3988
        %v4117 = vmul.f32 %v3989, %v3989
        %v4118 = vmul.f32 %v3990, %v3990
        %v4119 = vmul.f32 %v3991, %v3991
        %v4120 = vmul.f32 %v3992, %v3992
        %v4121 = vmul.f32 %v3993, %v3993
        %v4122 = vmul.f32 %v3994, %v3994
        %v4123 = vmul.f32 %v3995, %v3995
        %v4124 = vmul.f32 %v3996, %v3996
        %v4125 = vmul.f32 %v3997, %v3997
        %v4126 = vmul.f32 %v3998, %v3998
        %v4127 = vmul.f32 %v3999, %v3999
        %v4128 = vmul.f32 %v4000, %v4000
        %v4129 = vmul.f32 %v4001, %v4001
        %v4130 = vmul.f32 %v4002, %v4002
        %v4131 = vmul.f32 %v4003, %v4003
        %v4132 = vmul.f32 %v4004, %v4004
        %v4133 = vmul.f32 %v4005, %v4005
        %v4134 = vmul.f32 %v4006, %v4006
        %v4135 = vmul.f32 %v4007, %v4007
        %v4136 = vmul.f32 %v4008, %v4008
        %v4137 = vmul.f32 %v4009, %v4009
        %v4138 = vmul.f32 %v4010, %v4010
        %v4139 = vmul.f32 %v4011, %v4011
        %v4140 = vmul.f32 %v4012, %v4012
        %v4141 = vmul.f32 %v4013, %v4013
        %v4142 = vmul.f32 %v4014, %v4014
        %v4143 = vmul.f32 %v4015, %v4015
        %v4144 = vmul.f32 %v4016, %v4016
        %v4145 = vmul.f32 %v4017, %v4017
        %v4146 = vmul.f32 %v4018, %v4018
        %v4147 = vmul.f32 %v4019, %v4019
        %v4148 = vmul.f32 %v4020, %v4020
        %v4149 = vmul.f32 %v4021, %v4021
        %v4150 = vmul.f32 %v4022, %v4022
        %v4151 = vmul.f32 %v4023, %v4023
        %v4152 = vmul.f32 %v4024, %v4024
        %v4153 = vmul.f32 %v4025, %v4025
        %v4154 = vmul.f32 %v4026, %v4026
        %v4155 = vmul.f32 %v4027, %v4027
        %v4156 = vmul.f32 %v4028, %v4028
        %v4157 = vmul.f32 %v4029, %v4029
        %v4158 = vmul.f32 %v4030, %v4030
        %v4159 = vmul.f32 %v4031, %v4031
        %v4160 = vmul.f32 %v4032, %v4032
        %v4161 = vmul.f32 %v4033, %v4033
        %v4162 = vmul.f32 %v4034, %v4034
        %v4163 = vmul.f32 %v4035, %v4035
        %v4164 = vmul.f32 %v4036, %v4036
        %v4165 = vmul.f32 %v4037, %v4037
        %v4166 = vmul.f32 %v4038, %v4038
        %v4167 = vmul.f32 %v4039, %v4039
        %v4168 = vmul.f32 %v4040, %v4040
        %v4169 = vmul.f32 %v4041, %v4041
        %v4170 = vmul.f32 %v4042, %v4042
        %v4171 = vmul.f32 %v4043, %v4043
        %v4172 = vmul.f32 %v4044, %v4044
        %v4173 = vmul.f32 %v4045, %v4045
        %v4174 = vmul.f32 %v4046, %v4046
        %v4175 = vmul.f32 %v4047, %v4047
        %v4176 = vmul.f32 %v4048, %v4048
        %v4177 = vmul.f32 %v4049, %v4049
        %v4178 = vmul.f32 %v4050, %v4050
        %v4179 = vmul.f32 %v4051, %v4051
        %v4180 = vmul.f32 %v4052, %v4052
        %v4181 = vmul.f32 %v4053, %v4053
        %v4182 = vmul.f32 %v4054, %v4054
        %v4183 = vmul.f32 %v4055, %v4055
        %v4184 = vmul.f32 %v4056, %v4056
        %v4185 = vmul.f32 %v4057, %v4057
        %v4186 = vmul.f32 %v4058, %v4058
        %v4187 = vmul.f32 %v4059, %v4059
        %v4188 = vmul.f32 %v4060, %v4060
        %v4189 = vmul.f32 %v4061, %v4061
        %v4190 = vmul.f32 %v4062, %v4062
        %v4191 = vmul.f32 %v4063, %v4063
        %v4192 = vmul.f32 %v4064, %v4064
        %v4193 = vmul.f32 %v4065, %v4065
        %v4194 = vmul.f32 %v4066, %v4066
        %v4195 = vmul.f32 %v4067, %v4067
        %v4196 = vmul.f32 %v4068, %v4068
        %v4197 = vmul.f32 %v4069, %v4069
        %v4198 = vmul.f32 %v4070, %v4070
        %v4199 = vmul.f32 %v4071, %v4071
        %v4200 = vmul.f32 %v4072, %v4072
        %v4201 = vmul.f32 %v4073, %v4073
        %v4202 = vmul.f32 %v4074, %v4074
        %v4203 = vmul.f32 %v4075, %v4075
        %v4204 = vmul.f32 %v4076, %v4076
        %v4205 = vmul.f32 %v4077, %v4077
        %v4206 = vmul.f32 %v4078, %v4078
        %v4207 = vmul.f32 %v4079, %v4079
        %v4208 = vmul.f32 %v4080, %v4080
        %v4209 = vmul.f32 %v4081, %v4081
        %v4210 = vmul.f32 %v4082, %v4082
        %v4211 = vmul.f32 %v4083, %v4083
        %v4212 = vmul.f32 %v4084, %v4084
        %v4213 = vmul.f32 %v4085, %v4085
        %v4214 = vmul.f32 %v4086, %v4086
        %v4215 = vmul.f32 %v4087, %v4087
        %v4216 = vmul.f32 %v4088, %v4088
        %v4217 = vmul.f32 %v4089, %v4089
        %v4218 = vmul.f32 %v4090, %v4090
        %v4219 = vadd.f32 %v4091, %v4092
        %v4220 = vadd.f32 %v4219, %v4093
        %v4221 = vadd.f32 %v4220, %v4094
        %v4222 = vadd.f32 %v4221, %v4095
        %v4223 = vadd.f32 %v4222, %v4096
        %v4224 = vadd.f32 %v4223, %v4097
        %v4225 = vadd.f32 %v4224, %v4098
        %v4226 = vadd.f32 %v4225, %v4099
        %v4227 = vadd.f32 %v4226, %v4100
        %v4228 = vadd.f32 %v4227, %v4101
        %v4229 = vadd.f32 %v4228, %v4102
        %v4230 = vadd.f32 %v4229, %v4103
        %v4231 = vadd.f32 %v4230, %v4104
        %v4232 = vadd.f32 %v4231, %v4105
        %v4233 = vadd.f32 %v4232, %v4106
        %v4234 = vadd.f32 %v4233, %v4107
        %v4235 = vadd.f32 %v4234, %v4108
        %v4236 = vadd.f32 %v4235, %v4109
        %v4237 = vadd.f32 %v4236, %v4110
        %v4238 = vadd.f32 %v4237, %v4111
        %v4239 = vadd.f32 %v4238, %v4112
        %v4240 = vadd.f32 %v4239, %v4113
        %v4241 = vadd.f32 %v4240, %v4114
        %v4242 = vadd.f32 %v4241, %v4115
        %v4243 = vadd.f32 %v4242, %v4116
        %v4244 = vadd.f32 %v4243, %v4117
        %v4245 = vadd.f32 %v4244, %v4118
        %v4246 = vadd.f32 %v4245, %v4119
        %v4247 = vadd.f32 %v4246, %v4120
        %v4248 = vadd.f32 %v4247, %v4121
        %v4249 = vadd.f32 %v4248, %v4122
        %v4250 = vadd.f32 %v4249, %v4123
        %v4251 = vadd.f32 %v4250, %v4124
        %v4252 = vadd.f32 %v4251, %v4125
        %v4253 = vadd.f32 %v4252, %v4126
        %v4254 = vadd.f32 %v4253, %v4127
        %v4255 = vadd.f32 %v4254, %v4128
        %v4256 = vadd.f32 %v4255, %v4129
        %v4257 = vadd.f32 %v4256, %v4130
        %v4258 = vadd.f32 %v4257, %v4131
        %v4259 = vadd.f32 %v4258, %v4132
        %v4260 = vadd.f32 %v4259, %v4133
        %v4261 = vadd.f32 %v4260, %v4134
        %v4262 = vadd.f32 %v4261, %v4135
        %v4263 = vadd.f32 %v4262, %v4136
        %v4264 = vadd.f32 %v4263, %v4137
        %v4265 = vadd.f32 %v4264, %v4138
        %v4266 = vadd.f32 %v4265, %v4139
        %v4267 = vadd.f32 %v4266, %v4140
        %v4268 = vadd.f32 %v4267, %v4141
        %v4269 = vadd.f32 %v4268, %v4142
        %v4270 = vadd.f32 %v4269, %v4143
        %v4271 = vadd.f32 %v4270, %v4144
        %v4272 = vadd.f32 %v4271, %v4145
        %v4273 = vadd.f32 %v4272, %v4146
        %v4274 = vadd.f32 %v4273, %v4147
        %v4275 = vadd.f32 %v4274, %v4148
        %v4276 = vadd.f32 %v4275, %v4149
        %v4277 = vadd.f32 %v4276, %v4150
        %v4278 = vadd.f32 %v4277, %v4151
        %v4279 = vadd.f32 %v4278, %v4152
        %v4280 = vadd.f32 %v4279, %v4153
        %v4281 = vadd.f32 %v4280, %v4154
        %v4282 = vadd.f32 %v4281, %v4155
        %v4283 = vadd.f32 %v4282, %v4156
        %v4284 = vadd.f32 %v4283, %v4157
        %v4285 = vadd.f32 %v4284, %v4158
        %v4286 = vadd.f32 %v4285, %v4159
        %v4287 = vadd.f32 %v4286, %v4160
        %v4288 = vadd.f32 %v4287, %v4161
        %v4289 = vadd.f32 %v4288, %v4162
        %v4290 = vadd.f32 %v4289, %v4163
        %v4291 = vadd.f32 %v4290, %v4164
        %v4292 = vadd.f32 %v4291, %v4165
        %v4293 = vadd.f32 %v4292, %v4166
        %v4294 = vadd.f32 %v4293, %v4167
        %v4295 = vadd.f32 %v4294, %v4168
        %v4296 = vadd.f32 %v4295, %v4169
        %v4297 = vadd.f32 %v4296, %v4170
        %v4298 = vadd.f32 %v4297, %v4171
        %v4299 = vadd.f32 %v4298, %v4172
        %v4300 = vadd.f32 %v4299, %v4173
        %v4301 = vadd.f32 %v4300, %v4174
        %v4302 = vadd.f32 %v4301, %v4175
        %v4303 = vadd.f32 %v4302, %v4176
        %v4304 = vadd.f32 %v4303, %v4177
        %v4305 = vadd.f32 %v4304, %v4178
        %v4306 = vadd.f32 %v4305, %v4179
        %v4307 = vadd.f32 %v4306, %v4180
        %v4308 = vadd.f32 %v4307, %v4181
        %v4309 = vadd.f32 %v4308, %v4182
        %v4310 = vadd.f32 %v4309, %v4183
        %v4311 = vadd.f32 %v4310, %v4184
        %v4312 = vadd.f32 %v4311, %v4185
        %v4313 = vadd.f32 %v4312, %v4186
        %v4314 = vadd.f32 %v4313, %v4187
        %v4315 = vadd.f32 %v4314, %v4188
        %v4316 = vadd.f32 %v4315, %v4189
        %v4317 = vadd.f32 %v4316, %v4190
        %v4318 = vadd.f32 %v4317, %v4191
        %v4319 = vadd.f32 %v4318, %v4192
        %v4320 = vadd.f32 %v4319, %v4193
        %v4321 = vadd.f32 %v4320, %v4194
        %v4322 = vadd.f32 %v4321, %v4195
        %v4323 = vadd.f32 %v4322, %v4196
        %v4324 = vadd.f32 %v4323, %v4197
        %v4325 = vadd.f32 %v4324, %v4198
        %v4326 = vadd.f32 %v4325, %v4199
        %v4327 = vadd.f32 %v4326, %v4200
        %v4328 = vadd.f32 %v4327, %v4201
        %v4329 = vadd.f32 %v4328, %v4202
        %v4330 = vadd.f32 %v4329, %v4203
        %v4331 = vadd.f32 %v4330, %v4204
        %v4332 = vadd.f32 %v4331, %v4205
        %v4333 = vadd.f32 %v4332, %v4206
        %v4334 = vadd.f32 %v4333, %v4207
        %v4335 = vadd.f32 %v4334, %v4208
        %v4336 = vadd.f32 %v4335, %v4209
        %v4337 = vadd.f32 %v4336, %v4210
        %v4338 = vadd.f32 %v4337, %v4211
        %v4339 = vadd.f32 %v4338, %v4212
        %v4340 = vadd.f32 %v4339, %v4213
        %v4341 = vadd.f32 %v4340, %v4214
        %v4342 = vadd.f32 %v4341, %v4215
        %v4343 = vadd.f32 %v4342, %v4216
        %v4344 = vadd.f32 %v4343, %v4217
        %v4345 = vadd.f32 %v4344, %v4218
        %4346 = vadd.xlane.f32.xlu0 %v4345
        %v4347 = vpop.xlane.xlu0 %4346
        %v4348 = vrot.slane %v4347, 4
        %v4349 = vadd.f32 %v4347, %v4348
        %v4350 = vrot.slane %v4349, 2
        %v4351 = vadd.f32 %v4349, %v4350
        %v4352 = vrot.slane %v4351, 1
        %v4353 = vadd.f32 %v4351, %v4352
        %s4354 = vtos %v4353
        %v4355 = vmul.f32 %v2402, %v2402
        %v4356 = vmul.f32 %v2404, %v2404
        %v4357 = vmul.f32 %v2406, %v2406
        %v4358 = vmul.f32 %v2408, %v2408
        %v4359 = vmul.f32 %v2410, %v2410
        %v4360 = vmul.f32 %v2412, %v2412
        %v4361 = vmul.f32 %v2414, %v2414
        %v4362 = vmul.f32 %v2416, %v2416
        %v4363 = vmul.f32 %v2418, %v2418
        %v4364 = vmul.f32 %v2420, %v2420
        %v4365 = vmul.f32 %v2422, %v2422
        %v4366 = vmul.f32 %v2424, %v2424
        %v4367 = vmul.f32 %v2426, %v2426
        %v4368 = vmul.f32 %v2428, %v2428
        %v4369 = vmul.f32 %v2430, %v2430
        %v4370 = vmul.f32 %v2432, %v2432
        %v4371 = vmul.f32 %v2434, %v2434
        %v4372 = vmul.f32 %v2436, %v2436
        %v4373 = vmul.f32 %v2438, %v2438
        %v4374 = vmul.f32 %v2440, %v2440
        %v4375 = vmul.f32 %v2442, %v2442
        %v4376 = vmul.f32 %v2444, %v2444
        %v4377 = vmul.f32 %v2446, %v2446
        %v4378 = vmul.f32 %v2448, %v2448
        %v4379 = vmul.f32 %v2450, %v2450
        %v4380 = vmul.f32 %v2452, %v2452
        %v4381 = vmul.f32 %v2454, %v2454
        %v4382 = vmul.f32 %v2456, %v2456
        %v4383 = vmul.f32 %v2458, %v2458
        %v4384 = vmul.f32 %v2460, %v2460
        %v4385 = vmul.f32 %v2462, %v2462
        %v4386 = vmul.f32 %v2464, %v2464
        %v4387 = vmul.f32 %v2466, %v2466
        %v4388 = vmul.f32 %v2468, %v2468
        %v4389 = vmul.f32 %v2470, %v2470
        %v4390 = vmul.f32 %v2472, %v2472
        %v4391 = vmul.f32 %v2474, %v2474
        %v4392 = vmul.f32 %v2476, %v2476
        %v4393 = vmul.f32 %v2478, %v2478
        %v4394 = vmul.f32 %v2480, %v2480
        %v4395 = vmul.f32 %v2482, %v2482
        %v4396 = vmul.f32 %v2484, %v2484
        %v4397 = vmul.f32 %v2486, %v2486
        %v4398 = vmul.f32 %v2488, %v2488
        %v4399 = vmul.f32 %v2490, %v2490
        %v4400 = vmul.f32 %v2492, %v2492
        %v4401 = vmul.f32 %v2494, %v2494
        %v4402 = vmul.f32 %v2496, %v2496
        %v4403 = vmul.f32 %v2498, %v2498
        %v4404 = vmul.f32 %v2500, %v2500
        %v4405 = vmul.f32 %v2502, %v2502
        %v4406 = vmul.f32 %v2504, %v2504
        %v4407 = vmul.f32 %v2506, %v2506
        %v4408 = vmul.f32 %v2508, %v2508
        %v4409 = vmul.f32 %v2510, %v2510
        %v4410 = vmul.f32 %v2512, %v2512
        %v4411 = vmul.f32 %v2514, %v2514
        %v4412 = vmul.f32 %v2516, %v2516
        %v4413 = vmul.f32 %v2518, %v2518
        %v4414 = vmul.f32 %v2520, %v2520
        %v4415 = vmul.f32 %v2522, %v2522
        %v4416 = vmul.f32 %v2524, %v2524
        %v4417 = vmul.f32 %v2526, %v2526
        %v4418 = vmul.f32 %v2528, %v2528
        %v4419 = vmul.f32 %v2019, %v2019
        %v4420 = vmul.f32 %v2023, %v2023
        %v4421 = vmul.f32 %v2029, %v2029
        %v4422 = vmul.f32 %v2033, %v2033
        %v4423 = vmul.f32 %v2039, %v2039
        %v4424 = vmul.f32 %v2043, %v2043
        %v4425 = vmul.f32 %v2049, %v2049
        %v4426 = vmul.f32 %v2053, %v2053
        %v4427 = vmul.f32 %v2059, %v2059
        %v4428 = vmul.f32 %v2063, %v2063
        %v4429 = vmul.f32 %v2069, %v2069
        %v4430 = vmul.f32 %v2073, %v2073
        %v4431 = vmul.f32 %v2079, %v2079
        %v4432 = vmul.f32 %v2083, %v2083
        %v4433 = vmul.f32 %v2089, %v2089
        %v4434 = vmul.f32 %v2093, %v2093
        %v4435 = vmul.f32 %v2099, %v2099
        %v4436 = vmul.f32 %v2103, %v2103
        %v4437 = vmul.f32 %v2109, %v2109
        %v4438 = vmul.f32 %v2113, %v2113
        %v4439 = vmul.f32 %v2119, %v2119
        %v4440 = vmul.f32 %v2123, %v2123
        %v4441 = vmul.f32 %v2129, %v2129
        %v4442 = vmul.f32 %v2133, %v2133
        %v4443 = vmul.f32 %v2139, %v2139
        %v4444 = vmul.f32 %v2143, %v2143
        %v4445 = vmul.f32 %v2149, %v2149
        %v4446 = vmul.f32 %v2153, %v2153
        %v4447 = vmul.f32 %v2159, %v2159
        %v4448 = vmul.f32 %v2163, %v2163
        %v4449 = vmul.f32 %v2169, %v2169
        %v4450 = vmul.f32 %v2173, %v2173
        %v4451 = vmul.f32 %v2179, %v2179
        %v4452 = vmul.f32 %v2183, %v2183
        %v4453 = vmul.f32 %v2189, %v2189
        %v4454 = vmul.f32 %v2193, %v2193
        %v4455 = vmul.f32 %v2199, %v2199
        %v4456 = vmul.f32 %v2203, %v2203
        %v4457 = vmul.f32 %v2209, %v2209
        %v4458 = vmul.f32 %v2213, %v2213
        %v4459 = vmul.f32 %v2219, %v2219
        %v4460 = vmul.f32 %v2223, %v2223
        %v4461 = vmul.f32 %v2229, %v2229
        %v4462 = vmul.f32 %v2233, %v2233
        %v4463 = vmul.f32 %v2239, %v2239
        %v4464 = vmul.f32 %v2243, %v2243
        %v4465 = vmul.f32 %v2249, %v2249
        %v4466 = vmul.f32 %v2253, %v2253
        %v4467 = vmul.f32 %v2259, %v2259
        %v4468 = vmul.f32 %v2263, %v2263
        %v4469 = vmul.f32 %v2269, %v2269
        %v4470 = vmul.f32 %v2273, %v2273
        %v4471 = vmul.f32 %v2279, %v2279
        %v4472 = vmul.f32 %v2283, %v2283
        %v4473 = vmul.f32 %v2289, %v2289
        %v4474 = vmul.f32 %v2293, %v2293
        %v4475 = vmul.f32 %v2299, %v2299
        %v4476 = vmul.f32 %v2303, %v2303
        %v4477 = vmul.f32 %v2309, %v2309
        %v4478 = vmul.f32 %v2313, %v2313
        %v4479 = vmul.f32 %v2319, %v2319
        %v4480 = vmul.f32 %v2323, %v2323
        %v4481 = vmul.f32 %v2329, %v2329
        %v4482 = vmul.f32 %v2333, %v2333
        %v4483 = vadd.f32 %v4355, %v4419
        %v4484 = vadd.f32 %v4356, %v4420
        %v4485 = vadd.f32 %v4357, %v4421
        %v4486 = vadd.f32 %v4358, %v4422
        %v4487 = vadd.f32 %v4359, %v4423
        %v4488 = vadd.f32 %v4360, %v4424
        %v4489 = vadd.f32 %v4361, %v4425
        %v4490 = vadd.f32 %v4362, %v4426
        %v4491 = vadd.f32 %v4363, %v4427
        %v4492 = vadd.f32 %v4364, %v4428
        %v4493 = vadd.f32 %v4365, %v4429
        %v4494 = vadd.f32 %v4366, %v4430
        %v4495 = vadd.f32 %v4367, %v4431
        %v4496 = vadd.f32 %v4368, %v4432
        %v4497 = vadd.f32 %v4369, %v4433
        %v4498 = vadd.f32 %v4370, %v4434
        %v4499 = vadd.f32 %v4371, %v4435
        %v4500 = vadd.f32 %v4372, %v4436
        %v4501 = vadd.f32 %v4373, %v4437
        %v4502 = vadd.f32 %v4374, %v4438
        %v4503 = vadd.f32 %v4375, %v4439
        %v4504 = vadd.f32 %v4376, %v4440
        %v4505 = vadd.f32 %v4377, %v4441
        %v4506 = vadd.f32 %v4378, %v4442
        %v4507 = vadd.f32 %v4379, %v4443
        %v4508 = vadd.f32 %v4380, %v4444
        %v4509 = vadd.f32 %v4381, %v4445
        %v4510 = vadd.f32 %v4382, %v4446
        %v4511 = vadd.f32 %v4383, %v4447
        %v4512 = vadd.f32 %v4384, %v4448
        %v4513 = vadd.f32 %v4385, %v4449
        %v4514 = vadd.f32 %v4386, %v4450
        %v4515 = vadd.f32 %v4387, %v4451
        %v4516 = vadd.f32 %v4388, %v4452
        %v4517 = vadd.f32 %v4389, %v4453
        %v4518 = vadd.f32 %v4390, %v4454
        %v4519 = vadd.f32 %v4391, %v4455
        %v4520 = vadd.f32 %v4392, %v4456
        %v4521 = vadd.f32 %v4393, %v4457
        %v4522 = vadd.f32 %v4394, %v4458
        %v4523 = vadd.f32 %v4395, %v4459
        %v4524 = vadd.f32 %v4396, %v4460
        %v4525 = vadd.f32 %v4397, %v4461
        %v4526 = vadd.f32 %v4398, %v4462
        %v4527 = vadd.f32 %v4399, %v4463
        %v4528 = vadd.f32 %v4400, %v4464
        %v4529 = vadd.f32 %v4401, %v4465
        %v4530 = vadd.f32 %v4402, %v4466
        %v4531 = vadd.f32 %v4403, %v4467
        %v4532 = vadd.f32 %v4404, %v4468
        %v4533 = vadd.f32 %v4405, %v4469
        %v4534 = vadd.f32 %v4406, %v4470
        %v4535 = vadd.f32 %v4407, %v4471
        %v4536 = vadd.f32 %v4408, %v4472
        %v4537 = vadd.f32 %v4409, %v4473
        %v4538 = vadd.f32 %v4410, %v4474
        %v4539 = vadd.f32 %v4411, %v4475
        %v4540 = vadd.f32 %v4412, %v4476
        %v4541 = vadd.f32 %v4413, %v4477
        %v4542 = vadd.f32 %v4414, %v4478
        %v4543 = vadd.f32 %v4415, %v4479
        %v4544 = vadd.f32 %v4416, %v4480
        %v4545 = vadd.f32 %v4417, %v4481
        %v4546 = vadd.f32 %v4418, %v4482
        %v4547 = vsub.f32 %v4483, 1.0
        %v4548 = vsub.f32 %v4484, 1.0
        %v4549 = vsub.f32 %v4485, 1.0
        %v4550 = vsub.f32 %v4486, 1.0
        %v4551 = vsub.f32 %v4487, 1.0
        %v4552 = vsub.f32 %v4488, 1.0
        %v4553 = vsub.f32 %v4489, 1.0
        %v4554 = vsub.f32 %v4490, 1.0
        %v4555 = vsub.f32 %v4491, 1.0
        %v4556 = vsub.f32 %v4492, 1.0
        %v4557 = vsub.f32 %v4493, 1.0
        %v4558 = vsub.f32 %v4494, 1.0
        %v4559 = vsub.f32 %v4495, 1.0
        %v4560 = vsub.f32 %v4496, 1.0
        %v4561 = vsub.f32 %v4497, 1.0
        %v4562 = vsub.f32 %v4498, 1.0
        %v4563 = vsub.f32 %v4499, 1.0
        %v4564 = vsub.f32 %v4500, 1.0
        %v4565 = vsub.f32 %v4501, 1.0
        %v4566 = vsub.f32 %v4502, 1.0
        %v4567 = vsub.f32 %v4503, 1.0
        %v4568 = vsub.f32 %v4504, 1.0
        %v4569 = vsub.f32 %v4505, 1.0
        %v4570 = vsub.f32 %v4506, 1.0
        %v4571 = vsub.f32 %v4507, 1.0
        %v4572 = vsub.f32 %v4508, 1.0
        %v4573 = vsub.f32 %v4509, 1.0
        %v4574 = vsub.f32 %v4510, 1.0
        %v4575 = vsub.f32 %v4511, 1.0
        %v4576 = vsub.f32 %v4512, 1.0
        %v4577 = vsub.f32 %v4513, 1.0
        %v4578 = vsub.f32 %v4514, 1.0
        %v4579 = vsub.f32 %v4515, 1.0
        %v4580 = vsub.f32 %v4516, 1.0
        %v4581 = vsub.f32 %v4517, 1.0
        %v4582 = vsub.f32 %v4518, 1.0
        %v4583 = vsub.f32 %v4519, 1.0
        %v4584 = vsub.f32 %v4520, 1.0
        %v4585 = vsub.f32 %v4521, 1.0
        %v4586 = vsub.f32 %v4522, 1.0
        %v4587 = vsub.f32 %v4523, 1.0
        %v4588 = vsub.f32 %v4524, 1.0
        %v4589 = vsub.f32 %v4525, 1.0
        %v4590 = vsub.f32 %v4526, 1.0
        %v4591 = vsub.f32 %v4527, 1.0
        %v4592 = vsub.f32 %v4528, 1.0
        %v4593 = vsub.f32 %v4529, 1.0
        %v4594 = vsub.f32 %v4530, 1.0
        %v4595 = vsub.f32 %v4531, 1.0
        %v4596 = vsub.f32 %v4532, 1.0
        %v4597 = vsub.f32 %v4533, 1.0
        %v4598 = vsub.f32 %v4534, 1.0
        %v4599 = vsub.f32 %v4535, 1.0
        %v4600 = vsub.f32 %v4536, 1.0
        %v4601 = vsub.f32 %v4537, 1.0
        %v4602 = vsub.f32 %v4538, 1.0
        %v4603 = vsub.f32 %v4539, 1.0
        %v4604 = vsub.f32 %v4540, 1.0
        %v4605 = vsub.f32 %v4541, 1.0
        %v4606 = vsub.f32 %v4542, 1.0
        %v4607 = vsub.f32 %v4543, 1.0
        %v4608 = vsub.f32 %v4544, 1.0
        %v4609 = vsub.f32 %v4545, 1.0
        %v4610 = vsub.f32 %v4546, 1.0
        %v4611 = vsub.f32 %v4547, %v2021
        %v4612 = vsub.f32 %v4548, %v2025
        %v4613 = vsub.f32 %v4549, %v2031
        %v4614 = vsub.f32 %v4550, %v2035
        %v4615 = vsub.f32 %v4551, %v2041
        %v4616 = vsub.f32 %v4552, %v2045
        %v4617 = vsub.f32 %v4553, %v2051
        %v4618 = vsub.f32 %v4554, %v2055
        %v4619 = vsub.f32 %v4555, %v2061
        %v4620 = vsub.f32 %v4556, %v2065
        %v4621 = vsub.f32 %v4557, %v2071
        %v4622 = vsub.f32 %v4558, %v2075
        %v4623 = vsub.f32 %v4559, %v2081
        %v4624 = vsub.f32 %v4560, %v2085
        %v4625 = vsub.f32 %v4561, %v2091
        %v4626 = vsub.f32 %v4562, %v2095
        %v4627 = vsub.f32 %v4563, %v2101
        %v4628 = vsub.f32 %v4564, %v2105
        %v4629 = vsub.f32 %v4565, %v2111
        %v4630 = vsub.f32 %v4566, %v2115
        %v4631 = vsub.f32 %v4567, %v2121
        %v4632 = vsub.f32 %v4568, %v2125
        %v4633 = vsub.f32 %v4569, %v2131
        %v4634 = vsub.f32 %v4570, %v2135
        %v4635 = vsub.f32 %v4571, %v2141
        %v4636 = vsub.f32 %v4572, %v2145
        %v4637 = vsub.f32 %v4573, %v2151
        %v4638 = vsub.f32 %v4574, %v2155
        %v4639 = vsub.f32 %v4575, %v2161
        %v4640 = vsub.f32 %v4576, %v2165
        %v4641 = vsub.f32 %v4577, %v2171
        %v4642 = vsub.f32 %v4578, %v2175
        %v4643 = vsub.f32 %v4579, %v2181
        %v4644 = vsub.f32 %v4580, %v2185
        %v4645 = vsub.f32 %v4581, %v2191
        %v4646 = vsub.f32 %v4582, %v2195
        %v4647 = vsub.f32 %v4583, %v2201
        %v4648 = vsub.f32 %v4584, %v2205
        %v4649 = vsub.f32 %v4585, %v2211
        %v4650 = vsub.f32 %v4586, %v2215
        %v4651 = vsub.f32 %v4587, %v2221
        %v4652 = vsub.f32 %v4588, %v2225
        %v4653 = vsub.f32 %v4589, %v2231
        %v4654 = vsub.f32 %v4590, %v2235
        %v4655 = vsub.f32 %v4591, %v2241
        %v4656 = vsub.f32 %v4592, %v2245
        %v4657 = vsub.f32 %v4593, %v2251
        %v4658 = vsub.f32 %v4594, %v2255
        %v4659 = vsub.f32 %v4595, %v2261
        %v4660 = vsub.f32 %v4596, %v2265
        %v4661 = vsub.f32 %v4597, %v2271
        %v4662 = vsub.f32 %v4598, %v2275
        %v4663 = vsub.f32 %v4599, %v2281
        %v4664 = vsub.f32 %v4600, %v2285
        %v4665 = vsub.f32 %v4601, %v2291
        %v4666 = vsub.f32 %v4602, %v2295
        %v4667 = vsub.f32 %v4603, %v2301
        %v4668 = vsub.f32 %v4604, %v2305
        %v4669 = vsub.f32 %v4605, %v2311
        %v4670 = vsub.f32 %v4606, %v2315
        %v4671 = vsub.f32 %v4607, %v2321
        %v4672 = vsub.f32 %v4608, %v2325
        %v4673 = vsub.f32 %v4609, %v2331
        %v4674 = vsub.f32 %v4610, %v2335
        %v4675 = vadd.f32 %v4611, %v4612
        %v4676 = vadd.f32 %v4675, %v4613
        %v4677 = vadd.f32 %v4676, %v4614
        %v4678 = vadd.f32 %v4677, %v4615
        %v4679 = vadd.f32 %v4678, %v4616
        %v4680 = vadd.f32 %v4679, %v4617
        %v4681 = vadd.f32 %v4680, %v4618
        %v4682 = vadd.f32 %v4681, %v4619
        %v4683 = vadd.f32 %v4682, %v4620
        %v4684 = vadd.f32 %v4683, %v4621
        %v4685 = vadd.f32 %v4684, %v4622
        %v4686 = vadd.f32 %v4685, %v4623
        %v4687 = vadd.f32 %v4686, %v4624
        %v4688 = vadd.f32 %v4687, %v4625
        %v4689 = vadd.f32 %v4688, %v4626
        %v4690 = vadd.f32 %v4689, %v4627
        %v4691 = vadd.f32 %v4690, %v4628
        %v4692 = vadd.f32 %v4691, %v4629
        %v4693 = vadd.f32 %v4692, %v4630
        %v4694 = vadd.f32 %v4693, %v4631
        %v4695 = vadd.f32 %v4694, %v4632
        %v4696 = vadd.f32 %v4695, %v4633
        %v4697 = vadd.f32 %v4696, %v4634
        %v4698 = vadd.f32 %v4697, %v4635
        %v4699 = vadd.f32 %v4698, %v4636
        %v4700 = vadd.f32 %v4699, %v4637
        %v4701 = vadd.f32 %v4700, %v4638
        %v4702 = vadd.f32 %v4701, %v4639
        %v4703 = vadd.f32 %v4702, %v4640
        %v4704 = vadd.f32 %v4703, %v4641
        %v4705 = vadd.f32 %v4704, %v4642
        %v4706 = vadd.f32 %v4705, %v4643
        %v4707 = vadd.f32 %v4706, %v4644
        %v4708 = vadd.f32 %v4707, %v4645
        %v4709 = vadd.f32 %v4708, %v4646
        %v4710 = vadd.f32 %v4709, %v4647
        %v4711 = vadd.f32 %v4710, %v4648
        %v4712 = vadd.f32 %v4711, %v4649
        %v4713 = vadd.f32 %v4712, %v4650
        %v4714 = vadd.f32 %v4713, %v4651
        %v4715 = vadd.f32 %v4714, %v4652
        %v4716 = vadd.f32 %v4715, %v4653
        %v4717 = vadd.f32 %v4716, %v4654
        %v4718 = vadd.f32 %v4717, %v4655
        %v4719 = vadd.f32 %v4718, %v4656
        %v4720 = vadd.f32 %v4719, %v4657
        %v4721 = vadd.f32 %v4720, %v4658
        %v4722 = vadd.f32 %v4721, %v4659
        %v4723 = vadd.f32 %v4722, %v4660
        %v4724 = vadd.f32 %v4723, %v4661
        %v4725 = vadd.f32 %v4724, %v4662
        %v4726 = vadd.f32 %v4725, %v4663
        %v4727 = vadd.f32 %v4726, %v4664
        %v4728 = vadd.f32 %v4727, %v4665
        %v4729 = vadd.f32 %v4728, %v4666
        %v4730 = vadd.f32 %v4729, %v4667
        %v4731 = vadd.f32 %v4730, %v4668
        %v4732 = vadd.f32 %v4731, %v4669
        %v4733 = vadd.f32 %v4732, %v4670
        %v4734 = vadd.f32 %v4733, %v4671
        %v4735 = vadd.f32 %v4734, %v4672
        %v4736 = vadd.f32 %v4735, %v4673
        %v4737 = vadd.f32 %v4736, %v4674
        %4738 = vadd.xlane.f32.xlu0 %v4737
        %v4739 = vpop.xlane.xlu0 %4738
        %v4740 = vrot.slane %v4739, 4
        %v4741 = vadd.f32 %v4739, %v4740
        %v4742 = vrot.slane %v4741, 2
        %v4743 = vadd.f32 %v4741, %v4742
        %v4744 = vrot.slane %v4743, 1
        %v4745 = vadd.f32 %v4743, %v4744
        %s4746 = vtos %v4745
        %s4747 = smul.f32 %s4746, 0.5
        %v4748 = vsub.f32 0.0, %v3645
        %v4749 = vsub.f32 0.0, %v3647
        %v4750 = vsub.f32 0.0, %v3649
        %v4751 = vsub.f32 0.0, %v3651
        %v4752 = vsub.f32 0.0, %v3655
        %v4753 = vsub.f32 0.0, %v3657
        %v4754 = vsub.f32 0.0, %v3659
        %v4755 = vsub.f32 0.0, %v3661
        %v4756 = vsub.f32 0.0, %v3665
        %v4757 = vsub.f32 0.0, %v3667
        %v4758 = vsub.f32 0.0, %v3669
        %v4759 = vsub.f32 0.0, %v3671
        %v4760 = vsub.f32 0.0, %v3675
        %v4761 = vsub.f32 0.0, %v3677
        %v4762 = vsub.f32 0.0, %v3679
        %v4763 = vsub.f32 0.0, %v3681
        %v4764 = vsub.f32 0.0, %v3685
        %v4765 = vsub.f32 0.0, %v3687
        %v4766 = vsub.f32 0.0, %v3689
        %v4767 = vsub.f32 0.0, %v3691
        %v4768 = vsub.f32 0.0, %v3695
        %v4769 = vsub.f32 0.0, %v3697
        %v4770 = vsub.f32 0.0, %v3699
        %v4771 = vsub.f32 0.0, %v3701
        %v4772 = vsub.f32 0.0, %v3705
        %v4773 = vsub.f32 0.0, %v3707
        %v4774 = vsub.f32 0.0, %v3709
        %v4775 = vsub.f32 0.0, %v3711
        %v4776 = vsub.f32 0.0, %v3715
        %v4777 = vsub.f32 0.0, %v3717
        %v4778 = vsub.f32 0.0, %v3719
        %v4779 = vsub.f32 0.0, %v3721
        %v4780 = vsub.f32 0.0, %v3725
        %v4781 = vsub.f32 0.0, %v3727
        %v4782 = vsub.f32 0.0, %v3729
        %v4783 = vsub.f32 0.0, %v3731
        %v4784 = vsub.f32 0.0, %v3735
        %v4785 = vsub.f32 0.0, %v3737
        %v4786 = vsub.f32 0.0, %v3739
        %v4787 = vsub.f32 0.0, %v3741
        %v4788 = vsub.f32 0.0, %v3745
        %v4789 = vsub.f32 0.0, %v3747
        %v4790 = vsub.f32 0.0, %v3749
        %v4791 = vsub.f32 0.0, %v3751
        %v4792 = vsub.f32 0.0, %v3755
        %v4793 = vsub.f32 0.0, %v3757
        %v4794 = vsub.f32 0.0, %v3759
        %v4795 = vsub.f32 0.0, %v3761
        %v4796 = vsub.f32 0.0, %v3765
        %v4797 = vsub.f32 0.0, %v3767
        %v4798 = vsub.f32 0.0, %v3769
        %v4799 = vsub.f32 0.0, %v3771
        %v4800 = vsub.f32 0.0, %v3775
        %v4801 = vsub.f32 0.0, %v3777
        %v4802 = vsub.f32 0.0, %v3779
        %v4803 = vsub.f32 0.0, %v3781
        %v4804 = vsub.f32 0.0, %v3785
        %v4805 = vsub.f32 0.0, %v3787
        %v4806 = vsub.f32 0.0, %v3789
        %v4807 = vsub.f32 0.0, %v3791
        %v4808 = vsub.f32 0.0, %v3795
        %v4809 = vsub.f32 0.0, %v3797
        %v4810 = vsub.f32 0.0, %v3799
        %v4811 = vsub.f32 0.0, %v3801
        %v4812 = vsub.f32 0.0, %v3805
        %v4813 = vsub.f32 0.0, %v3807
        %v4814 = vsub.f32 0.0, %v3809
        %v4815 = vsub.f32 0.0, %v3811
        %v4816 = vsub.f32 0.0, %v3815
        %v4817 = vsub.f32 0.0, %v3817
        %v4818 = vsub.f32 0.0, %v3819
        %v4819 = vsub.f32 0.0, %v3821
        %v4820 = vsub.f32 0.0, %v3825
        %v4821 = vsub.f32 0.0, %v3827
        %v4822 = vsub.f32 0.0, %v3829
        %v4823 = vsub.f32 0.0, %v3831
        %v4824 = vsub.f32 0.0, %v3835
        %v4825 = vsub.f32 0.0, %v3837
        %v4826 = vsub.f32 0.0, %v3839
        %v4827 = vsub.f32 0.0, %v3841
        %v4828 = vsub.f32 0.0, %v3845
        %v4829 = vsub.f32 0.0, %v3847
        %v4830 = vsub.f32 0.0, %v3849
        %v4831 = vsub.f32 0.0, %v3851
        %v4832 = vsub.f32 0.0, %v3855
        %v4833 = vsub.f32 0.0, %v3857
        %v4834 = vsub.f32 0.0, %v3859
        %v4835 = vsub.f32 0.0, %v3861
        %v4836 = vsub.f32 0.0, %v3865
        %v4837 = vsub.f32 0.0, %v3867
        %v4838 = vsub.f32 0.0, %v3869
        %v4839 = vsub.f32 0.0, %v3871
        %v4840 = vsub.f32 0.0, %v3875
        %v4841 = vsub.f32 0.0, %v3877
        %v4842 = vsub.f32 0.0, %v3879
        %v4843 = vsub.f32 0.0, %v3881
        %v4844 = vsub.f32 0.0, %v3885
        %v4845 = vsub.f32 0.0, %v3887
        %v4846 = vsub.f32 0.0, %v3889
        %v4847 = vsub.f32 0.0, %v3891
        %v4848 = vsub.f32 0.0, %v3895
        %v4849 = vsub.f32 0.0, %v3897
        %v4850 = vsub.f32 0.0, %v3899
        %v4851 = vsub.f32 0.0, %v3901
        %v4852 = vsub.f32 0.0, %v3905
        %v4853 = vsub.f32 0.0, %v3907
        %v4854 = vsub.f32 0.0, %v3909
        %v4855 = vsub.f32 0.0, %v3911
        %v4856 = vsub.f32 0.0, %v3915
        %v4857 = vsub.f32 0.0, %v3917
        %v4858 = vsub.f32 0.0, %v3919
        %v4859 = vsub.f32 0.0, %v3921
        %v4860 = vsub.f32 0.0, %v3925
        %v4861 = vsub.f32 0.0, %v3927
        %v4862 = vsub.f32 0.0, %v3929
        %v4863 = vsub.f32 0.0, %v3931
        %v4864 = vsub.f32 0.0, %v3935
        %v4865 = vsub.f32 0.0, %v3937
        %v4866 = vsub.f32 0.0, %v3939
        %v4867 = vsub.f32 0.0, %v3941
        %v4868 = vsub.f32 0.0, %v3945
        %v4869 = vsub.f32 0.0, %v3947
        %v4870 = vsub.f32 0.0, %v3949
        %v4871 = vsub.f32 0.0, %v3951
        %v4872 = vsub.f32 0.0, %v3955
        %v4873 = vsub.f32 0.0, %v3957
        %v4874 = vsub.f32 0.0, %v3959
        %v4875 = vsub.f32 0.0, %v3961
        %v4876 = vmul.f32 %v4748, 1.442695
        %v4877 = vpow.pop %v4876
        %v4878 = vmul.f32 %v4749, 1.442695
        %v4879 = vpow.pop %v4878
        %v4880 = vmul.f32 %v4750, 1.442695
        %v4881 = vpow.pop %v4880
        %v4882 = vmul.f32 %v4751, 1.442695
        %v4883 = vpow.pop %v4882
        %v4884 = vmul.f32 %v4752, 1.442695
        %v4885 = vpow.pop %v4884
        %v4886 = vmul.f32 %v4753, 1.442695
        %v4887 = vpow.pop %v4886
        %v4888 = vmul.f32 %v4754, 1.442695
        %v4889 = vpow.pop %v4888
        %v4890 = vmul.f32 %v4755, 1.442695
        %v4891 = vpow.pop %v4890
        %v4892 = vmul.f32 %v4756, 1.442695
        %v4893 = vpow.pop %v4892
        %v4894 = vmul.f32 %v4757, 1.442695
        %v4895 = vpow.pop %v4894
        %v4896 = vmul.f32 %v4758, 1.442695
        %v4897 = vpow.pop %v4896
        %v4898 = vmul.f32 %v4759, 1.442695
        %v4899 = vpow.pop %v4898
        %v4900 = vmul.f32 %v4760, 1.442695
        %v4901 = vpow.pop %v4900
        %v4902 = vmul.f32 %v4761, 1.442695
        %v4903 = vpow.pop %v4902
        %v4904 = vmul.f32 %v4762, 1.442695
        %v4905 = vpow.pop %v4904
        %v4906 = vmul.f32 %v4763, 1.442695
        %v4907 = vpow.pop %v4906
        %v4908 = vmul.f32 %v4764, 1.442695
        %v4909 = vpow.pop %v4908
        %v4910 = vmul.f32 %v4765, 1.442695
        %v4911 = vpow.pop %v4910
        %v4912 = vmul.f32 %v4766, 1.442695
        %v4913 = vpow.pop %v4912
        %v4914 = vmul.f32 %v4767, 1.442695
        %v4915 = vpow.pop %v4914
        %v4916 = vmul.f32 %v4768, 1.442695
        %v4917 = vpow.pop %v4916
        %v4918 = vmul.f32 %v4769, 1.442695
        %v4919 = vpow.pop %v4918
        %v4920 = vmul.f32 %v4770, 1.442695
        %v4921 = vpow.pop %v4920
        %v4922 = vmul.f32 %v4771, 1.442695
        %v4923 = vpow.pop %v4922
        %v4924 = vmul.f32 %v4772, 1.442695
        %v4925 = vpow.pop %v4924
        %v4926 = vmul.f32 %v4773, 1.442695
        %v4927 = vpow.pop %v4926
        %v4928 = vmul.f32 %v4774, 1.442695
        %v4929 = vpow.pop %v4928
        %v4930 = vmul.f32 %v4775, 1.442695
        %v4931 = vpow.pop %v4930
        %v4932 = vmul.f32 %v4776, 1.442695
        %v4933 = vpow.pop %v4932
        %v4934 = vmul.f32 %v4777, 1.442695
        %v4935 = vpow.pop %v4934
        %v4936 = vmul.f32 %v4778, 1.442695
        %v4937 = vpow.pop %v4936
        %v4938 = vmul.f32 %v4779, 1.442695
        %v4939 = vpow.pop %v4938
        %v4940 = vmul.f32 %v4780, 1.442695
        %v4941 = vpow.pop %v4940
        %v4942 = vmul.f32 %v4781, 1.442695
        %v4943 = vpow.pop %v4942
        %v4944 = vmul.f32 %v4782, 1.442695
        %v4945 = vpow.pop %v4944
        %v4946 = vmul.f32 %v4783, 1.442695
        %v4947 = vpow.pop %v4946
        %v4948 = vmul.f32 %v4784, 1.442695
        %v4949 = vpow.pop %v4948
        %v4950 = vmul.f32 %v4785, 1.442695
        %v4951 = vpow.pop %v4950
        %v4952 = vmul.f32 %v4786, 1.442695
        %v4953 = vpow.pop %v4952
        %v4954 = vmul.f32 %v4787, 1.442695
        %v4955 = vpow.pop %v4954
        %v4956 = vmul.f32 %v4788, 1.442695
        %v4957 = vpow.pop %v4956
        %v4958 = vmul.f32 %v4789, 1.442695
        %v4959 = vpow.pop %v4958
        %v4960 = vmul.f32 %v4790, 1.442695
        %v4961 = vpow.pop %v4960
        %v4962 = vmul.f32 %v4791, 1.442695
        %v4963 = vpow.pop %v4962
        %v4964 = vmul.f32 %v4792, 1.442695
        %v4965 = vpow.pop %v4964
        %v4966 = vmul.f32 %v4793, 1.442695
        %v4967 = vpow.pop %v4966
        %v4968 = vmul.f32 %v4794, 1.442695
        %v4969 = vpow.pop %v4968
        %v4970 = vmul.f32 %v4795, 1.442695
        %v4971 = vpow.pop %v4970
        %v4972 = vmul.f32 %v4796, 1.442695
        %v4973 = vpow.pop %v4972
        %v4974 = vmul.f32 %v4797, 1.442695
        %v4975 = vpow.pop %v4974
        %v4976 = vmul.f32 %v4798, 1.442695
        %v4977 = vpow.pop %v4976
        %v4978 = vmul.f32 %v4799, 1.442695
        %v4979 = vpow.pop %v4978
        %v4980 = vmul.f32 %v4800, 1.442695
        %v4981 = vpow.pop %v4980
        %v4982 = vmul.f32 %v4801, 1.442695
        %v4983 = vpow.pop %v4982
        %v4984 = vmul.f32 %v4802, 1.442695
        %v4985 = vpow.pop %v4984
        %v4986 = vmul.f32 %v4803, 1.442695
        %v4987 = vpow.pop %v4986
        %v4988 = vmul.f32 %v4804, 1.442695
        %v4989 = vpow.pop %v4988
        %v4990 = vmul.f32 %v4805, 1.442695
        %v4991 = vpow.pop %v4990
        %v4992 = vmul.f32 %v4806, 1.442695
        %v4993 = vpow.pop %v4992
        %v4994 = vmul.f32 %v4807, 1.442695
        %v4995 = vpow.pop %v4994
        %v4996 = vmul.f32 %v4808, 1.442695
        %v4997 = vpow.pop %v4996
        %v4998 = vmul.f32 %v4809, 1.442695
        %v4999 = vpow.pop %v4998
        %v5000 = vmul.f32 %v4810, 1.442695
        %v5001 = vpow.pop %v5000
        %v5002 = vmul.f32 %v4811, 1.442695
        %v5003 = vpow.pop %v5002
        %v5004 = vmul.f32 %v4812, 1.442695
        %v5005 = vpow.pop %v5004
        %v5006 = vmul.f32 %v4813, 1.442695
        %v5007 = vpow.pop %v5006
        %v5008 = vmul.f32 %v4814, 1.442695
        %v5009 = vpow.pop %v5008
        %v5010 = vmul.f32 %v4815, 1.442695
        %v5011 = vpow.pop %v5010
        %v5012 = vmul.f32 %v4816, 1.442695
        %v5013 = vpow.pop %v5012
        %v5014 = vmul.f32 %v4817, 1.442695
        %v5015 = vpow.pop %v5014
        %v5016 = vmul.f32 %v4818, 1.442695
        %v5017 = vpow.pop %v5016
        %v5018 = vmul.f32 %v4819, 1.442695
        %v5019 = vpow.pop %v5018
        %v5020 = vmul.f32 %v4820, 1.442695
        %v5021 = vpow.pop %v5020
        %v5022 = vmul.f32 %v4821, 1.442695
        %v5023 = vpow.pop %v5022
        %v5024 = vmul.f32 %v4822, 1.442695
        %v5025 = vpow.pop %v5024
        %v5026 = vmul.f32 %v4823, 1.442695
        %v5027 = vpow.pop %v5026
        %v5028 = vmul.f32 %v4824, 1.442695
        %v5029 = vpow.pop %v5028
        %v5030 = vmul.f32 %v4825, 1.442695
        %v5031 = vpow.pop %v5030
        %v5032 = vmul.f32 %v4826, 1.442695
        %v5033 = vpow.pop %v5032
        %v5034 = vmul.f32 %v4827, 1.442695
        %v5035 = vpow.pop %v5034
        %v5036 = vmul.f32 %v4828, 1.442695
        %v5037 = vpow.pop %v5036
        %v5038 = vmul.f32 %v4829, 1.442695
        %v5039 = vpow.pop %v5038
        %v5040 = vmul.f32 %v4830, 1.442695
        %v5041 = vpow.pop %v5040
        %v5042 = vmul.f32 %v4831, 1.442695
        %v5043 = vpow.pop %v5042
        %v5044 = vmul.f32 %v4832, 1.442695
        %v5045 = vpow.pop %v5044
        %v5046 = vmul.f32 %v4833, 1.442695
        %v5047 = vpow.pop %v5046
        %v5048 = vmul.f32 %v4834, 1.442695
        %v5049 = vpow.pop %v5048
        %v5050 = vmul.f32 %v4835, 1.442695
        %v5051 = vpow.pop %v5050
        %v5052 = vmul.f32 %v4836, 1.442695
        %v5053 = vpow.pop %v5052
        %v5054 = vmul.f32 %v4837, 1.442695
        %v5055 = vpow.pop %v5054
        %v5056 = vmul.f32 %v4838, 1.442695
        %v5057 = vpow.pop %v5056
        %v5058 = vmul.f32 %v4839, 1.442695
        %v5059 = vpow.pop %v5058
        %v5060 = vmul.f32 %v4840, 1.442695
        %v5061 = vpow.pop %v5060
        %v5062 = vmul.f32 %v4841, 1.442695
        %v5063 = vpow.pop %v5062
        %v5064 = vmul.f32 %v4842, 1.442695
        %v5065 = vpow.pop %v5064
        %v5066 = vmul.f32 %v4843, 1.442695
        %v5067 = vpow.pop %v5066
        %v5068 = vmul.f32 %v4844, 1.442695
        %v5069 = vpow.pop %v5068
        %v5070 = vmul.f32 %v4845, 1.442695
        %v5071 = vpow.pop %v5070
        %v5072 = vmul.f32 %v4846, 1.442695
        %v5073 = vpow.pop %v5072
        %v5074 = vmul.f32 %v4847, 1.442695
        %v5075 = vpow.pop %v5074
        %v5076 = vmul.f32 %v4848, 1.442695
        %v5077 = vpow.pop %v5076
        %v5078 = vmul.f32 %v4849, 1.442695
        %v5079 = vpow.pop %v5078
        %v5080 = vmul.f32 %v4850, 1.442695
        %v5081 = vpow.pop %v5080
        %v5082 = vmul.f32 %v4851, 1.442695
        %v5083 = vpow.pop %v5082
        %v5084 = vmul.f32 %v4852, 1.442695
        %v5085 = vpow.pop %v5084
        %v5086 = vmul.f32 %v4853, 1.442695
        %v5087 = vpow.pop %v5086
        %v5088 = vmul.f32 %v4854, 1.442695
        %v5089 = vpow.pop %v5088
        %v5090 = vmul.f32 %v4855, 1.442695
        %v5091 = vpow.pop %v5090
        %v5092 = vmul.f32 %v4856, 1.442695
        %v5093 = vpow.pop %v5092
        %v5094 = vmul.f32 %v4857, 1.442695
        %v5095 = vpow.pop %v5094
        %v5096 = vmul.f32 %v4858, 1.442695
        %v5097 = vpow.pop %v5096
        %v5098 = vmul.f32 %v4859, 1.442695
        %v5099 = vpow.pop %v5098
        %v5100 = vmul.f32 %v4860, 1.442695
        %v5101 = vpow.pop %v5100
        %v5102 = vmul.f32 %v4861, 1.442695
        %v5103 = vpow.pop %v5102
        %v5104 = vmul.f32 %v4862, 1.442695
        %v5105 = vpow.pop %v5104
        %v5106 = vmul.f32 %v4863, 1.442695
        %v5107 = vpow.pop %v5106
        %v5108 = vmul.f32 %v4864, 1.442695
        %v5109 = vpow.pop %v5108
        %v5110 = vmul.f32 %v4865, 1.442695
        %v5111 = vpow.pop %v5110
        %v5112 = vmul.f32 %v4866, 1.442695
        %v5113 = vpow.pop %v5112
        %v5114 = vmul.f32 %v4867, 1.442695
        %v5115 = vpow.pop %v5114
        %v5116 = vmul.f32 %v4868, 1.442695
        %v5117 = vpow.pop %v5116
        %v5118 = vmul.f32 %v4869, 1.442695
        %v5119 = vpow.pop %v5118
        %v5120 = vmul.f32 %v4870, 1.442695
        %v5121 = vpow.pop %v5120
        %v5122 = vmul.f32 %v4871, 1.442695
        %v5123 = vpow.pop %v5122
        %v5124 = vmul.f32 %v4872, 1.442695
        %v5125 = vpow.pop %v5124
        %v5126 = vmul.f32 %v4873, 1.442695
        %v5127 = vpow.pop %v5126
        %v5128 = vmul.f32 %v4874, 1.442695
        %v5129 = vpow.pop %v5128
        %v5130 = vmul.f32 %v4875, 1.442695
        %v5131 = vpow.pop %v5130
        %v5132 = vadd.f32 %v4877, 1.0
        %v5133 = vadd.f32 %v4879, 1.0
        %v5134 = vadd.f32 %v4881, 1.0
        %v5135 = vadd.f32 %v4883, 1.0
        %v5136 = vadd.f32 %v4885, 1.0
        %v5137 = vadd.f32 %v4887, 1.0
        %v5138 = vadd.f32 %v4889, 1.0
        %v5139 = vadd.f32 %v4891, 1.0
        %v5140 = vadd.f32 %v4893, 1.0
        %v5141 = vadd.f32 %v4895, 1.0
        %v5142 = vadd.f32 %v4897, 1.0
        %v5143 = vadd.f32 %v4899, 1.0
        %v5144 = vadd.f32 %v4901, 1.0
        %v5145 = vadd.f32 %v4903, 1.0
        %v5146 = vadd.f32 %v4905, 1.0
        %v5147 = vadd.f32 %v4907, 1.0
        %v5148 = vadd.f32 %v4909, 1.0
        %v5149 = vadd.f32 %v4911, 1.0
        %v5150 = vadd.f32 %v4913, 1.0
        %v5151 = vadd.f32 %v4915, 1.0
        %v5152 = vadd.f32 %v4917, 1.0
        %v5153 = vadd.f32 %v4919, 1.0
        %v5154 = vadd.f32 %v4921, 1.0
        %v5155 = vadd.f32 %v4923, 1.0
        %v5156 = vadd.f32 %v4925, 1.0
        %v5157 = vadd.f32 %v4927, 1.0
        %v5158 = vadd.f32 %v4929, 1.0
        %v5159 = vadd.f32 %v4931, 1.0
        %v5160 = vadd.f32 %v4933, 1.0
        %v5161 = vadd.f32 %v4935, 1.0
        %v5162 = vadd.f32 %v4937, 1.0
        %v5163 = vadd.f32 %v4939, 1.0
        %v5164 = vadd.f32 %v4941, 1.0
        %v5165 = vadd.f32 %v4943, 1.0
        %v5166 = vadd.f32 %v4945, 1.0
        %v5167 = vadd.f32 %v4947, 1.0
        %v5168 = vadd.f32 %v4949, 1.0
        %v5169 = vadd.f32 %v4951, 1.0
        %v5170 = vadd.f32 %v4953, 1.0
        %v5171 = vadd.f32 %v4955, 1.0
        %v5172 = vadd.f32 %v4957, 1.0
        %v5173 = vadd.f32 %v4959, 1.0
        %v5174 = vadd.f32 %v4961, 1.0
        %v5175 = vadd.f32 %v4963, 1.0
        %v5176 = vadd.f32 %v4965, 1.0
        %v5177 = vadd.f32 %v4967, 1.0
        %v5178 = vadd.f32 %v4969, 1.0
        %v5179 = vadd.f32 %v4971, 1.0
        %v5180 = vadd.f32 %v4973, 1.0
        %v5181 = vadd.f32 %v4975, 1.0
        %v5182 = vadd.f32 %v4977, 1.0
        %v5183 = vadd.f32 %v4979, 1.0
        %v5184 = vadd.f32 %v4981, 1.0
        %v5185 = vadd.f32 %v4983, 1.0
        %v5186 = vadd.f32 %v4985, 1.0
        %v5187 = vadd.f32 %v4987, 1.0
        %v5188 = vadd.f32 %v4989, 1.0
        %v5189 = vadd.f32 %v4991, 1.0
        %v5190 = vadd.f32 %v4993, 1.0
        %v5191 = vadd.f32 %v4995, 1.0
        %v5192 = vadd.f32 %v4997, 1.0
        %v5193 = vadd.f32 %v4999, 1.0
        %v5194 = vadd.f32 %v5001, 1.0
        %v5195 = vadd.f32 %v5003, 1.0
        %v5196 = vadd.f32 %v5005, 1.0
        %v5197 = vadd.f32 %v5007, 1.0
        %v5198 = vadd.f32 %v5009, 1.0
        %v5199 = vadd.f32 %v5011, 1.0
        %v5200 = vadd.f32 %v5013, 1.0
        %v5201 = vadd.f32 %v5015, 1.0
        %v5202 = vadd.f32 %v5017, 1.0
        %v5203 = vadd.f32 %v5019, 1.0
        %v5204 = vadd.f32 %v5021, 1.0
        %v5205 = vadd.f32 %v5023, 1.0
        %v5206 = vadd.f32 %v5025, 1.0
        %v5207 = vadd.f32 %v5027, 1.0
        %v5208 = vadd.f32 %v5029, 1.0
        %v5209 = vadd.f32 %v5031, 1.0
        %v5210 = vadd.f32 %v5033, 1.0
        %v5211 = vadd.f32 %v5035, 1.0
        %v5212 = vadd.f32 %v5037, 1.0
        %v5213 = vadd.f32 %v5039, 1.0
        %v5214 = vadd.f32 %v5041, 1.0
        %v5215 = vadd.f32 %v5043, 1.0
        %v5216 = vadd.f32 %v5045, 1.0
        %v5217 = vadd.f32 %v5047, 1.0
        %v5218 = vadd.f32 %v5049, 1.0
        %v5219 = vadd.f32 %v5051, 1.0
        %v5220 = vadd.f32 %v5053, 1.0
        %v5221 = vadd.f32 %v5055, 1.0
        %v5222 = vadd.f32 %v5057, 1.0
        %v5223 = vadd.f32 %v5059, 1.0
        %v5224 = vadd.f32 %v5061, 1.0
        %v5225 = vadd.f32 %v5063, 1.0
        %v5226 = vadd.f32 %v5065, 1.0
        %v5227 = vadd.f32 %v5067, 1.0
        %v5228 = vadd.f32 %v5069, 1.0
        %v5229 = vadd.f32 %v5071, 1.0
        %v5230 = vadd.f32 %v5073, 1.0
        %v5231 = vadd.f32 %v5075, 1.0
        %v5232 = vadd.f32 %v5077, 1.0
        %v5233 = vadd.f32 %v5079, 1.0
        %v5234 = vadd.f32 %v5081, 1.0
        %v5235 = vadd.f32 %v5083, 1.0
        %v5236 = vadd.f32 %v5085, 1.0
        %v5237 = vadd.f32 %v5087, 1.0
        %v5238 = vadd.f32 %v5089, 1.0
        %v5239 = vadd.f32 %v5091, 1.0
        %v5240 = vadd.f32 %v5093, 1.0
        %v5241 = vadd.f32 %v5095, 1.0
        %v5242 = vadd.f32 %v5097, 1.0
        %v5243 = vadd.f32 %v5099, 1.0
        %v5244 = vadd.f32 %v5101, 1.0
        %v5245 = vadd.f32 %v5103, 1.0
        %v5246 = vadd.f32 %v5105, 1.0
        %v5247 = vadd.f32 %v5107, 1.0
        %v5248 = vadd.f32 %v5109, 1.0
        %v5249 = vadd.f32 %v5111, 1.0
        %v5250 = vadd.f32 %v5113, 1.0
        %v5251 = vadd.f32 %v5115, 1.0
        %v5252 = vadd.f32 %v5117, 1.0
        %v5253 = vadd.f32 %v5119, 1.0
        %v5254 = vadd.f32 %v5121, 1.0
        %v5255 = vadd.f32 %v5123, 1.0
        %v5256 = vadd.f32 %v5125, 1.0
        %v5257 = vadd.f32 %v5127, 1.0
        %v5258 = vadd.f32 %v5129, 1.0
        %v5259 = vadd.f32 %v5131, 1.0
        %v5260 = vrcp.pop %v5132
        %v5261 = vmul.f32 1.0, %v5260
        %v5262 = vrcp.pop %v5133
        %v5263 = vmul.f32 1.0, %v5262
        %v5264 = vrcp.pop %v5134
        %v5265 = vmul.f32 1.0, %v5264
        %v5266 = vrcp.pop %v5135
        %v5267 = vmul.f32 1.0, %v5266
        %v5268 = vrcp.pop %v5136
        %v5269 = vmul.f32 1.0, %v5268
        %v5270 = vrcp.pop %v5137
        %v5271 = vmul.f32 1.0, %v5270
        %v5272 = vrcp.pop %v5138
        %v5273 = vmul.f32 1.0, %v5272
        %v5274 = vrcp.pop %v5139
        %v5275 = vmul.f32 1.0, %v5274
        %v5276 = vrcp.pop %v5140
        %v5277 = vmul.f32 1.0, %v5276
        %v5278 = vrcp.pop %v5141
        %v5279 = vmul.f32 1.0, %v5278
        %v5280 = vrcp.pop %v5142
        %v5281 = vmul.f32 1.0, %v5280
        %v5282 = vrcp.pop %v5143
        %v5283 = vmul.f32 1.0, %v5282
        %v5284 = vrcp.pop %v5144
        %v5285 = vmul.f32 1.0, %v5284
        %v5286 = vrcp.pop %v5145
        %v5287 = vmul.f32 1.0, %v5286
        %v5288 = vrcp.pop %v5146
        %v5289 = vmul.f32 1.0, %v5288
        %v5290 = vrcp.pop %v5147
        %v5291 = vmul.f32 1.0, %v5290
        %v5292 = vrcp.pop %v5148
        %v5293 = vmul.f32 1.0, %v5292
        %v5294 = vrcp.pop %v5149
        %v5295 = vmul.f32 1.0, %v5294
        %v5296 = vrcp.pop %v5150
        %v5297 = vmul.f32 1.0, %v5296
        %v5298 = vrcp.pop %v5151
        %v5299 = vmul.f32 1.0, %v5298
        %v5300 = vrcp.pop %v5152
        %v5301 = vmul.f32 1.0, %v5300
        %v5302 = vrcp.pop %v5153
        %v5303 = vmul.f32 1.0, %v5302
        %v5304 = vrcp.pop %v5154
        %v5305 = vmul.f32 1.0, %v5304
        %v5306 = vrcp.pop %v5155
        %v5307 = vmul.f32 1.0, %v5306
        %v5308 = vrcp.pop %v5156
        %v5309 = vmul.f32 1.0, %v5308
        %v5310 = vrcp.pop %v5157
        %v5311 = vmul.f32 1.0, %v5310
        %v5312 = vrcp.pop %v5158
        %v5313 = vmul.f32 1.0, %v5312
        %v5314 = vrcp.pop %v5159
        %v5315 = vmul.f32 1.0, %v5314
        %v5316 = vrcp.pop %v5160
        %v5317 = vmul.f32 1.0, %v5316
        %v5318 = vrcp.pop %v5161
        %v5319 = vmul.f32 1.0, %v5318
        %v5320 = vrcp.pop %v5162
        %v5321 = vmul.f32 1.0, %v5320
        %v5322 = vrcp.pop %v5163
        %v5323 = vmul.f32 1.0, %v5322
        %v5324 = vrcp.pop %v5164
        %v5325 = vmul.f32 1.0, %v5324
        %v5326 = vrcp.pop %v5165
        %v5327 = vmul.f32 1.0, %v5326
        %v5328 = vrcp.pop %v5166
        %v5329 = vmul.f32 1.0, %v5328
        %v5330 = vrcp.pop %v5167
        %v5331 = vmul.f32 1.0, %v5330
        %v5332 = vrcp.pop %v5168
        %v5333 = vmul.f32 1.0, %v5332
        %v5334 = vrcp.pop %v5169
        %v5335 = vmul.f32 1.0, %v5334
        %v5336 = vrcp.pop %v5170
        %v5337 = vmul.f32 1.0, %v5336
        %v5338 = vrcp.pop %v5171
        %v5339 = vmul.f32 1.0, %v5338
        %v5340 = vrcp.pop %v5172
        %v5341 = vmul.f32 1.0, %v5340
        %v5342 = vrcp.pop %v5173
        %v5343 = vmul.f32 1.0, %v5342
        %v5344 = vrcp.pop %v5174
        %v5345 = vmul.f32 1.0, %v5344
        %v5346 = vrcp.pop %v5175
        %v5347 = vmul.f32 1.0, %v5346
        %v5348 = vrcp.pop %v5176
        %v5349 = vmul.f32 1.0, %v5348
        %v5350 = vrcp.pop %v5177
        %v5351 = vmul.f32 1.0, %v5350
        %v5352 = vrcp.pop %v5178
        %v5353 = vmul.f32 1.0, %v5352
        %v5354 = vrcp.pop %v5179
        %v5355 = vmul.f32 1.0, %v5354
        %v5356 = vrcp.pop %v5180
        %v5357 = vmul.f32 1.0, %v5356
        %v5358 = vrcp.pop %v5181
        %v5359 = vmul.f32 1.0, %v5358
        %v5360 = vrcp.pop %v5182
        %v5361 = vmul.f32 1.0, %v5360
        %v5362 = vrcp.pop %v5183
        %v5363 = vmul.f32 1.0, %v5362
        %v5364 = vrcp.pop %v5184
        %v5365 = vmul.f32 1.0, %v5364
        %v5366 = vrcp.pop %v5185
        %v5367 = vmul.f32 1.0, %v5366
        %v5368 = vrcp.pop %v5186
        %v5369 = vmul.f32 1.0, %v5368
        %v5370 = vrcp.pop %v5187
        %v5371 = vmul.f32 1.0, %v5370
        %v5372 = vrcp.pop %v5188
        %v5373 = vmul.f32 1.0, %v5372
        %v5374 = vrcp.pop %v5189
        %v5375 = vmul.f32 1.0, %v5374
        %v5376 = vrcp.pop %v5190
        %v5377 = vmul.f32 1.0, %v5376
        %v5378 = vrcp.pop %v5191
        %v5379 = vmul.f32 1.0, %v5378
        %v5380 = vrcp.pop %v5192
        %v5381 = vmul.f32 1.0, %v5380
        %v5382 = vrcp.pop %v5193
        %v5383 = vmul.f32 1.0, %v5382
        %v5384 = vrcp.pop %v5194
        %v5385 = vmul.f32 1.0, %v5384
        %v5386 = vrcp.pop %v5195
        %v5387 = vmul.f32 1.0, %v5386
        %v5388 = vrcp.pop %v5196
        %v5389 = vmul.f32 1.0, %v5388
        %v5390 = vrcp.pop %v5197
        %v5391 = vmul.f32 1.0, %v5390
        %v5392 = vrcp.pop %v5198
        %v5393 = vmul.f32 1.0, %v5392
        %v5394 = vrcp.pop %v5199
        %v5395 = vmul.f32 1.0, %v5394
        %v5396 = vrcp.pop %v5200
        %v5397 = vmul.f32 1.0, %v5396
        %v5398 = vrcp.pop %v5201
        %v5399 = vmul.f32 1.0, %v5398
        %v5400 = vrcp.pop %v5202
        %v5401 = vmul.f32 1.0, %v5400
        %v5402 = vrcp.pop %v5203
        %v5403 = vmul.f32 1.0, %v5402
        %v5404 = vrcp.pop %v5204
        %v5405 = vmul.f32 1.0, %v5404
        %v5406 = vrcp.pop %v5205
        %v5407 = vmul.f32 1.0, %v5406
        %v5408 = vrcp.pop %v5206
        %v5409 = vmul.f32 1.0, %v5408
        %v5410 = vrcp.pop %v5207
        %v5411 = vmul.f32 1.0, %v5410
        %v5412 = vrcp.pop %v5208
        %v5413 = vmul.f32 1.0, %v5412
        %v5414 = vrcp.pop %v5209
        %v5415 = vmul.f32 1.0, %v5414
        %v5416 = vrcp.pop %v5210
        %v5417 = vmul.f32 1.0, %v5416
        %v5418 = vrcp.pop %v5211
        %v5419 = vmul.f32 1.0, %v5418
        %v5420 = vrcp.pop %v5212
        %v5421 = vmul.f32 1.0, %v5420
        %v5422 = vrcp.pop %v5213
        %v5423 = vmul.f32 1.0, %v5422
        %v5424 = vrcp.pop %v5214
        %v5425 = vmul.f32 1.0, %v5424
        %v5426 = vrcp.pop %v5215
        %v5427 = vmul.f32 1.0, %v5426
        %v5428 = vrcp.pop %v5216
        %v5429 = vmul.f32 1.0, %v5428
        %v5430 = vrcp.pop %v5217
        %v5431 = vmul.f32 1.0, %v5430
        %v5432 = vrcp.pop %v5218
        %v5433 = vmul.f32 1.0, %v5432
        %v5434 = vrcp.pop %v5219
        %v5435 = vmul.f32 1.0, %v5434
        %v5436 = vrcp.pop %v5220
        %v5437 = vmul.f32 1.0, %v5436
        %v5438 = vrcp.pop %v5221
        %v5439 = vmul.f32 1.0, %v5438
        %v5440 = vrcp.pop %v5222
        %v5441 = vmul.f32 1.0, %v5440
        %v5442 = vrcp.pop %v5223
        %v5443 = vmul.f32 1.0, %v5442
        %v5444 = vrcp.pop %v5224
        %v5445 = vmul.f32 1.0, %v5444
        %v5446 = vrcp.pop %v5225
        %v5447 = vmul.f32 1.0, %v5446
        %v5448 = vrcp.pop %v5226
        %v5449 = vmul.f32 1.0, %v5448
        %v5450 = vrcp.pop %v5227
        %v5451 = vmul.f32 1.0, %v5450
        %v5452 = vrcp.pop %v5228
        %v5453 = vmul.f32 1.0, %v5452
        %v5454 = vrcp.pop %v5229
        %v5455 = vmul.f32 1.0, %v5454
        %v5456 = vrcp.pop %v5230
        %v5457 = vmul.f32 1.0, %v5456
        %v5458 = vrcp.pop %v5231
        %v5459 = vmul.f32 1.0, %v5458
        %v5460 = vrcp.pop %v5232
        %v5461 = vmul.f32 1.0, %v5460
        %v5462 = vrcp.pop %v5233
        %v5463 = vmul.f32 1.0, %v5462
        %v5464 = vrcp.pop %v5234
        %v5465 = vmul.f32 1.0, %v5464
        %v5466 = vrcp.pop %v5235
        %v5467 = vmul.f32 1.0, %v5466
        %v5468 = vrcp.pop %v5236
        %v5469 = vmul.f32 1.0, %v5468
        %v5470 = vrcp.pop %v5237
        %v5471 = vmul.f32 1.0, %v5470
        %v5472 = vrcp.pop %v5238
        %v5473 = vmul.f32 1.0, %v5472
        %v5474 = vrcp.pop %v5239
        %v5475 = vmul.f32 1.0, %v5474
        %v5476 = vrcp.pop %v5240
        %v5477 = vmul.f32 1.0, %v5476
        %v5478 = vrcp.pop %v5241
        %v5479 = vmul.f32 1.0, %v5478
        %v5480 = vrcp.pop %v5242
        %v5481 = vmul.f32 1.0, %v5480
        %v5482 = vrcp.pop %v5243
        %v5483 = vmul.f32 1.0, %v5482
        %v5484 = vrcp.pop %v5244
        %v5485 = vmul.f32 1.0, %v5484
        %v5486 = vrcp.pop %v5245
        %v5487 = vmul.f32 1.0, %v5486
        %v5488 = vrcp.pop %v5246
        %v5489 = vmul.f32 1.0, %v5488
        %v5490 = vrcp.pop %v5247
        %v5491 = vmul.f32 1.0, %v5490
        %v5492 = vrcp.pop %v5248
        %v5493 = vmul.f32 1.0, %v5492
        %v5494 = vrcp.pop %v5249
        %v5495 = vmul.f32 1.0, %v5494
        %v5496 = vrcp.pop %v5250
        %v5497 = vmul.f32 1.0, %v5496
        %v5498 = vrcp.pop %v5251
        %v5499 = vmul.f32 1.0, %v5498
        %v5500 = vrcp.pop %v5252
        %v5501 = vmul.f32 1.0, %v5500
        %v5502 = vrcp.pop %v5253
        %v5503 = vmul.f32 1.0, %v5502
        %v5504 = vrcp.pop %v5254
        %v5505 = vmul.f32 1.0, %v5504
        %v5506 = vrcp.pop %v5255
        %v5507 = vmul.f32 1.0, %v5506
        %v5508 = vrcp.pop %v5256
        %v5509 = vmul.f32 1.0, %v5508
        %v5510 = vrcp.pop %v5257
        %v5511 = vmul.f32 1.0, %v5510
        %v5512 = vrcp.pop %v5258
        %v5513 = vmul.f32 1.0, %v5512
        %v5514 = vrcp.pop %v5259
        %v5515 = vmul.f32 1.0, %v5514
        %v5516 = vpack.c.bf16 %v5265, %v5261
        %v5517 = vpack.c.bf16 %v5267, %v5263
        %v5518 = vpack.c.bf16 %v5273, %v5269
        %v5519 = vpack.c.bf16 %v5275, %v5271
        %v5520 = vpack.c.bf16 %v5281, %v5277
        %v5521 = vpack.c.bf16 %v5283, %v5279
        %v5522 = vpack.c.bf16 %v5289, %v5285
        %v5523 = vpack.c.bf16 %v5291, %v5287
        %v5524 = vpack.c.bf16 %v5297, %v5293
        %v5525 = vpack.c.bf16 %v5299, %v5295
        %v5526 = vpack.c.bf16 %v5305, %v5301
        %v5527 = vpack.c.bf16 %v5307, %v5303
        %v5528 = vpack.c.bf16 %v5313, %v5309
        %v5529 = vpack.c.bf16 %v5315, %v5311
        %v5530 = vpack.c.bf16 %v5321, %v5317
        %v5531 = vpack.c.bf16 %v5323, %v5319
        %v5532 = vpack.c.bf16 %v5329, %v5325
        %v5533 = vpack.c.bf16 %v5331, %v5327
        %v5534 = vpack.c.bf16 %v5337, %v5333
        %v5535 = vpack.c.bf16 %v5339, %v5335
        %v5536 = vpack.c.bf16 %v5345, %v5341
        %v5537 = vpack.c.bf16 %v5347, %v5343
        %v5538 = vpack.c.bf16 %v5353, %v5349
        %v5539 = vpack.c.bf16 %v5355, %v5351
        %v5540 = vpack.c.bf16 %v5361, %v5357
        %v5541 = vpack.c.bf16 %v5363, %v5359
        %v5542 = vpack.c.bf16 %v5369, %v5365
        %v5543 = vpack.c.bf16 %v5371, %v5367
        %v5544 = vpack.c.bf16 %v5377, %v5373
        %v5545 = vpack.c.bf16 %v5379, %v5375
        %v5546 = vpack.c.bf16 %v5385, %v5381
        %v5547 = vpack.c.bf16 %v5387, %v5383
        %v5548 = vpack.c.bf16 %v5393, %v5389
        %v5549 = vpack.c.bf16 %v5395, %v5391
        %v5550 = vpack.c.bf16 %v5401, %v5397
        %v5551 = vpack.c.bf16 %v5403, %v5399
        %v5552 = vpack.c.bf16 %v5409, %v5405
        %v5553 = vpack.c.bf16 %v5411, %v5407
        %v5554 = vpack.c.bf16 %v5417, %v5413
        %v5555 = vpack.c.bf16 %v5419, %v5415
        %v5556 = vpack.c.bf16 %v5425, %v5421
        %v5557 = vpack.c.bf16 %v5427, %v5423
        %v5558 = vpack.c.bf16 %v5433, %v5429
        %v5559 = vpack.c.bf16 %v5435, %v5431
        %v5560 = vpack.c.bf16 %v5441, %v5437
        %v5561 = vpack.c.bf16 %v5443, %v5439
        %v5562 = vpack.c.bf16 %v5449, %v5445
        %v5563 = vpack.c.bf16 %v5451, %v5447
        %v5564 = vpack.c.bf16 %v5457, %v5453
        %v5565 = vpack.c.bf16 %v5459, %v5455
        %v5566 = vpack.c.bf16 %v5465, %v5461
        %v5567 = vpack.c.bf16 %v5467, %v5463
        %v5568 = vpack.c.bf16 %v5473, %v5469
        %v5569 = vpack.c.bf16 %v5475, %v5471
        %v5570 = vpack.c.bf16 %v5481, %v5477
        %v5571 = vpack.c.bf16 %v5483, %v5479
        %v5572 = vpack.c.bf16 %v5489, %v5485
        %v5573 = vpack.c.bf16 %v5491, %v5487
        %v5574 = vpack.c.bf16 %v5497, %v5493
        %v5575 = vpack.c.bf16 %v5499, %v5495
        %v5576 = vpack.c.bf16 %v5505, %v5501
        %v5577 = vpack.c.bf16 %v5507, %v5503
        %v5578 = vpack.c.bf16 %v5513, %v5509
        %v5579 = vpack.c.bf16 %v5515, %v5511
        %v5644 = vunpack.c.l.b16 %v5516
        %v5645 = vunpack.c.l.b16 %v5517
        %v5646 = vunpack.c.h.b16 %v5516
        %v5647 = vunpack.c.h.b16 %v5517
        %v5648 = vunpack.c.l.b16 %v5518
        %v5649 = vunpack.c.l.b16 %v5519
        %v5650 = vunpack.c.h.b16 %v5518
        %v5651 = vunpack.c.h.b16 %v5519
        %v5652 = vunpack.c.l.b16 %v5520
        %v5653 = vunpack.c.l.b16 %v5521
        %v5654 = vunpack.c.h.b16 %v5520
        %v5655 = vunpack.c.h.b16 %v5521
        %v5656 = vunpack.c.l.b16 %v5522
        %v5657 = vunpack.c.l.b16 %v5523
        %v5658 = vunpack.c.h.b16 %v5522
        %v5659 = vunpack.c.h.b16 %v5523
        %v5660 = vunpack.c.l.b16 %v5524
        %v5661 = vunpack.c.l.b16 %v5525
        %v5662 = vunpack.c.h.b16 %v5524
        %v5663 = vunpack.c.h.b16 %v5525
        %v5664 = vunpack.c.l.b16 %v5526
        %v5665 = vunpack.c.l.b16 %v5527
        %v5666 = vunpack.c.h.b16 %v5526
        %v5667 = vunpack.c.h.b16 %v5527
        %v5668 = vunpack.c.l.b16 %v5528
        %v5669 = vunpack.c.l.b16 %v5529
        %v5670 = vunpack.c.h.b16 %v5528
        %v5671 = vunpack.c.h.b16 %v5529
        %v5672 = vunpack.c.l.b16 %v5530
        %v5673 = vunpack.c.l.b16 %v5531
        %v5674 = vunpack.c.h.b16 %v5530
        %v5675 = vunpack.c.h.b16 %v5531
        %v5676 = vunpack.c.l.b16 %v5532
        %v5677 = vunpack.c.l.b16 %v5533
        %v5678 = vunpack.c.h.b16 %v5532
        %v5679 = vunpack.c.h.b16 %v5533
        %v5680 = vunpack.c.l.b16 %v5534
        %v5681 = vunpack.c.l.b16 %v5535
        %v5682 = vunpack.c.h.b16 %v5534
        %v5683 = vunpack.c.h.b16 %v5535
        %v5684 = vunpack.c.l.b16 %v5536
        %v5685 = vunpack.c.l.b16 %v5537
        %v5686 = vunpack.c.h.b16 %v5536
        %v5687 = vunpack.c.h.b16 %v5537
        %v5688 = vunpack.c.l.b16 %v5538
        %v5689 = vunpack.c.l.b16 %v5539
        %v5690 = vunpack.c.h.b16 %v5538
        %v5691 = vunpack.c.h.b16 %v5539
        %v5692 = vunpack.c.l.b16 %v5540
        %v5693 = vunpack.c.l.b16 %v5541
        %v5694 = vunpack.c.h.b16 %v5540
        %v5695 = vunpack.c.h.b16 %v5541
        %v5696 = vunpack.c.l.b16 %v5542
        %v5697 = vunpack.c.l.b16 %v5543
        %v5698 = vunpack.c.h.b16 %v5542
        %v5699 = vunpack.c.h.b16 %v5543
        %v5700 = vunpack.c.l.b16 %v5544
        %v5701 = vunpack.c.l.b16 %v5545
        %v5702 = vunpack.c.h.b16 %v5544
        %v5703 = vunpack.c.h.b16 %v5545
        %v5704 = vunpack.c.l.b16 %v5546
        %v5705 = vunpack.c.l.b16 %v5547
        %v5706 = vunpack.c.h.b16 %v5546
        %v5707 = vunpack.c.h.b16 %v5547
        %v5708 = vunpack.c.l.b16 %v5548
        %v5709 = vunpack.c.l.b16 %v5549
        %v5710 = vunpack.c.h.b16 %v5548
        %v5711 = vunpack.c.h.b16 %v5549
        %v5712 = vunpack.c.l.b16 %v5550
        %v5713 = vunpack.c.l.b16 %v5551
        %v5714 = vunpack.c.h.b16 %v5550
        %v5715 = vunpack.c.h.b16 %v5551
        %v5716 = vunpack.c.l.b16 %v5552
        %v5717 = vunpack.c.l.b16 %v5553
        %v5718 = vunpack.c.h.b16 %v5552
        %v5719 = vunpack.c.h.b16 %v5553
        %v5720 = vunpack.c.l.b16 %v5554
        %v5721 = vunpack.c.l.b16 %v5555
        %v5722 = vunpack.c.h.b16 %v5554
        %v5723 = vunpack.c.h.b16 %v5555
        %v5724 = vunpack.c.l.b16 %v5556
        %v5725 = vunpack.c.l.b16 %v5557
        %v5726 = vunpack.c.h.b16 %v5556
        %v5727 = vunpack.c.h.b16 %v5557
        %v5728 = vunpack.c.l.b16 %v5558
        %v5729 = vunpack.c.l.b16 %v5559
        %v5730 = vunpack.c.h.b16 %v5558
        %v5731 = vunpack.c.h.b16 %v5559
        %v5732 = vunpack.c.l.b16 %v5560
        %v5733 = vunpack.c.l.b16 %v5561
        %v5734 = vunpack.c.h.b16 %v5560
        %v5735 = vunpack.c.h.b16 %v5561
        %v5736 = vunpack.c.l.b16 %v5562
        %v5737 = vunpack.c.l.b16 %v5563
        %v5738 = vunpack.c.h.b16 %v5562
        %v5739 = vunpack.c.h.b16 %v5563
        %v5740 = vunpack.c.l.b16 %v5564
        %v5741 = vunpack.c.l.b16 %v5565
        %v5742 = vunpack.c.h.b16 %v5564
        %v5743 = vunpack.c.h.b16 %v5565
        %v5744 = vunpack.c.l.b16 %v5566
        %v5745 = vunpack.c.l.b16 %v5567
        %v5746 = vunpack.c.h.b16 %v5566
        %v5747 = vunpack.c.h.b16 %v5567
        %v5748 = vunpack.c.l.b16 %v5568
        %v5749 = vunpack.c.l.b16 %v5569
        %v5750 = vunpack.c.h.b16 %v5568
        %v5751 = vunpack.c.h.b16 %v5569
        %v5752 = vunpack.c.l.b16 %v5570
        %v5753 = vunpack.c.l.b16 %v5571
        %v5754 = vunpack.c.h.b16 %v5570
        %v5755 = vunpack.c.h.b16 %v5571
        %v5756 = vunpack.c.l.b16 %v5572
        %v5757 = vunpack.c.l.b16 %v5573
        %v5758 = vunpack.c.h.b16 %v5572
        %v5759 = vunpack.c.h.b16 %v5573
        %v5760 = vunpack.c.l.b16 %v5574
        %v5761 = vunpack.c.l.b16 %v5575
        %v5762 = vunpack.c.h.b16 %v5574
        %v5763 = vunpack.c.h.b16 %v5575
        %v5764 = vunpack.c.l.b16 %v5576
        %v5765 = vunpack.c.l.b16 %v5577
        %v5766 = vunpack.c.h.b16 %v5576
        %v5767 = vunpack.c.h.b16 %v5577
        %v5768 = vunpack.c.l.b16 %v5578
        %v5769 = vunpack.c.l.b16 %v5579
        %v5770 = vunpack.c.h.b16 %v5578
        %v5771 = vunpack.c.h.b16 %v5579
        %v5772 = vpack.c.b16 %v5645, %v5644
        %v5773 = vpack.c.b16 %v5647, %v5646
        %v5774 = vpack.c.b16 %v5649, %v5648
        %v5775 = vpack.c.b16 %v5651, %v5650
        %v5776 = vpack.c.b16 %v5653, %v5652
        %v5777 = vpack.c.b16 %v5655, %v5654
        %v5778 = vpack.c.b16 %v5657, %v5656
        %v5779 = vpack.c.b16 %v5659, %v5658
        %v5780 = vpack.c.b16 %v5661, %v5660
        %v5781 = vpack.c.b16 %v5663, %v5662
        %v5782 = vpack.c.b16 %v5665, %v5664
        %v5783 = vpack.c.b16 %v5667, %v5666
        %v5784 = vpack.c.b16 %v5669, %v5668
        %v5785 = vpack.c.b16 %v5671, %v5670
        %v5786 = vpack.c.b16 %v5673, %v5672
        %v5787 = vpack.c.b16 %v5675, %v5674
        %v5788 = vpack.c.b16 %v5677, %v5676
        %v5789 = vpack.c.b16 %v5679, %v5678
        %v5790 = vpack.c.b16 %v5681, %v5680
        %v5791 = vpack.c.b16 %v5683, %v5682
        %v5792 = vpack.c.b16 %v5685, %v5684
        %v5793 = vpack.c.b16 %v5687, %v5686
        %v5794 = vpack.c.b16 %v5689, %v5688
        %v5795 = vpack.c.b16 %v5691, %v5690
        %v5796 = vpack.c.b16 %v5693, %v5692
        %v5797 = vpack.c.b16 %v5695, %v5694
        %v5798 = vpack.c.b16 %v5697, %v5696
        %v5799 = vpack.c.b16 %v5699, %v5698
        %v5800 = vpack.c.b16 %v5701, %v5700
        %v5801 = vpack.c.b16 %v5703, %v5702
        %v5802 = vpack.c.b16 %v5705, %v5704
        %v5803 = vpack.c.b16 %v5707, %v5706
        %v5804 = vpack.c.b16 %v5709, %v5708
        %v5805 = vpack.c.b16 %v5711, %v5710
        %v5806 = vpack.c.b16 %v5713, %v5712
        %v5807 = vpack.c.b16 %v5715, %v5714
        %v5808 = vpack.c.b16 %v5717, %v5716
        %v5809 = vpack.c.b16 %v5719, %v5718
        %v5810 = vpack.c.b16 %v5721, %v5720
        %v5811 = vpack.c.b16 %v5723, %v5722
        %v5812 = vpack.c.b16 %v5725, %v5724
        %v5813 = vpack.c.b16 %v5727, %v5726
        %v5814 = vpack.c.b16 %v5729, %v5728
        %v5815 = vpack.c.b16 %v5731, %v5730
        %v5816 = vpack.c.b16 %v5733, %v5732
        %v5817 = vpack.c.b16 %v5735, %v5734
        %v5818 = vpack.c.b16 %v5737, %v5736
        %v5819 = vpack.c.b16 %v5739, %v5738
        %v5820 = vpack.c.b16 %v5741, %v5740
        %v5821 = vpack.c.b16 %v5743, %v5742
        %v5822 = vpack.c.b16 %v5745, %v5744
        %v5823 = vpack.c.b16 %v5747, %v5746
        %v5824 = vpack.c.b16 %v5749, %v5748
        %v5825 = vpack.c.b16 %v5751, %v5750
        %v5826 = vpack.c.b16 %v5753, %v5752
        %v5827 = vpack.c.b16 %v5755, %v5754
        %v5828 = vpack.c.b16 %v5757, %v5756
        %v5829 = vpack.c.b16 %v5759, %v5758
        %v5830 = vpack.c.b16 %v5761, %v5760
        %v5831 = vpack.c.b16 %v5763, %v5762
        %v5832 = vpack.c.b16 %v5765, %v5764
        %v5833 = vpack.c.b16 %v5767, %v5766
        %v5834 = vpack.c.b16 %v5769, %v5768
        %v5835 = vpack.c.b16 %v5771, %v5770
        %5900 = vst [vmem:[%s504] sm:$0xff] %v5772
        %5901 = vst [vmem:[%s504 + $0x8] sm:$0xff] %v5773
        %5902 = vst [vmem:[%s504 + $0x10] sm:$0xff] %v5774
        %5903 = vst [vmem:[%s504 + $0x18] sm:$0xff] %v5775
        %5904 = vst [vmem:[%s504 + $0x20] sm:$0xff] %v5776
        %5905 = vst [vmem:[%s504 + $0x28] sm:$0xff] %v5777
        %5906 = vst [vmem:[%s504 + $0x30] sm:$0xff] %v5778
        %5907 = vst [vmem:[%s504 + $0x38] sm:$0xff] %v5779
        %5908 = vst [vmem:[%s504 + $0x40] sm:$0xff] %v5780
        %5909 = vst [vmem:[%s504 + $0x48] sm:$0xff] %v5781
        %5910 = vst [vmem:[%s504 + $0x50] sm:$0xff] %v5782
        %5911 = vst [vmem:[%s504 + $0x58] sm:$0xff] %v5783
        %5912 = vst [vmem:[%s504 + $0x60] sm:$0xff] %v5784
        %5913 = vst [vmem:[%s504 + $0x68] sm:$0xff] %v5785
        %5914 = vst [vmem:[%s504 + $0x70] sm:$0xff] %v5786
        %5915 = vst [vmem:[%s504 + $0x78] sm:$0xff] %v5787
        %5916 = vst [vmem:[%s504 + $0x80] sm:$0xff] %v5788
        %5917 = vst [vmem:[%s504 + $0x88] sm:$0xff] %v5789
        %5918 = vst [vmem:[%s504 + $0x90] sm:$0xff] %v5790
        %5919 = vst [vmem:[%s504 + $0x98] sm:$0xff] %v5791
        %5920 = vst [vmem:[%s504 + $0xa0] sm:$0xff] %v5792
        %5921 = vst [vmem:[%s504 + $0xa8] sm:$0xff] %v5793
        %5922 = vst [vmem:[%s504 + $0xb0] sm:$0xff] %v5794
        %5923 = vst [vmem:[%s504 + $0xb8] sm:$0xff] %v5795
        %5924 = vst [vmem:[%s504 + $0xc0] sm:$0xff] %v5796
        %5925 = vst [vmem:[%s504 + $0xc8] sm:$0xff] %v5797
        %5926 = vst [vmem:[%s504 + $0xd0] sm:$0xff] %v5798
        %5927 = vst [vmem:[%s504 + $0xd8] sm:$0xff] %v5799
        %5928 = vst [vmem:[%s504 + $0xe0] sm:$0xff] %v5800
        %5929 = vst [vmem:[%s504 + $0xe8] sm:$0xff] %v5801
        %5930 = vst [vmem:[%s504 + $0xf0] sm:$0xff] %v5802
        %5931 = vst [vmem:[%s504 + $0xf8] sm:$0xff] %v5803
        %5932 = vst [vmem:[%s504 + $0x100] sm:$0xff] %v5804
        %5933 = vst [vmem:[%s504 + $0x108] sm:$0xff] %v5805
        %5934 = vst [vmem:[%s504 + $0x110] sm:$0xff] %v5806
        %5935 = vst [vmem:[%s504 + $0x118] sm:$0xff] %v5807
        %5936 = vst [vmem:[%s504 + $0x120] sm:$0xff] %v5808
        %5937 = vst [vmem:[%s504 + $0x128] sm:$0xff] %v5809
        %5938 = vst [vmem:[%s504 + $0x130] sm:$0xff] %v5810
        %5939 = vst [vmem:[%s504 + $0x138] sm:$0xff] %v5811
        %5940 = vst [vmem:[%s504 + $0x140] sm:$0xff] %v5812
        %5941 = vst [vmem:[%s504 + $0x148] sm:$0xff] %v5813
        %5942 = vst [vmem:[%s504 + $0x150] sm:$0xff] %v5814
        %5943 = vst [vmem:[%s504 + $0x158] sm:$0xff] %v5815
        %5944 = vst [vmem:[%s504 + $0x160] sm:$0xff] %v5816
        %5945 = vst [vmem:[%s504 + $0x168] sm:$0xff] %v5817
        %5946 = vst [vmem:[%s504 + $0x170] sm:$0xff] %v5818
        %5947 = vst [vmem:[%s504 + $0x178] sm:$0xff] %v5819
        %5948 = vst [vmem:[%s504 + $0x180] sm:$0xff] %v5820
        %5949 = vst [vmem:[%s504 + $0x188] sm:$0xff] %v5821
        %5950 = vst [vmem:[%s504 + $0x190] sm:$0xff] %v5822
        %5951 = vst [vmem:[%s504 + $0x198] sm:$0xff] %v5823
        %5952 = vst [vmem:[%s504 + $0x1a0] sm:$0xff] %v5824
        %5953 = vst [vmem:[%s504 + $0x1a8] sm:$0xff] %v5825
        %5954 = vst [vmem:[%s504 + $0x1b0] sm:$0xff] %v5826
        %5955 = vst [vmem:[%s504 + $0x1b8] sm:$0xff] %v5827
        %5956 = vst [vmem:[%s504 + $0x1c0] sm:$0xff] %v5828
        %5957 = vst [vmem:[%s504 + $0x1c8] sm:$0xff] %v5829
        %5958 = vst [vmem:[%s504 + $0x1d0] sm:$0xff] %v5830
        %5959 = vst [vmem:[%s504 + $0x1d8] sm:$0xff] %v5831
        %5960 = vst [vmem:[%s504 + $0x1e0] sm:$0xff] %v5832
        %5961 = vst [vmem:[%s504 + $0x1e8] sm:$0xff] %v5833
        %5962 = vst [vmem:[%s504 + $0x1f0] sm:$0xff] %v5834
        %5963 = vst [vmem:[%s504 + $0x1f8] sm:$0xff] %v5835
        %v5964 = vsub.f32 %v5261, %v583
        %v5965 = vsub.f32 %v5263, %v584
        %v5966 = vsub.f32 %v5265, %v585
        %v5967 = vsub.f32 %v5267, %v586
        %v5968 = vsub.f32 %v5269, %v587
        %v5969 = vsub.f32 %v5271, %v588
        %v5970 = vsub.f32 %v5273, %v589
        %v5971 = vsub.f32 %v5275, %v590
        %v5972 = vsub.f32 %v5277, %v591
        %v5973 = vsub.f32 %v5279, %v592
        %v5974 = vsub.f32 %v5281, %v593
        %v5975 = vsub.f32 %v5283, %v594
        %v5976 = vsub.f32 %v5285, %v595
        %v5977 = vsub.f32 %v5287, %v596
        %v5978 = vsub.f32 %v5289, %v597
        %v5979 = vsub.f32 %v5291, %v598
        %v5980 = vsub.f32 %v5293, %v599
        %v5981 = vsub.f32 %v5295, %v600
        %v5982 = vsub.f32 %v5297, %v601
        %v5983 = vsub.f32 %v5299, %v602
        %v5984 = vsub.f32 %v5301, %v603
        %v5985 = vsub.f32 %v5303, %v604
        %v5986 = vsub.f32 %v5305, %v605
        %v5987 = vsub.f32 %v5307, %v606
        %v5988 = vsub.f32 %v5309, %v607
        %v5989 = vsub.f32 %v5311, %v608
        %v5990 = vsub.f32 %v5313, %v609
        %v5991 = vsub.f32 %v5315, %v610
        %v5992 = vsub.f32 %v5317, %v611
        %v5993 = vsub.f32 %v5319, %v612
        %v5994 = vsub.f32 %v5321, %v613
        %v5995 = vsub.f32 %v5323, %v614
        %v5996 = vsub.f32 %v5325, %v615
        %v5997 = vsub.f32 %v5327, %v616
        %v5998 = vsub.f32 %v5329, %v617
        %v5999 = vsub.f32 %v5331, %v618
        %v6000 = vsub.f32 %v5333, %v619
        %v6001 = vsub.f32 %v5335, %v620
        %v6002 = vsub.f32 %v5337, %v621
        %v6003 = vsub.f32 %v5339, %v622
        %v6004 = vsub.f32 %v5341, %v623
        %v6005 = vsub.f32 %v5343, %v624
        %v6006 = vsub.f32 %v5345, %v625
        %v6007 = vsub.f32 %v5347, %v626
        %v6008 = vsub.f32 %v5349, %v627
        %v6009 = vsub.f32 %v5351, %v628
        %v6010 = vsub.f32 %v5353, %v629
        %v6011 = vsub.f32 %v5355, %v630
        %v6012 = vsub.f32 %v5357, %v631
        %v6013 = vsub.f32 %v5359, %v632
        %v6014 = vsub.f32 %v5361, %v633
        %v6015 = vsub.f32 %v5363, %v634
        %v6016 = vsub.f32 %v5365, %v635
        %v6017 = vsub.f32 %v5367, %v636
        %v6018 = vsub.f32 %v5369, %v637
        %v6019 = vsub.f32 %v5371, %v638
        %v6020 = vsub.f32 %v5373, %v639
        %v6021 = vsub.f32 %v5375, %v640
        %v6022 = vsub.f32 %v5377, %v641
        %v6023 = vsub.f32 %v5379, %v642
        %v6024 = vsub.f32 %v5381, %v643
        %v6025 = vsub.f32 %v5383, %v644
        %v6026 = vsub.f32 %v5385, %v645
        %v6027 = vsub.f32 %v5387, %v646
        %v6028 = vsub.f32 %v5389, %v647
        %v6029 = vsub.f32 %v5391, %v648
        %v6030 = vsub.f32 %v5393, %v649
        %v6031 = vsub.f32 %v5395, %v650
        %v6032 = vsub.f32 %v5397, %v651
        %v6033 = vsub.f32 %v5399, %v652
        %v6034 = vsub.f32 %v5401, %v653
        %v6035 = vsub.f32 %v5403, %v654
        %v6036 = vsub.f32 %v5405, %v655
        %v6037 = vsub.f32 %v5407, %v656
        %v6038 = vsub.f32 %v5409, %v657
        %v6039 = vsub.f32 %v5411, %v658
        %v6040 = vsub.f32 %v5413, %v659
        %v6041 = vsub.f32 %v5415, %v660
        %v6042 = vsub.f32 %v5417, %v661
        %v6043 = vsub.f32 %v5419, %v662
        %v6044 = vsub.f32 %v5421, %v663
        %v6045 = vsub.f32 %v5423, %v664
        %v6046 = vsub.f32 %v5425, %v665
        %v6047 = vsub.f32 %v5427, %v666
        %v6048 = vsub.f32 %v5429, %v667
        %v6049 = vsub.f32 %v5431, %v668
        %v6050 = vsub.f32 %v5433, %v669
        %v6051 = vsub.f32 %v5435, %v670
        %v6052 = vsub.f32 %v5437, %v671
        %v6053 = vsub.f32 %v5439, %v672
        %v6054 = vsub.f32 %v5441, %v673
        %v6055 = vsub.f32 %v5443, %v674
        %v6056 = vsub.f32 %v5445, %v675
        %v6057 = vsub.f32 %v5447, %v676
        %v6058 = vsub.f32 %v5449, %v677
        %v6059 = vsub.f32 %v5451, %v678
        %v6060 = vsub.f32 %v5453, %v679
        %v6061 = vsub.f32 %v5455, %v680
        %v6062 = vsub.f32 %v5457, %v681
        %v6063 = vsub.f32 %v5459, %v682
        %v6064 = vsub.f32 %v5461, %v683
        %v6065 = vsub.f32 %v5463, %v684
        %v6066 = vsub.f32 %v5465, %v685
        %v6067 = vsub.f32 %v5467, %v686
        %v6068 = vsub.f32 %v5469, %v687
        %v6069 = vsub.f32 %v5471, %v688
        %v6070 = vsub.f32 %v5473, %v689
        %v6071 = vsub.f32 %v5475, %v690
        %v6072 = vsub.f32 %v5477, %v691
        %v6073 = vsub.f32 %v5479, %v692
        %v6074 = vsub.f32 %v5481, %v693
        %v6075 = vsub.f32 %v5483, %v694
        %v6076 = vsub.f32 %v5485, %v695
        %v6077 = vsub.f32 %v5487, %v696
        %v6078 = vsub.f32 %v5489, %v697
        %v6079 = vsub.f32 %v5491, %v698
        %v6080 = vsub.f32 %v5493, %v699
        %v6081 = vsub.f32 %v5495, %v700
        %v6082 = vsub.f32 %v5497, %v701
        %v6083 = vsub.f32 %v5499, %v702
        %v6084 = vsub.f32 %v5501, %v703
        %v6085 = vsub.f32 %v5503, %v704
        %v6086 = vsub.f32 %v5505, %v705
        %v6087 = vsub.f32 %v5507, %v706
        %v6088 = vsub.f32 %v5509, %v707
        %v6089 = vsub.f32 %v5511, %v708
        %v6090 = vsub.f32 %v5513, %v709
        %v6091 = vsub.f32 %v5515, %v710
        %v6092 = vmul.f32 %v5964, %v5964
        %v6093 = vmul.f32 %v5965, %v5965
        %v6094 = vmul.f32 %v5966, %v5966
        %v6095 = vmul.f32 %v5967, %v5967
        %v6096 = vmul.f32 %v5968, %v5968
        %v6097 = vmul.f32 %v5969, %v5969
        %v6098 = vmul.f32 %v5970, %v5970
        %v6099 = vmul.f32 %v5971, %v5971
        %v6100 = vmul.f32 %v5972, %v5972
        %v6101 = vmul.f32 %v5973, %v5973
        %v6102 = vmul.f32 %v5974, %v5974
        %v6103 = vmul.f32 %v5975, %v5975
        %v6104 = vmul.f32 %v5976, %v5976
        %v6105 = vmul.f32 %v5977, %v5977
        %v6106 = vmul.f32 %v5978, %v5978
        %v6107 = vmul.f32 %v5979, %v5979
        %v6108 = vmul.f32 %v5980, %v5980
        %v6109 = vmul.f32 %v5981, %v5981
        %v6110 = vmul.f32 %v5982, %v5982
        %v6111 = vmul.f32 %v5983, %v5983
        %v6112 = vmul.f32 %v5984, %v5984
        %v6113 = vmul.f32 %v5985, %v5985
        %v6114 = vmul.f32 %v5986, %v5986
        %v6115 = vmul.f32 %v5987, %v5987
        %v6116 = vmul.f32 %v5988, %v5988
        %v6117 = vmul.f32 %v5989, %v5989
        %v6118 = vmul.f32 %v5990, %v5990
        %v6119 = vmul.f32 %v5991, %v5991
        %v6120 = vmul.f32 %v5992, %v5992
        %v6121 = vmul.f32 %v5993, %v5993
        %v6122 = vmul.f32 %v5994, %v5994
        %v6123 = vmul.f32 %v5995, %v5995
        %v6124 = vmul.f32 %v5996, %v5996
        %v6125 = vmul.f32 %v5997, %v5997
        %v6126 = vmul.f32 %v5998, %v5998
        %v6127 = vmul.f32 %v5999, %v5999
        %v6128 = vmul.f32 %v6000, %v6000
        %v6129 = vmul.f32 %v6001, %v6001
        %v6130 = vmul.f32 %v6002, %v6002
        %v6131 = vmul.f32 %v6003, %v6003
        %v6132 = vmul.f32 %v6004, %v6004
        %v6133 = vmul.f32 %v6005, %v6005
        %v6134 = vmul.f32 %v6006, %v6006
        %v6135 = vmul.f32 %v6007, %v6007
        %v6136 = vmul.f32 %v6008, %v6008
        %v6137 = vmul.f32 %v6009, %v6009
        %v6138 = vmul.f32 %v6010, %v6010
        %v6139 = vmul.f32 %v6011, %v6011
        %v6140 = vmul.f32 %v6012, %v6012
        %v6141 = vmul.f32 %v6013, %v6013
        %v6142 = vmul.f32 %v6014, %v6014
        %v6143 = vmul.f32 %v6015, %v6015
        %v6144 = vmul.f32 %v6016, %v6016
        %v6145 = vmul.f32 %v6017, %v6017
        %v6146 = vmul.f32 %v6018, %v6018
        %v6147 = vmul.f32 %v6019, %v6019
        %v6148 = vmul.f32 %v6020, %v6020
        %v6149 = vmul.f32 %v6021, %v6021
        %v6150 = vmul.f32 %v6022, %v6022
        %v6151 = vmul.f32 %v6023, %v6023
        %v6152 = vmul.f32 %v6024, %v6024
        %v6153 = vmul.f32 %v6025, %v6025
        %v6154 = vmul.f32 %v6026, %v6026
        %v6155 = vmul.f32 %v6027, %v6027
        %v6156 = vmul.f32 %v6028, %v6028
        %v6157 = vmul.f32 %v6029, %v6029
        %v6158 = vmul.f32 %v6030, %v6030
        %v6159 = vmul.f32 %v6031, %v6031
        %v6160 = vmul.f32 %v6032, %v6032
        %v6161 = vmul.f32 %v6033, %v6033
        %v6162 = vmul.f32 %v6034, %v6034
        %v6163 = vmul.f32 %v6035, %v6035
        %v6164 = vmul.f32 %v6036, %v6036
        %v6165 = vmul.f32 %v6037, %v6037
        %v6166 = vmul.f32 %v6038, %v6038
        %v6167 = vmul.f32 %v6039, %v6039
        %v6168 = vmul.f32 %v6040, %v6040
        %v6169 = vmul.f32 %v6041, %v6041
        %v6170 = vmul.f32 %v6042, %v6042
        %v6171 = vmul.f32 %v6043, %v6043
        %v6172 = vmul.f32 %v6044, %v6044
        %v6173 = vmul.f32 %v6045, %v6045
        %v6174 = vmul.f32 %v6046, %v6046
        %v6175 = vmul.f32 %v6047, %v6047
        %v6176 = vmul.f32 %v6048, %v6048
        %v6177 = vmul.f32 %v6049, %v6049
        %v6178 = vmul.f32 %v6050, %v6050
        %v6179 = vmul.f32 %v6051, %v6051
        %v6180 = vmul.f32 %v6052, %v6052
        %v6181 = vmul.f32 %v6053, %v6053
        %v6182 = vmul.f32 %v6054, %v6054
        %v6183 = vmul.f32 %v6055, %v6055
        %v6184 = vmul.f32 %v6056, %v6056
        %v6185 = vmul.f32 %v6057, %v6057
        %v6186 = vmul.f32 %v6058, %v6058
        %v6187 = vmul.f32 %v6059, %v6059
        %v6188 = vmul.f32 %v6060, %v6060
        %v6189 = vmul.f32 %v6061, %v6061
        %v6190 = vmul.f32 %v6062, %v6062
        %v6191 = vmul.f32 %v6063, %v6063
        %v6192 = vmul.f32 %v6064, %v6064
        %v6193 = vmul.f32 %v6065, %v6065
        %v6194 = vmul.f32 %v6066, %v6066
        %v6195 = vmul.f32 %v6067, %v6067
        %v6196 = vmul.f32 %v6068, %v6068
        %v6197 = vmul.f32 %v6069, %v6069
        %v6198 = vmul.f32 %v6070, %v6070
        %v6199 = vmul.f32 %v6071, %v6071
        %v6200 = vmul.f32 %v6072, %v6072
        %v6201 = vmul.f32 %v6073, %v6073
        %v6202 = vmul.f32 %v6074, %v6074
        %v6203 = vmul.f32 %v6075, %v6075
        %v6204 = vmul.f32 %v6076, %v6076
        %v6205 = vmul.f32 %v6077, %v6077
        %v6206 = vmul.f32 %v6078, %v6078
        %v6207 = vmul.f32 %v6079, %v6079
        %v6208 = vmul.f32 %v6080, %v6080
        %v6209 = vmul.f32 %v6081, %v6081
        %v6210 = vmul.f32 %v6082, %v6082
        %v6211 = vmul.f32 %v6083, %v6083
        %v6212 = vmul.f32 %v6084, %v6084
        %v6213 = vmul.f32 %v6085, %v6085
        %v6214 = vmul.f32 %v6086, %v6086
        %v6215 = vmul.f32 %v6087, %v6087
        %v6216 = vmul.f32 %v6088, %v6088
        %v6217 = vmul.f32 %v6089, %v6089
        %v6218 = vmul.f32 %v6090, %v6090
        %v6219 = vmul.f32 %v6091, %v6091
        %v6220 = vadd.f32 %v6092, %v6093
        %v6221 = vadd.f32 %v6220, %v6094
        %v6222 = vadd.f32 %v6221, %v6095
        %v6223 = vadd.f32 %v6222, %v6096
        %v6224 = vadd.f32 %v6223, %v6097
        %v6225 = vadd.f32 %v6224, %v6098
        %v6226 = vadd.f32 %v6225, %v6099
        %v6227 = vadd.f32 %v6226, %v6100
        %v6228 = vadd.f32 %v6227, %v6101
        %v6229 = vadd.f32 %v6228, %v6102
        %v6230 = vadd.f32 %v6229, %v6103
        %v6231 = vadd.f32 %v6230, %v6104
        %v6232 = vadd.f32 %v6231, %v6105
        %v6233 = vadd.f32 %v6232, %v6106
        %v6234 = vadd.f32 %v6233, %v6107
        %v6235 = vadd.f32 %v6234, %v6108
        %v6236 = vadd.f32 %v6235, %v6109
        %v6237 = vadd.f32 %v6236, %v6110
        %v6238 = vadd.f32 %v6237, %v6111
        %v6239 = vadd.f32 %v6238, %v6112
        %v6240 = vadd.f32 %v6239, %v6113
        %v6241 = vadd.f32 %v6240, %v6114
        %v6242 = vadd.f32 %v6241, %v6115
        %v6243 = vadd.f32 %v6242, %v6116
        %v6244 = vadd.f32 %v6243, %v6117
        %v6245 = vadd.f32 %v6244, %v6118
        %v6246 = vadd.f32 %v6245, %v6119
        %v6247 = vadd.f32 %v6246, %v6120
        %v6248 = vadd.f32 %v6247, %v6121
        %v6249 = vadd.f32 %v6248, %v6122
        %v6250 = vadd.f32 %v6249, %v6123
        %v6251 = vadd.f32 %v6250, %v6124
        %v6252 = vadd.f32 %v6251, %v6125
        %v6253 = vadd.f32 %v6252, %v6126
        %v6254 = vadd.f32 %v6253, %v6127
        %v6255 = vadd.f32 %v6254, %v6128
        %v6256 = vadd.f32 %v6255, %v6129
        %v6257 = vadd.f32 %v6256, %v6130
        %v6258 = vadd.f32 %v6257, %v6131
        %v6259 = vadd.f32 %v6258, %v6132
        %v6260 = vadd.f32 %v6259, %v6133
        %v6261 = vadd.f32 %v6260, %v6134
        %v6262 = vadd.f32 %v6261, %v6135
        %v6263 = vadd.f32 %v6262, %v6136
        %v6264 = vadd.f32 %v6263, %v6137
        %v6265 = vadd.f32 %v6264, %v6138
        %v6266 = vadd.f32 %v6265, %v6139
        %v6267 = vadd.f32 %v6266, %v6140
        %v6268 = vadd.f32 %v6267, %v6141
        %v6269 = vadd.f32 %v6268, %v6142
        %v6270 = vadd.f32 %v6269, %v6143
        %v6271 = vadd.f32 %v6270, %v6144
        %v6272 = vadd.f32 %v6271, %v6145
        %v6273 = vadd.f32 %v6272, %v6146
        %v6274 = vadd.f32 %v6273, %v6147
        %v6275 = vadd.f32 %v6274, %v6148
        %v6276 = vadd.f32 %v6275, %v6149
        %v6277 = vadd.f32 %v6276, %v6150
        %v6278 = vadd.f32 %v6277, %v6151
        %v6279 = vadd.f32 %v6278, %v6152
        %v6280 = vadd.f32 %v6279, %v6153
        %v6281 = vadd.f32 %v6280, %v6154
        %v6282 = vadd.f32 %v6281, %v6155
        %v6283 = vadd.f32 %v6282, %v6156
        %v6284 = vadd.f32 %v6283, %v6157
        %v6285 = vadd.f32 %v6284, %v6158
        %v6286 = vadd.f32 %v6285, %v6159
        %v6287 = vadd.f32 %v6286, %v6160
        %v6288 = vadd.f32 %v6287, %v6161
        %v6289 = vadd.f32 %v6288, %v6162
        %v6290 = vadd.f32 %v6289, %v6163
        %v6291 = vadd.f32 %v6290, %v6164
        %v6292 = vadd.f32 %v6291, %v6165
        %v6293 = vadd.f32 %v6292, %v6166
        %v6294 = vadd.f32 %v6293, %v6167
        %v6295 = vadd.f32 %v6294, %v6168
        %v6296 = vadd.f32 %v6295, %v6169
        %v6297 = vadd.f32 %v6296, %v6170
        %v6298 = vadd.f32 %v6297, %v6171
        %v6299 = vadd.f32 %v6298, %v6172
        %v6300 = vadd.f32 %v6299, %v6173
        %v6301 = vadd.f32 %v6300, %v6174
        %v6302 = vadd.f32 %v6301, %v6175
        %v6303 = vadd.f32 %v6302, %v6176
        %v6304 = vadd.f32 %v6303, %v6177
        %v6305 = vadd.f32 %v6304, %v6178
        %v6306 = vadd.f32 %v6305, %v6179
        %v6307 = vadd.f32 %v6306, %v6180
        %v6308 = vadd.f32 %v6307, %v6181
        %v6309 = vadd.f32 %v6308, %v6182
        %v6310 = vadd.f32 %v6309, %v6183
        %v6311 = vadd.f32 %v6310, %v6184
        %v6312 = vadd.f32 %v6311, %v6185
        %v6313 = vadd.f32 %v6312, %v6186
        %v6314 = vadd.f32 %v6313, %v6187
        %v6315 = vadd.f32 %v6314, %v6188
        %v6316 = vadd.f32 %v6315, %v6189
        %v6317 = vadd.f32 %v6316, %v6190
        %v6318 = vadd.f32 %v6317, %v6191
        %v6319 = vadd.f32 %v6318, %v6192
        %v6320 = vadd.f32 %v6319, %v6193
        %v6321 = vadd.f32 %v6320, %v6194
        %v6322 = vadd.f32 %v6321, %v6195
        %v6323 = vadd.f32 %v6322, %v6196
        %v6324 = vadd.f32 %v6323, %v6197
        %v6325 = vadd.f32 %v6324, %v6198
        %v6326 = vadd.f32 %v6325, %v6199
        %v6327 = vadd.f32 %v6326, %v6200
        %v6328 = vadd.f32 %v6327, %v6201
        %v6329 = vadd.f32 %v6328, %v6202
        %v6330 = vadd.f32 %v6329, %v6203
        %v6331 = vadd.f32 %v6330, %v6204
        %v6332 = vadd.f32 %v6331, %v6205
        %v6333 = vadd.f32 %v6332, %v6206
        %v6334 = vadd.f32 %v6333, %v6207
        %v6335 = vadd.f32 %v6334, %v6208
        %v6336 = vadd.f32 %v6335, %v6209
        %v6337 = vadd.f32 %v6336, %v6210
        %v6338 = vadd.f32 %v6337, %v6211
        %v6339 = vadd.f32 %v6338, %v6212
        %v6340 = vadd.f32 %v6339, %v6213
        %v6341 = vadd.f32 %v6340, %v6214
        %v6342 = vadd.f32 %v6341, %v6215
        %v6343 = vadd.f32 %v6342, %v6216
        %v6344 = vadd.f32 %v6343, %v6217
        %v6345 = vadd.f32 %v6344, %v6218
        %v6346 = vadd.f32 %v6345, %v6219
        %6347 = vadd.xlane.f32.xlu0 %v6346
        %v6348 = vpop.xlane.xlu0 %6347
        %v6349 = vrot.slane %v6348, 4
        %v6350 = vadd.f32 %v6348, %v6349
        %v6351 = vrot.slane %v6350, 2
        %v6352 = vadd.f32 %v6350, %v6351
        %v6353 = vrot.slane %v6352, 1
        %v6354 = vadd.f32 %v6352, %v6353
        %s6355 = vtos %v6354
        %v6356 = vlaneseq
        %v6357 = vshrl.u32 %v6356, 7
        %vm6358 = vcmp.eq.s32.totalorder %v6357, 0
        %vm6359 = vcmp.eq.s32.totalorder %v6357, 1
        %vm6360 = vcmp.eq.s32.totalorder %v6357, 2
        %v6361 = vstv %s6355
        %v6362 = vsel %vm6360, %v6361, 0.0
        %v6363 = vstv %s4747
        %v6364 = vsel %vm6359, %v6363, %v6362
        %v6365 = vstv %s4354
        %v6366 = vsel %vm6358, %v6365, %v6364
        %6367 = vst [vmem:[%s517] sm:$0xff] %v6366
        %s6368 = sand.u32 %s262, 1
        %s6369 = scalar_lea.sflag [#allocation4], %s6368
        %s6370 = sand.u32 %s262, 1
        %s6371 = smul.addr %s6370, 512
        %s6372 = scalar_lea.vmem [#allocation13], %s6371
        %p6373 = scmp.lt.s32.totalorder %s34, 1
        %s6374 = scalar_select %p6373, %s34, 1
        %s6375 = smul.addr %s6374, 8
        %s6376 = scalar_lea.vmem %s11, %s6375
        // Predicated region
        $region85: #{vae_forward.1} parent=59 // pred_check
          %p6377 = pneg %p272
        $region86: #{vae_forward.1} parent=59 // pred_check_branch
          %6379 = sbr.rel (%p6377) target = $region88
        $region87: #{vae_forward.1} parent=59 // pred_region
          %s6380 = smul.u32 64, %s34
          %s6382 = ssub.s32 8192, 8192
          %6383 = vsyncadd %s6369, %s6382
          %s6384 = smul.addr %s6380, 2
          %s6385 = smul.addr %s6384, 64
          %s6386 = scalar_lea.hbm %s10, %s6385
          %s6387 = sshll.u32 %s6372, 4
          %s6388 = int_to_ptr.vmem [resolvable:$true] %s6387
          %6393 = dma.vmem_to_hbm [thread:$0]  %s6388, 8192, %s6386, %s6369, 128, 128, 8
        $region88: #{vae_forward.1} parent=59 // pred_fallthru
          _
        // Predicated region
        $region89: #{vae_forward.1} parent=59 // pred_check
          %p6394 = pneg %p298
        $region90: #{vae_forward.1} parent=59 // pred_check_branch
          %6396 = sbr.rel (%p6394) target = $region92
        $region91: #{vae_forward.1} parent=59 // pred_region
          _
        $region92: #{vae_forward.1} parent=59 // pred_fallthru
          _
      $region60: #{vae_forward.1} parent=5 // pred_fallthru
        _
      %p6397 = scmp.le.s32.totalorder 2, %s29
      // Predicated region
      $region93: #{vae_forward.1} parent=5 // pred_check
        %p6398 = pneg %p6397
      $region94: #{vae_forward.1} parent=5 // pred_check_branch
        %6400 = sbr.rel (%p6398) target = $region96
      $region95: #{vae_forward.1} parent=5 // pred_region
        %s6401 = ssub.s32 %s29, 2
        // Predicated region
        $region97: #{vae_forward.1} parent=95 // pred_check
          %p6402 = pneg %p278
        $region98: #{vae_forward.1} parent=95 // pred_check_branch
          %6404 = sbr.rel (%p6402) target = $region100
        $region99: #{vae_forward.1} parent=95 // pred_region
          %s6405 = sand.u32 %s263, 1
          %s6406 = scalar_lea.sflag [#allocation4], %s6405
          %s6407 = sand.u32 %s263, 1
          %s6408 = smul.addr %s6407, 512
          %s6409 = scalar_lea.vmem [#allocation13], %s6408
          %6410 = dma.done %s6406, 8192
        $region100: #{vae_forward.1} parent=95 // pred_fallthru
          _
        // Predicated region
        $region101: #{vae_forward.1} parent=95 // pred_check
          %p6411 = pneg %p304
        $region102: #{vae_forward.1} parent=95 // pred_check_branch
          %6413 = sbr.rel (%p6411) target = $region104
        $region103: #{vae_forward.1} parent=95 // pred_region
          %p6414 = scmp.lt.s32.totalorder %s35, 1
          %s6415 = scalar_select %p6414, %s35, 1
          %s6416 = smul.addr %s6415, 8
          %s6417 = scalar_lea.vmem %s11, %s6416
        $region104: #{vae_forward.1} parent=95 // pred_fallthru
          _
      $region96: #{vae_forward.1} parent=5 // pred_fallthru
        _
    $region6: #{vae_forward.1} parent=1 // loop_footer
      %s33 = sadd.s32 1, %s29
    $region7: #{vae_forward.1} parent=1 // loop_footer_branch
      %28 = sbr.rel target = $region3
    $region8: #{vae_forward.1} parent=1 // loop_exit
      _
    %6418 = vsyncpa [#allocation3], 1
    %s6419 = scalar_lea.sflag [#allocation3], 1
    %6420 = vsyncpa %s6419, 1
    %6421 = vsyncpa [#allocation6], 1
    %s6422 = scalar_lea.sflag [#allocation6], 1
    %6423 = vsyncpa %s6422, 1
    %6424 = vsyncpa [#allocation9], 1
    %6425 = vsyncpa [#allocation12], 1
    %6426 = vsyncpa [#allocation4], 1
    %s6427 = scalar_lea.sflag [#allocation4], 1
    %6428 = vsyncpa %s6427, 1

</llo_original>
